<compile_context>
chip_gen: v7x
topology: tpu7x:2x2x1
jax: 0.10.0
libtpu: 0.0.40
codegen_flags: <defaults>
</compile_context>

<pallas_src>
import math
from functools import partial

import jax
import jax.numpy as jnp
from jax import lax
from jax.experimental import pallas as pl
from jax.experimental.pallas import tpu as pltpu

F32 = jnp.float32
BF16 = jnp.bfloat16


def _round_up(x, m):
    return (x + m - 1) // m * m


# ------------------------------ Pallas kernel ------------------------------ #

def _fused_layer_kernel(x_ref, w_ref, sb_ref, o_ref, ha_ref, hb_ref, *,
                        meta, b_tile, rpad, l_out, c_out):
    """One grid step pushes `b_tile` samples through the whole block chain.

    meta: tuple of (stride, c_in, has_down) per block; block 0 may have
    stride 2 and/or a 1x1 downsample, later blocks are stride-1 identity.
    """
    B, R = b_tile, rpad
    M = B * R - 8                       # slab matmul M dimension

    # Halo pad rows of the scratches must be zero. Re-zero every step: cheap,
    # and robust when the parallel grid axis is sharded across TensorCores.
    ha_ref[...] = jnp.zeros_like(ha_ref)
    if len(meta) > 1:
        hb_ref[...] = jnp.zeros_like(hb_ref)

    # Single f32 -> bf16 cast of the input slab (all conv1 taps re-slice it).
    xbf = x_ref[...].astype(BF16)

    # Running static offsets into the packed weight / scale-bias operands.
    offs = {'w': 0, 's': 0}

    def W(nrows):                        # next packed conv-weight matrix (bf16)
        o = offs['w']; offs['w'] = o + nrows
        return w_ref[o:o + nrows, :]

    def S():                             # next packed folded-BN row (1, c_out) f32
        o = offs['s']; offs['s'] = o + 1
        return sb_ref[o:o + 1, :]

    prev = None                          # previous block's output (exact f32 slab)
    for bi, (stride, c_in, has_down) in enumerate(meta):
        # ---- conv1 (k=3, pad=1, stride) + bn1 + relu ------------------------
        if bi == 0:
            tap = lambda t: xbf[t:t + M]                  # host-built halo (offset 0)
        else:
            tap = lambda t: hb_ref[7 + t:7 + t + M, :]    # scratch halo (offset 8)
        if bi == 0 and stride == 2:
            # folded input rows are [x_pad[2t] | x_pad[2t+1]] (2*c_in wide):
            # taps 0+1 contract one stacked weight, tap 2 a zero-padded one.
            acc = jnp.dot(tap(0), W(2 * c_in), preferred_element_type=F32)
            acc = acc + jnp.dot(tap(1), W(2 * c_in), preferred_element_type=F32)
        else:
            acc = jnp.dot(tap(0), W(c_in), preferred_element_type=F32)
            acc = acc + jnp.dot(tap(1), W(c_in), preferred_element_type=F32)
            acc = acc + jnp.dot(tap(2), W(c_in), preferred_element_type=F32)
        s1, b1 = S(), S()
        h1 = jnp.maximum(acc * s1 + b1, 0.0)
        # TODO(synk): nn.Dropout(0.2) after bn1/relu is identity at inference time.

        # ---- identity / 1x1-conv downsample ---------------------------------
        if bi == 0:
            if has_down:
                wd = W(2 * c_in if stride == 2 else c_in)
                sd, bd = S(), S()
                src = xbf[0:M] if stride == 2 else xbf[1:1 + M]
                ident = jnp.dot(src, wd, preferred_element_type=F32) * sd + bd
            else:
                ident = x_ref[1:1 + M, :]     # exact f32 residual (stride == 1)
        else:
            ident = prev                      # previous block output, exact f32

        # ---- stash conv1 output in the bf16 halo scratch (no HBM trip) -------
        for b in range(B):                    # sublane-aligned stores (offset 8+b*R)
            ha_ref[8 + b * R:8 + b * R + l_out, :] = \
                h1[b * R:b * R + l_out].astype(BF16)

        # ---- conv2 (k=3, s=1, pad=1) + bn2 + residual add + relu -------------
        acc2 = jnp.dot(ha_ref[7:7 + M, :], W(c_out), preferred_element_type=F32)
        acc2 = acc2 + jnp.dot(ha_ref[8:8 + M, :], W(c_out), preferred_element_type=F32)
        acc2 = acc2 + jnp.dot(ha_ref[9:9 + M, :], W(c_out), preferred_element_type=F32)
        s2, b2 = S(), S()
        out = jnp.maximum(acc2 * s2 + b2 + ident, 0.0)

        if bi + 1 < len(meta):
            prev = out                        # exact f32 identity for next block
            for b in range(B):
                hb_ref[8 + b * R:8 + b * R + l_out, :] = \
                    out[b * R:b * R + l_out].astype(BF16)
        else:
            for b in range(B):                # aligned value slices -> lane-dense out
                o_ref[b] = out[b * R:b * R + l_out].astype(o_ref.dtype)


# ----------------------------- host-side glue ------------------------------ #

def fold_bn(gamma, beta, mean, var, eps=1e-5):
    scale = gamma / jnp.sqrt(var + eps)
    bias = beta - mean * scale
    return scale.reshape(1, -1).astype(F32), bias.reshape(1, -1).astype(F32)


def pack_layer(raw_blocks):
    """Pack every conv weight of the chain into one bf16 matrix and every
    folded-BN scale/bias into one f32 matrix (2 operands instead of 7-10)."""
    mats, sbs, meta = [], [], []
    c_out = raw_blocks[0]['conv1'].shape[0]
    for bi, raw in enumerate(raw_blocks):
        stride = raw['stride']
        has_down = 'down_conv' in raw
        co, ci, _ = raw['conv1'].shape
        assert co == c_out
        if bi > 0:
            assert stride == 1 and not has_down and ci == c_out
        if stride == 2:
            assert has_down            # required for shape match (as in PyTorch use)
        wt1 = jnp.transpose(raw['conv1'], (2, 1, 0))   # (3, c_in, c_out) tap mats
        wt2 = jnp.transpose(raw['conv2'], (2, 1, 0))   # (3, c_out, c_out)
        if bi == 0 and stride == 2:
            mats += [jnp.concatenate([wt1[0], wt1[1]], axis=0),            # taps 0|1
                     jnp.concatenate([wt1[2], jnp.zeros_like(wt1[2])], axis=0)]
        else:
            mats += [wt1[0], wt1[1], wt1[2]]
        if has_down:
            wd = jnp.transpose(raw['down_conv'], (2, 1, 0))[0]             # (c_in, c_out)
            if stride == 2:
                wd = jnp.concatenate([jnp.zeros_like(wd), wd], axis=0)     # lane-dense
            mats.append(wd)
        mats += [wt2[0], wt2[1], wt2[2]]
        s1, b1 = fold_bn(*raw['bn1'])
        s2, b2 = fold_bn(*raw['bn2'])
        sbs += [s1, b1]
        if has_down:
            sd, bd = fold_bn(*raw['down_bn'])
            sbs += [sd, bd]
        sbs += [s2, b2]
        meta.append((stride, ci, has_down))
    w_all = jnp.concatenate(mats, axis=0).astype(BF16)
    sb_all = jnp.concatenate(sbs, axis=0).astype(F32)
    return w_all, sb_all, tuple(meta), c_out


def fused_residual_layer_fwd(x_nlc, w_all, sb_all, *, meta, c_out, b_tile=4):
    """x_nlc: (N, L, C_in) channel-last f32 -> (N, L_out, C_out) f32."""
    stride0, c_in0, _ = meta[0]
    n, l, c_in = x_nlc.shape
    assert c_in == c_in0
    l_out = (l - 1) // stride0 + 1
    rpad = _round_up(l_out + 8, 8)           # per-sample slab rows (halo + slack)

    n_pad = _round_up(n, b_tile)             # pad batch to a multiple of b_tile
    if n_pad != n:
        x_nlc = jnp.pad(x_nlc, ((0, n_pad - n), (0, 0), (0, 0)))

    # conv 'same' padding along L; stride 2 folds row pairs into 2*c_in-wide rows
    # (free contiguous reshape) so the strided conv becomes contiguous slices.
    xp = jnp.pad(x_nlc, ((0, 0), (1, 1), (0, 0)))
    if stride0 == 2:
        if xp.shape[1] % 2:
            xp = jnp.pad(xp, ((0, 0), (0, 1), (0, 0)))
        xp = xp.reshape(n_pad, xp.shape[1] // 2, 2 * c_in)
    xp = jnp.pad(xp, ((0, 0), (0, rpad - xp.shape[1]), (0, 0)))
    cols0 = xp.shape[2]
    x2d = xp.reshape(n_pad * rpad, cols0)    # flat slab: kernel block = b_tile*rpad rows

    kern = partial(_fused_layer_kernel, meta=meta, b_tile=b_tile, rpad=rpad,
                   l_out=l_out, c_out=c_out)
    const = lambda i: (0, 0)                 # weights / BN params fetched once

    out = pl.pallas_call(
        kern,
        out_shape=jax.ShapeDtypeStruct((n_pad, l_out, c_out), jnp.float32),
        grid_spec=pltpu.PrefetchScalarGridSpec(
            num_scalar_prefetch=0,
            grid=(n_pad // b_tile,),
            in_specs=[
                pl.BlockSpec((b_tile * rpad, cols0), lambda i: (i, 0)),
                pl.BlockSpec(w_all.shape, const),
                pl.BlockSpec(sb_all.shape, const),
            ],
            out_specs=pl.BlockSpec((b_tile, l_out, c_out), lambda i: (i, 0, 0)),
            scratch_shapes=[
                pltpu.VMEM((8 + b_tile * rpad, c_out), jnp.bfloat16),  # conv1-out halo
                pltpu.VMEM((8 + b_tile * rpad, c_out), jnp.bfloat16),  # next-block-in halo
            ],
        ),
        compiler_params=pltpu.CompilerParams(
            dimension_semantics=("parallel",),
            vmem_limit_bytes=32 * 1024 * 1024,
        ),
    )(x2d, w_all, sb_all)
    return out[:n]


# ----------------------- parameters & pure-JAX reference -------------------- #

def init_block(key, c_in, c_out, stride):
    ks = jax.random.split(key, 6)

    def conv_w(k, co, ci, kk):
        std = math.sqrt(2.0 / (co * kk))          # kaiming_normal_(fan_out, relu)
        return std * jax.random.normal(k, (co, ci, kk), F32)

    def bn_p(k):
        k1, k2, k3, k4 = jax.random.split(k, 4)
        gamma = 1.0 + 0.1 * jax.random.normal(k1, (c_out,), F32)
        beta = 0.1 * jax.random.normal(k2, (c_out,), F32)
        mean = 0.1 * jax.random.normal(k3, (c_out,), F32)
        var = 1.0 + 0.1 * jnp.abs(jax.random.normal(k4, (c_out,), F32))
        return gamma, beta, mean, var

    raw = {'stride': stride,
           'conv1': conv_w(ks[0], c_out, c_in, 3), 'bn1': bn_p(ks[1]),
           'conv2': conv_w(ks[2], c_out, c_out, 3), 'bn2': bn_p(ks[3])}
    if stride != 1 or c_in != c_out:
        raw['down_conv'] = conv_w(ks[4], c_out, c_in, 1)
        raw['down_bn'] = bn_p(ks[5])
    return raw


def residual_block_ref(x_ncl, raw):
    """f32 reference in PyTorch NCL layout (eval-mode BN, dropout=identity)."""
    def conv(x, w, stride, pad):
        return lax.conv_general_dilated(
            x, w, window_strides=(stride,), padding=[(pad, pad)],
            dimension_numbers=('NCH', 'OIH', 'NCH'),
            precision=lax.Precision.HIGHEST)

    def bn(x, p):
        gamma, beta, mean, var = p
        inv = gamma / jnp.sqrt(var + 1e-5)
        return (x - mean[None, :, None]) * inv[None, :, None] + beta[None, :, None]

    s = raw['stride']
    out = jax.nn.relu(bn(conv(x_ncl, raw['conv1'], s, 1), raw['bn1']))
    out = bn(conv(out, raw['conv2'], 1, 1), raw['bn2'])
    ident = x_ncl
    if 'down_conv' in raw:
        ident = bn(conv(x_ncl, raw['down_conv'], s, 0), raw['down_bn'])
    return jax.nn.relu(out + ident)


# ---------------------------------- main ----------------------------------- #

if __name__ == "__main__":
    key = jax.random.PRNGKey(0)
    k1, k2, k3, kx, kx2 = jax.random.split(key, 5)

    # ---- test 1: fused 2-block chain (stride-2 + 1x1 downsample, then identity)
    N, C_IN, C_OUT, L = 16, 64, 128, 64
    raws = [init_block(k1, C_IN, C_OUT, stride=2),
            init_block(k2, C_OUT, C_OUT, stride=1)]
    w_all, sb_all, meta, c_out = pack_layer(raws)

    x_ncl = jax.random.normal(kx, (N, C_IN, L), F32)      # PyTorch (N, C, L) layout
    x_nlc = jnp.transpose(x_ncl, (0, 2, 1))               # one boundary transpose

    fwd = jax.jit(partial(fused_residual_layer_fwd, meta=meta, c_out=c_out, b_tile=4))
    y = jax.block_until_ready(fwd(x_nlc, w_all, sb_all))

    ref = x_ncl
    for raw in raws:
        ref = residual_block_ref(ref, raw)
    ref = jnp.transpose(ref, (0, 2, 1))

    assert y.shape == (N, L // 2, C_OUT), y.shape
    assert bool(jnp.all(jnp.isfinite(y)))
    err = float(jnp.max(jnp.abs(y - ref)))
    assert err < 1.5e-1, f"chain max abs err {err}"

    # ---- test 2: single plain block (stride=1, no downsample) + batch padding -
    raw_c = init_block(k3, C_OUT, C_OUT, stride=1)
    w1, sb1, meta1, _ = pack_layer([raw_c])
    x2_ncl = jax.random.normal(kx2, (6, C_OUT, L), F32)
    x2_nlc = jnp.transpose(x2_ncl, (0, 2, 1))
    fwd1 = jax.jit(partial(fused_residual_layer_fwd, meta=meta1, c_out=C_OUT, b_tile=4))
    y2 = jax.block_until_ready(fwd1(x2_nlc, w1, sb1))
    ref2 = jnp.transpose(residual_block_ref(x2_ncl, raw_c), (0, 2, 1))
    assert y2.shape == (6, L, C_OUT), y2.shape
    err2 = float(jnp.max(jnp.abs(y2 - ref2)))
    assert err2 < 1e-1, f"single-block max abs err {err2}"

    print("KERNEL_OK")
</pallas_src>

<mosaic_0001>
module attributes {stable_mosaic.version = 11 : i64} {
  func.func @_fused_layer_kernel(%arg0: i32, %arg1: memref<160x128xf32, #tpu.memory_space<vmem>>, %arg2: memref<1536x128xbf16, #tpu.memory_space<vmem>>, %arg3: memref<10x128xf32, #tpu.memory_space<vmem>>, %arg4: memref<4x32x128xf32, #tpu.memory_space<vmem>>, %arg5: memref<168x128xbf16, #tpu.memory_space<vmem>>, %arg6: memref<168x128xbf16, #tpu.memory_space<vmem>>) attributes {dimension_semantics = [#tpu.dimension_semantics<parallel>], iteration_bounds = array<i64: 4>, scalar_prefetch = 0 : i64, scratch_operands = 2 : i64, tpu.core_type = #tpu.core_type<tc>, window_params = [{transform_indices = @transform_0, window_bounds = array<i64: 160, 128>}, {pipeline_mode = #tpu.pipeline_mode<synchronous>, transform_indices = @transform_1, window_bounds = array<i64: 1536, 128>}, {pipeline_mode = #tpu.pipeline_mode<synchronous>, transform_indices = @transform_2, window_bounds = array<i64: 10, 128>}, {transform_indices = @transform_3, window_bounds = array<i64: 4, 32, 128>}]} {
    %cst = arith.constant 0.000000e+00 : bf16
    %0 = vector.broadcast %cst : bf16 to vector<168x128xbf16>
    %c0 = arith.constant 0 : index
    %c0_0 = arith.constant 0 : index
    %1 = vector.load %arg5[%c0, %c0_0] : memref<168x128xbf16, #tpu.memory_space<vmem>>, vector<168x128xbf16>
    tpu.vector_store %arg5[%c0, %c0_0], %0 {strides = array<i32>} : memref<168x128xbf16, #tpu.memory_space<vmem>>, vector<168x128xbf16>,
    %cst_1 = arith.constant 0.000000e+00 : bf16
    %2 = vector.broadcast %cst_1 : bf16 to vector<168x128xbf16>
    %c0_2 = arith.constant 0 : index
    %c0_3 = arith.constant 0 : index
    %3 = vector.load %arg6[%c0_2, %c0_3] : memref<168x128xbf16, #tpu.memory_space<vmem>>, vector<168x128xbf16>
    tpu.vector_store %arg6[%c0_2, %c0_3], %2 {strides = array<i32>} : memref<168x128xbf16, #tpu.memory_space<vmem>>, vector<168x128xbf16>,
    %c0_4 = arith.constant 0 : index
    %c0_5 = arith.constant 0 : index
    %4 = vector.load %arg1[%c0_4, %c0_5] : memref<160x128xf32, #tpu.memory_space<vmem>>, vector<160x128xf32>
    %5 = arith.truncf %4 : vector<160x128xf32> to vector<160x128xbf16>
    %6 = vector.extract_strided_slice %5 {offsets = [0, 0], sizes = [152, 128], strides = [1, 1]} : vector<160x128xbf16> to vector<152x128xbf16>
    %c0_6 = arith.constant 0 : index
    %c0_7 = arith.constant 0 : index
    %7 = vector.load %arg2[%c0_6, %c0_7] : memref<1536x128xbf16, #tpu.memory_space<vmem>>, vector<128x128xbf16>
    %cst_8 = arith.constant dense<0.000000e+00> : vector<152x128xf32>
    %8 = tpu.matmul %6, %7, %cst_8 {dimension_numbers = #tpu.dot_dimension_numbers<[1], [0], [0], [1], [0, 0, 1, 1], [], []>} : vector<152x128xbf16>, vector<128x128xbf16>, vector<152x128xf32> -> vector<152x128xf32>
    %9 = vector.extract_strided_slice %5 {offsets = [1, 0], sizes = [152, 128], strides = [1, 1]} : vector<160x128xbf16> to vector<152x128xbf16>
    %c128 = arith.constant 128 : index
    %c0_9 = arith.constant 0 : index
    %10 = vector.load %arg2[%c128, %c0_9] : memref<1536x128xbf16, #tpu.memory_space<vmem>>, vector<128x128xbf16>
    %cst_10 = arith.constant dense<0.000000e+00> : vector<152x128xf32>
    %11 = tpu.matmul %9, %10, %cst_10 {dimension_numbers = #tpu.dot_dimension_numbers<[1], [0], [0], [1], [0, 0, 1, 1], [], []>} : vector<152x128xbf16>, vector<128x128xbf16>, vector<152x128xf32> -> vector<152x128xf32>
    %12 = arith.addf %8, %11 : vector<152x128xf32>
    %c0_11 = arith.constant 0 : index
    %c0_12 = arith.constant 0 : index
    %13 = vector.load %arg3[%c0_11, %c0_12] : memref<10x128xf32, #tpu.memory_space<vmem>>, vector<1x128xf32>
    %c1 = arith.constant 1 : index
    %c0_13 = arith.constant 0 : index
    %14 = vector.load %arg3[%c1, %c0_13] : memref<10x128xf32, #tpu.memory_space<vmem>>, vector<1x128xf32>
    %15 = vector.broadcast %13 : vector<1x128xf32> to vector<152x128xf32>
    %16 = arith.mulf %12, %15 : vector<152x128xf32>
    %17 = vector.broadcast %14 : vector<1x128xf32> to vector<152x128xf32>
    %18 = arith.addf %16, %17 : vector<152x128xf32>
    %cst_14 = arith.constant 0.000000e+00 : f32
    %19 = vector.broadcast %cst_14 : f32 to vector<152x128xf32>
    %20 = arith.maximumf %18, %19 : vector<152x128xf32>
    %c256 = arith.constant 256 : index
    %c0_15 = arith.constant 0 : index
    %21 = vector.load %arg2[%c256, %c0_15] : memref<1536x128xbf16, #tpu.memory_space<vmem>>, vector<128x128xbf16>
    %c2 = arith.constant 2 : index
    %c0_16 = arith.constant 0 : index
    %22 = vector.load %arg3[%c2, %c0_16] : memref<10x128xf32, #tpu.memory_space<vmem>>, vector<1x128xf32>
    %c3 = arith.constant 3 : index
    %c0_17 = arith.constant 0 : index
    %23 = vector.load %arg3[%c3, %c0_17] : memref<10x128xf32, #tpu.memory_space<vmem>>, vector<1x128xf32>
    %24 = vector.extract_strided_slice %5 {offsets = [0, 0], sizes = [152, 128], strides = [1, 1]} : vector<160x128xbf16> to vector<152x128xbf16>
    %cst_18 = arith.constant dense<0.000000e+00> : vector<152x128xf32>
    %25 = tpu.matmul %24, %21, %cst_18 {dimension_numbers = #tpu.dot_dimension_numbers<[1], [0], [0], [1], [0, 0, 1, 1], [], []>} : vector<152x128xbf16>, vector<128x128xbf16>, vector<152x128xf32> -> vector<152x128xf32>
    %26 = vector.broadcast %22 : vector<1x128xf32> to vector<152x128xf32>
    %27 = arith.mulf %25, %26 : vector<152x128xf32>
    %28 = vector.broadcast %23 : vector<1x128xf32> to vector<152x128xf32>
    %29 = arith.addf %27, %28 : vector<152x128xf32>
    %30 = vector.extract_strided_slice %20 {offsets = [0, 0], sizes = [32, 128], strides = [1, 1]} : vector<152x128xf32> to vector<32x128xf32>
    %31 = arith.truncf %30 : vector<32x128xf32> to vector<32x128xbf16>
    %c8 = arith.constant 8 : index
    %c0_19 = arith.constant 0 : index
    %32 = vector.load %arg5[%c8, %c0_19] : memref<168x128xbf16, #tpu.memory_space<vmem>>, vector<32x128xbf16>
    tpu.vector_store %arg5[%c8, %c0_19], %31 {strides = array<i32>} : memref<168x128xbf16, #tpu.memory_space<vmem>>, vector<32x128xbf16>,
    %33 = vector.extract_strided_slice %20 {offsets = [40, 0], sizes = [32, 128], strides = [1, 1]} : vector<152x128xf32> to vector<32x128xf32>
    %34 = arith.truncf %33 : vector<32x128xf32> to vector<32x128xbf16>
    %c48 = arith.constant 48 : index
    %c0_20 = arith.constant 0 : index
    %35 = vector.load %arg5[%c48, %c0_20] : memref<168x128xbf16, #tpu.memory_space<vmem>>, vector<32x128xbf16>
    tpu.vector_store %arg5[%c48, %c0_20], %34 {strides = array<i32>} : memref<168x128xbf16, #tpu.memory_space<vmem>>, vector<32x128xbf16>,
    %36 = vector.extract_strided_slice %20 {offsets = [80, 0], sizes = [32, 128], strides = [1, 1]} : vector<152x128xf32> to vector<32x128xf32>
    %37 = arith.truncf %36 : vector<32x128xf32> to vector<32x128xbf16>
    %c88 = arith.constant 88 : index
    %c0_21 = arith.constant 0 : index
    %38 = vector.load %arg5[%c88, %c0_21] : memref<168x128xbf16, #tpu.memory_space<vmem>>, vector<32x128xbf16>
    tpu.vector_store %arg5[%c88, %c0_21], %37 {strides = array<i32>} : memref<168x128xbf16, #tpu.memory_space<vmem>>, vector<32x128xbf16>,
    %39 = vector.extract_strided_slice %20 {offsets = [120, 0], sizes = [32, 128], strides = [1, 1]} : vector<152x128xf32> to vector<32x128xf32>
    %40 = arith.truncf %39 : vector<32x128xf32> to vector<32x128xbf16>
    %c128_22 = arith.constant 128 : index
    %c0_23 = arith.constant 0 : index
    %41 = vector.load %arg5[%c128_22, %c0_23] : memref<168x128xbf16, #tpu.memory_space<vmem>>, vector<32x128xbf16>
    tpu.vector_store %arg5[%c128_22, %c0_23], %40 {strides = array<i32>} : memref<168x128xbf16, #tpu.memory_space<vmem>>, vector<32x128xbf16>,
    %c7 = arith.constant 7 : index
    %c0_24 = arith.constant 0 : index
    %42 = vector.load %arg5[%c7, %c0_24] : memref<168x128xbf16, #tpu.memory_space<vmem>>, vector<152x128xbf16>
    %c384 = arith.constant 384 : index
    %c0_25 = arith.constant 0 : index
    %43 = vector.load %arg2[%c384, %c0_25] : memref<1536x128xbf16, #tpu.memory_space<vmem>>, vector<128x128xbf16>
    %cst_26 = arith.constant dense<0.000000e+00> : vector<152x128xf32>
    %44 = tpu.matmul %42, %43, %cst_26 {dimension_numbers = #tpu.dot_dimension_numbers<[1], [0], [0], [1], [0, 0, 1, 1], [], []>} : vector<152x128xbf16>, vector<128x128xbf16>, vector<152x128xf32> -> vector<152x128xf32>
    %c8_27 = arith.constant 8 : index
    %c0_28 = arith.constant 0 : index
    %45 = vector.load %arg5[%c8_27, %c0_28] : memref<168x128xbf16, #tpu.memory_space<vmem>>, vector<152x128xbf16>
    %c512 = arith.constant 512 : index
    %c0_29 = arith.constant 0 : index
    %46 = vector.load %arg2[%c512, %c0_29] : memref<1536x128xbf16, #tpu.memory_space<vmem>>, vector<128x128xbf16>
    %cst_30 = arith.constant dense<0.000000e+00> : vector<152x128xf32>
    %47 = tpu.matmul %45, %46, %cst_30 {dimension_numbers = #tpu.dot_dimension_numbers<[1], [0], [0], [1], [0, 0, 1, 1], [], []>} : vector<152x128xbf16>, vector<128x128xbf16>, vector<152x128xf32> -> vector<152x128xf32>
    %48 = arith.addf %44, %47 : vector<152x128xf32>
    %c9 = arith.constant 9 : index
    %c0_31 = arith.constant 0 : index
    %49 = vector.load %arg5[%c9, %c0_31] : memref<168x128xbf16, #tpu.memory_space<vmem>>, vector<152x128xbf16>
    %c640 = arith.constant 640 : index
    %c0_32 = arith.constant 0 : index
    %50 = vector.load %arg2[%c640, %c0_32] : memref<1536x128xbf16, #tpu.memory_space<vmem>>, vector<128x128xbf16>
    %cst_33 = arith.constant dense<0.000000e+00> : vector<152x128xf32>
    %51 = tpu.matmul %49, %50, %cst_33 {dimension_numbers = #tpu.dot_dimension_numbers<[1], [0], [0], [1], [0, 0, 1, 1], [], []>} : vector<152x128xbf16>, vector<128x128xbf16>, vector<152x128xf32> -> vector<152x128xf32>
    %52 = arith.addf %48, %51 : vector<152x128xf32>
    %c4 = arith.constant 4 : index
    %c0_34 = arith.constant 0 : index
    %53 = vector.load %arg3[%c4, %c0_34] : memref<10x128xf32, #tpu.memory_space<vmem>>, vector<1x128xf32>
    %c5 = arith.constant 5 : index
    %c0_35 = arith.constant 0 : index
    %54 = vector.load %arg3[%c5, %c0_35] : memref<10x128xf32, #tpu.memory_space<vmem>>, vector<1x128xf32>
    %55 = vector.broadcast %53 : vector<1x128xf32> to vector<152x128xf32>
    %56 = arith.mulf %52, %55 : vector<152x128xf32>
    %57 = vector.broadcast %54 : vector<1x128xf32> to vector<152x128xf32>
    %58 = arith.addf %56, %57 : vector<152x128xf32>
    %59 = arith.addf %58, %29 : vector<152x128xf32>
    %cst_36 = arith.constant 0.000000e+00 : f32
    %60 = vector.broadcast %cst_36 : f32 to vector<152x128xf32>
    %61 = arith.maximumf %59, %60 : vector<152x128xf32>
    %62 = vector.extract_strided_slice %61 {offsets = [0, 0], sizes = [32, 128], strides = [1, 1]} : vector<152x128xf32> to vector<32x128xf32>
    %63 = arith.truncf %62 : vector<32x128xf32> to vector<32x128xbf16>
    %c8_37 = arith.constant 8 : index
    %c0_38 = arith.constant 0 : index
    %64 = vector.load %arg6[%c8_37, %c0_38] : memref<168x128xbf16, #tpu.memory_space<vmem>>, vector<32x128xbf16>
    tpu.vector_store %arg6[%c8_37, %c0_38], %63 {strides = array<i32>} : memref<168x128xbf16, #tpu.memory_space<vmem>>, vector<32x128xbf16>,
    %65 = vector.extract_strided_slice %61 {offsets = [40, 0], sizes = [32, 128], strides = [1, 1]} : vector<152x128xf32> to vector<32x128xf32>
    %66 = arith.truncf %65 : vector<32x128xf32> to vector<32x128xbf16>
    %c48_39 = arith.constant 48 : index
    %c0_40 = arith.constant 0 : index
    %67 = vector.load %arg6[%c48_39, %c0_40] : memref<168x128xbf16, #tpu.memory_space<vmem>>, vector<32x128xbf16>
    tpu.vector_store %arg6[%c48_39, %c0_40], %66 {strides = array<i32>} : memref<168x128xbf16, #tpu.memory_space<vmem>>, vector<32x128xbf16>,
    %68 = vector.extract_strided_slice %61 {offsets = [80, 0], sizes = [32, 128], strides = [1, 1]} : vector<152x128xf32> to vector<32x128xf32>
    %69 = arith.truncf %68 : vector<32x128xf32> to vector<32x128xbf16>
    %c88_41 = arith.constant 88 : index
    %c0_42 = arith.constant 0 : index
    %70 = vector.load %arg6[%c88_41, %c0_42] : memref<168x128xbf16, #tpu.memory_space<vmem>>, vector<32x128xbf16>
    tpu.vector_store %arg6[%c88_41, %c0_42], %69 {strides = array<i32>} : memref<168x128xbf16, #tpu.memory_space<vmem>>, vector<32x128xbf16>,
    %71 = vector.extract_strided_slice %61 {offsets = [120, 0], sizes = [32, 128], strides = [1, 1]} : vector<152x128xf32> to vector<32x128xf32>
    %72 = arith.truncf %71 : vector<32x128xf32> to vector<32x128xbf16>
    %c128_43 = arith.constant 128 : index
    %c0_44 = arith.constant 0 : index
    %73 = vector.load %arg6[%c128_43, %c0_44] : memref<168x128xbf16, #tpu.memory_space<vmem>>, vector<32x128xbf16>
    tpu.vector_store %arg6[%c128_43, %c0_44], %72 {strides = array<i32>} : memref<168x128xbf16, #tpu.memory_space<vmem>>, vector<32x128xbf16>,
    %c7_45 = arith.constant 7 : index
    %c0_46 = arith.constant 0 : index
    %74 = vector.load %arg6[%c7_45, %c0_46] : memref<168x128xbf16, #tpu.memory_space<vmem>>, vector<152x128xbf16>
    %c768 = arith.constant 768 : index
    %c0_47 = arith.constant 0 : index
    %75 = vector.load %arg2[%c768, %c0_47] : memref<1536x128xbf16, #tpu.memory_space<vmem>>, vector<128x128xbf16>
    %cst_48 = arith.constant dense<0.000000e+00> : vector<152x128xf32>
    %76 = tpu.matmul %74, %75, %cst_48 {dimension_numbers = #tpu.dot_dimension_numbers<[1], [0], [0], [1], [0, 0, 1, 1], [], []>} : vector<152x128xbf16>, vector<128x128xbf16>, vector<152x128xf32> -> vector<152x128xf32>
    %c8_49 = arith.constant 8 : index
    %c0_50 = arith.constant 0 : index
    %77 = vector.load %arg6[%c8_49, %c0_50] : memref<168x128xbf16, #tpu.memory_space<vmem>>, vector<152x128xbf16>
    %c896 = arith.constant 896 : index
    %c0_51 = arith.constant 0 : index
    %78 = vector.load %arg2[%c896, %c0_51] : memref<1536x128xbf16, #tpu.memory_space<vmem>>, vector<128x128xbf16>
    %cst_52 = arith.constant dense<0.000000e+00> : vector<152x128xf32>
    %79 = tpu.matmul %77, %78, %cst_52 {dimension_numbers = #tpu.dot_dimension_numbers<[1], [0], [0], [1], [0, 0, 1, 1], [], []>} : vector<152x128xbf16>, vector<128x128xbf16>, vector<152x128xf32> -> vector<152x128xf32>
    %80 = arith.addf %76, %79 : vector<152x128xf32>
    %c9_53 = arith.constant 9 : index
    %c0_54 = arith.constant 0 : index
    %81 = vector.load %arg6[%c9_53, %c0_54] : memref<168x128xbf16, #tpu.memory_space<vmem>>, vector<152x128xbf16>
    %c1024 = arith.constant 1024 : index
    %c0_55 = arith.constant 0 : index
    %82 = vector.load %arg2[%c1024, %c0_55] : memref<1536x128xbf16, #tpu.memory_space<vmem>>, vector<128x128xbf16>
    %cst_56 = arith.constant dense<0.000000e+00> : vector<152x128xf32>
    %83 = tpu.matmul %81, %82, %cst_56 {dimension_numbers = #tpu.dot_dimension_numbers<[1], [0], [0], [1], [0, 0, 1, 1], [], []>} : vector<152x128xbf16>, vector<128x128xbf16>, vector<152x128xf32> -> vector<152x128xf32>
    %84 = arith.addf %80, %83 : vector<152x128xf32>
    %c6 = arith.constant 6 : index
    %c0_57 = arith.constant 0 : index
    %85 = vector.load %arg3[%c6, %c0_57] : memref<10x128xf32, #tpu.memory_space<vmem>>, vector<1x128xf32>
    %c7_58 = arith.constant 7 : index
    %c0_59 = arith.constant 0 : index
    %86 = vector.load %arg3[%c7_58, %c0_59] : memref<10x128xf32, #tpu.memory_space<vmem>>, vector<1x128xf32>
    %87 = vector.broadcast %85 : vector<1x128xf32> to vector<152x128xf32>
    %88 = arith.mulf %84, %87 : vector<152x128xf32>
    %89 = vector.broadcast %86 : vector<1x128xf32> to vector<152x128xf32>
    %90 = arith.addf %88, %89 : vector<152x128xf32>
    %cst_60 = arith.constant 0.000000e+00 : f32
    %91 = vector.broadcast %cst_60 : f32 to vector<152x128xf32>
    %92 = arith.maximumf %90, %91 : vector<152x128xf32>
    %93 = vector.extract_strided_slice %92 {offsets = [0, 0], sizes = [32, 128], strides = [1, 1]} : vector<152x128xf32> to vector<32x128xf32>
    %94 = arith.truncf %93 : vector<32x128xf32> to vector<32x128xbf16>
    %c8_61 = arith.constant 8 : index
    %c0_62 = arith.constant 0 : index
    %95 = vector.load %arg5[%c8_61, %c0_62] : memref<168x128xbf16, #tpu.memory_space<vmem>>, vector<32x128xbf16>
    tpu.vector_store %arg5[%c8_61, %c0_62], %94 {strides = array<i32>} : memref<168x128xbf16, #tpu.memory_space<vmem>>, vector<32x128xbf16>,
    %96 = vector.extract_strided_slice %92 {offsets = [40, 0], sizes = [32, 128], strides = [1, 1]} : vector<152x128xf32> to vector<32x128xf32>
    %97 = arith.truncf %96 : vector<32x128xf32> to vector<32x128xbf16>
    %c48_63 = arith.constant 48 : index
    %c0_64 = arith.constant 0 : index
    %98 = vector.load %arg5[%c48_63, %c0_64] : memref<168x128xbf16, #tpu.memory_space<vmem>>, vector<32x128xbf16>
    tpu.vector_store %arg5[%c48_63, %c0_64], %97 {strides = array<i32>} : memref<168x128xbf16, #tpu.memory_space<vmem>>, vector<32x128xbf16>,
    %99 = vector.extract_strided_slice %92 {offsets = [80, 0], sizes = [32, 128], strides = [1, 1]} : vector<152x128xf32> to vector<32x128xf32>
    %100 = arith.truncf %99 : vector<32x128xf32> to vector<32x128xbf16>
    %c88_65 = arith.constant 88 : index
    %c0_66 = arith.constant 0 : index
    %101 = vector.load %arg5[%c88_65, %c0_66] : memref<168x128xbf16, #tpu.memory_space<vmem>>, vector<32x128xbf16>
    tpu.vector_store %arg5[%c88_65, %c0_66], %100 {strides = array<i32>} : memref<168x128xbf16, #tpu.memory_space<vmem>>, vector<32x128xbf16>,
    %102 = vector.extract_strided_slice %92 {offsets = [120, 0], sizes = [32, 128], strides = [1, 1]} : vector<152x128xf32> to vector<32x128xf32>
    %103 = arith.truncf %102 : vector<32x128xf32> to vector<32x128xbf16>
    %c128_67 = arith.constant 128 : index
    %c0_68 = arith.constant 0 : index
    %104 = vector.load %arg5[%c128_67, %c0_68] : memref<168x128xbf16, #tpu.memory_space<vmem>>, vector<32x128xbf16>
    tpu.vector_store %arg5[%c128_67, %c0_68], %103 {strides = array<i32>} : memref<168x128xbf16, #tpu.memory_space<vmem>>, vector<32x128xbf16>,
    %c7_69 = arith.constant 7 : index
    %c0_70 = arith.constant 0 : index
    %105 = vector.load %arg5[%c7_69, %c0_70] : memref<168x128xbf16, #tpu.memory_space<vmem>>, vector<152x128xbf16>
    %c1152 = arith.constant 1152 : index
    %c0_71 = arith.constant 0 : index
    %106 = vector.load %arg2[%c1152, %c0_71] : memref<1536x128xbf16, #tpu.memory_space<vmem>>, vector<128x128xbf16>
    %cst_72 = arith.constant dense<0.000000e+00> : vector<152x128xf32>
    %107 = tpu.matmul %105, %106, %cst_72 {dimension_numbers = #tpu.dot_dimension_numbers<[1], [0], [0], [1], [0, 0, 1, 1], [], []>} : vector<152x128xbf16>, vector<128x128xbf16>, vector<152x128xf32> -> vector<152x128xf32>
    %c8_73 = arith.constant 8 : index
    %c0_74 = arith.constant 0 : index
    %108 = vector.load %arg5[%c8_73, %c0_74] : memref<168x128xbf16, #tpu.memory_space<vmem>>, vector<152x128xbf16>
    %c1280 = arith.constant 1280 : index
    %c0_75 = arith.constant 0 : index
    %109 = vector.load %arg2[%c1280, %c0_75] : memref<1536x128xbf16, #tpu.memory_space<vmem>>, vector<128x128xbf16>
    %cst_76 = arith.constant dense<0.000000e+00> : vector<152x128xf32>
    %110 = tpu.matmul %108, %109, %cst_76 {dimension_numbers = #tpu.dot_dimension_numbers<[1], [0], [0], [1], [0, 0, 1, 1], [], []>} : vector<152x128xbf16>, vector<128x128xbf16>, vector<152x128xf32> -> vector<152x128xf32>
    %111 = arith.addf %107, %110 : vector<152x128xf32>
    %c9_77 = arith.constant 9 : index
    %c0_78 = arith.constant 0 : index
    %112 = vector.load %arg5[%c9_77, %c0_78] : memref<168x128xbf16, #tpu.memory_space<vmem>>, vector<152x128xbf16>
    %c1408 = arith.constant 1408 : index
    %c0_79 = arith.constant 0 : index
    %113 = vector.load %arg2[%c1408, %c0_79] : memref<1536x128xbf16, #tpu.memory_space<vmem>>, vector<128x128xbf16>
    %cst_80 = arith.constant dense<0.000000e+00> : vector<152x128xf32>
    %114 = tpu.matmul %112, %113, %cst_80 {dimension_numbers = #tpu.dot_dimension_numbers<[1], [0], [0], [1], [0, 0, 1, 1], [], []>} : vector<152x128xbf16>, vector<128x128xbf16>, vector<152x128xf32> -> vector<152x128xf32>
    %115 = arith.addf %111, %114 : vector<152x128xf32>
    %c8_81 = arith.constant 8 : index
    %c0_82 = arith.constant 0 : index
    %116 = vector.load %arg3[%c8_81, %c0_82] : memref<10x128xf32, #tpu.memory_space<vmem>>, vector<1x128xf32>
    %c9_83 = arith.constant 9 : index
    %c0_84 = arith.constant 0 : index
    %117 = vector.load %arg3[%c9_83, %c0_84] : memref<10x128xf32, #tpu.memory_space<vmem>>, vector<1x128xf32>
    %118 = vector.broadcast %116 : vector<1x128xf32> to vector<152x128xf32>
    %119 = arith.mulf %115, %118 : vector<152x128xf32>
    %120 = vector.broadcast %117 : vector<1x128xf32> to vector<152x128xf32>
    %121 = arith.addf %119, %120 : vector<152x128xf32>
    %122 = arith.addf %121, %61 : vector<152x128xf32>
    %cst_85 = arith.constant 0.000000e+00 : f32
    %123 = vector.broadcast %cst_85 : f32 to vector<152x128xf32>
    %124 = arith.maximumf %122, %123 : vector<152x128xf32>
    %125 = vector.extract_strided_slice %124 {offsets = [0, 0], sizes = [32, 128], strides = [1, 1]} : vector<152x128xf32> to vector<32x128xf32>
    %c0_86 = arith.constant 0 : index
    %c0_87 = arith.constant 0 : index
    %c0_88 = arith.constant 0 : index
    %126 = vector.load %arg4[%c0_86, %c0_87, %c0_88] : memref<4x32x128xf32, #tpu.memory_space<vmem>>, vector<1x32x128xf32>
    %127 = vector.shape_cast %126 : vector<1x32x128xf32> to vector<32x128xf32>
    %128 = vector.shape_cast %125 : vector<32x128xf32> to vector<1x32x128xf32>
    tpu.vector_store %arg4[%c0_86, %c0_87, %c0_88], %128 {strides = array<i32>} : memref<4x32x128xf32, #tpu.memory_space<vmem>>, vector<1x32x128xf32>,
    %129 = vector.extract_strided_slice %124 {offsets = [40, 0], sizes = [32, 128], strides = [1, 1]} : vector<152x128xf32> to vector<32x128xf32>
    %c1_89 = arith.constant 1 : index
    %c0_90 = arith.constant 0 : index
    %c0_91 = arith.constant 0 : index
    %130 = vector.load %arg4[%c1_89, %c0_90, %c0_91] : memref<4x32x128xf32, #tpu.memory_space<vmem>>, vector<1x32x128xf32>
    %131 = vector.shape_cast %130 : vector<1x32x128xf32> to vector<32x128xf32>
    %132 = vector.shape_cast %129 : vector<32x128xf32> to vector<1x32x128xf32>
    tpu.vector_store %arg4[%c1_89, %c0_90, %c0_91], %132 {strides = array<i32>} : memref<4x32x128xf32, #tpu.memory_space<vmem>>, vector<1x32x128xf32>,
    %133 = vector.extract_strided_slice %124 {offsets = [80, 0], sizes = [32, 128], strides = [1, 1]} : vector<152x128xf32> to vector<32x128xf32>
    %c2_92 = arith.constant 2 : index
    %c0_93 = arith.constant 0 : index
    %c0_94 = arith.constant 0 : index
    %134 = vector.load %arg4[%c2_92, %c0_93, %c0_94] : memref<4x32x128xf32, #tpu.memory_space<vmem>>, vector<1x32x128xf32>
    %135 = vector.shape_cast %134 : vector<1x32x128xf32> to vector<32x128xf32>
    %136 = vector.shape_cast %133 : vector<32x128xf32> to vector<1x32x128xf32>
    tpu.vector_store %arg4[%c2_92, %c0_93, %c0_94], %136 {strides = array<i32>} : memref<4x32x128xf32, #tpu.memory_space<vmem>>, vector<1x32x128xf32>,
    %137 = vector.extract_strided_slice %124 {offsets = [120, 0], sizes = [32, 128], strides = [1, 1]} : vector<152x128xf32> to vector<32x128xf32>
    %c3_95 = arith.constant 3 : index
    %c0_96 = arith.constant 0 : index
    %c0_97 = arith.constant 0 : index
    %138 = vector.load %arg4[%c3_95, %c0_96, %c0_97] : memref<4x32x128xf32, #tpu.memory_space<vmem>>, vector<1x32x128xf32>
    %139 = vector.shape_cast %138 : vector<1x32x128xf32> to vector<32x128xf32>
    %140 = vector.shape_cast %137 : vector<32x128xf32> to vector<1x32x128xf32>
    tpu.vector_store %arg4[%c3_95, %c0_96, %c0_97], %140 {strides = array<i32>} : memref<4x32x128xf32, #tpu.memory_space<vmem>>, vector<1x32x128xf32>,
    return
  }
  func.func @transform_0(%arg0: i32) -> (i32, i32) {
    %c0_i32 = arith.constant 0 : i32
    %c0_i32_0 = arith.constant 0 : i32
    return %arg0, %c0_i32 : i32, i32
  }
  func.func @transform_1(%arg0: i32) -> (i32, i32) {
    %c0_i32 = arith.constant 0 : i32
    %c0_i32_0 = arith.constant 0 : i32
    %c0_i32_1 = arith.constant 0 : i32
    return %c0_i32, %c0_i32_0 : i32, i32
  }
  func.func @transform_2(%arg0: i32) -> (i32, i32) {
    %c0_i32 = arith.constant 0 : i32
    %c0_i32_0 = arith.constant 0 : i32
    %c0_i32_1 = arith.constant 0 : i32
    return %c0_i32, %c0_i32_0 : i32, i32
  }
  func.func @transform_3(%arg0: i32) -> (i32, i32, i32) {
    %c0_i32 = arith.constant 0 : i32
    %c0_i32_0 = arith.constant 0 : i32
    %c0_i32_1 = arith.constant 0 : i32
    return %arg0, %c0_i32, %c0_i32_0 : i32, i32, i32
  }
}

</mosaic_0001>

<llo_original>
// kernel: fused_residual_layer_fwd.1
$region0: #{fused_residual_layer_fwd.1}
  #allocation0 [shape = 'u32[]', space=smem, size = 0x4, offset = 0x4, fixed_abs, tag = 'smem constant byte address 0x4 - core index']
  #allocation1 [shape = 'u32[144,128]{1,0:T(1,128)}', space=vmem, size = 0x12000, scoped, tag = 'internal scratch']
  #allocation2 [shape = 'bf16[168,128]{1,0:T(8,128)(2,1)}', space=vmem, size = 0xa800, scoped, tag = 'scratch operand']
  #allocation3 [shape = 'bf16[168,128]{1,0:T(8,128)(2,1)}', space=vmem, size = 0xa800, scoped, tag = 'scratch operand']
  %s0 = inlined_call_operand.vmem [shape: f32[640,128], index: 0, kind: input, shape index: {}]
  %s1 = inlined_call_operand.vmem [shape: bf16[1536,128], index: 1, kind: input, shape index: {}]
  %s2 = inlined_call_operand.vmem [shape: f32[10,128], index: 2, kind: input, shape index: {}]
  %s3 = inlined_call_operand.hbm [shape: f32[16,32,128], index: 3, kind: output, shape index: {}]
  %s4 = sld [smem:[#allocation0]]
  $region45: #{fused_residual_layer_fwd.1} parent=0
    _
  %s6 = ssub.s32 1, %s4
  %s7 = scalar_select 0, %s6, %s4
  $region1: #{fused_residual_layer_fwd.1} parent=0
    #allocation4 [shape = 'u8[131072]{0}', space=vmem, size = 0x20000, scoped, tag = 'output window, operand 0']
    #allocation5 [shape = 's32[2]{0}', space=sflag, size = 0x8, scoped, tag = 'scoped memory for fused_residual_layer_fwd.1']
    %8 = vsyncpa [#allocation5], 0
    %s9 = scalar_lea.sflag [#allocation5], 1
    %10 = vsyncpa %s9, 0
    loop: start=0, step=1, limit=6
    $region2: #{fused_residual_layer_fwd.1} parent=1 // loop_pre_header
      _
    $region3: #{fused_residual_layer_fwd.1} parent=1 // loop_header
      %s12 = sphi 0, %s16
      %p13 = scmp.ge.s32.totalorder %s12, 6
      %s22 = sphi 0, %s24
      %s25 = sphi 0, %s22
      %s26 = sphi 0, %s25
      %s42 = sphi 0, %s26
      %s46 = sphi 0, %s46
      %s48 = sphi 0, %s46
      %s49 = sphi 0, %s48
      %s63 = sphi 0, %s49
      %s67 = sphi 0, %s67
      %s69 = sphi 0, %s67
      %s70 = sphi 0, %s69
      %s84 = sphi 0, %s70
      %s90 = sphi 0, %s92
      %s93 = sphi 0, %s90
      %s94 = sphi 0, %s93
      %s110 = sphi 0, %s94
    $region4: #{fused_residual_layer_fwd.1} parent=1 // loop_header_branch
      %15 = sbr.rel (%p13) target = $region8
    $region5: #{fused_residual_layer_fwd.1} parent=1 // loop_body
      %s17 = ssub.s32 %s12, 1
      %s18 = ssub.s32 %s12, 2
      %s19 = sadd.s32 %s12, 1
      %s20 = ssub.s32 %s12, %s19
      %p21 = scmp.eq.s32.totalorder %s20, 0
      %s23 = sadd.s32 %s22, 1
      %s24 = scalar_select %p21, %s22, %s23
      %p27 = pneg %p21
      %p28 = scmp.eq.s32.totalorder %s12, 3
      %p29 = por %p27, %p28
      %p30 = scmp.ne.s32.totalorder %s22, %s25
      %p31 = scmp.eq.s32.totalorder %s12, 0
      %p32 = por %p30, %p31
      %p33 = scmp.ne.s32.totalorder %s22, %s25
      %p34 = scmp.eq.s32.totalorder %s17, 3
      %p35 = por %p33, %p34
      %p36 = scmp.ne.s32.totalorder %s25, %s26
      %p37 = scmp.eq.s32.totalorder %s17, 0
      %p38 = por %p36, %p37
      %p39 = scmp.ne.s32.totalorder %s25, %s26
      %p40 = scmp.eq.s32.totalorder %s18, 3
      %p41 = por %p39, %p40
      %p43 = scmp.ne.s32.totalorder %s26, %s42
      %p44 = scmp.eq.s32.totalorder %s18, 0
      %p45 = por %p43, %p44
      %s47 = sadd.s32 %s46, 1
      %p50 = scmp.eq.s32.totalorder %s12, 3
      %p51 = scmp.ne.s32.totalorder %s46, %s48
      %p52 = scmp.eq.s32.totalorder %s12, 0
      %p53 = por %p51, %p52
      %p54 = scmp.ne.s32.totalorder %s46, %s48
      %p55 = scmp.eq.s32.totalorder %s17, 3
      %p56 = por %p54, %p55
      %p57 = scmp.ne.s32.totalorder %s48, %s49
      %p58 = scmp.eq.s32.totalorder %s17, 0
      %p59 = por %p57, %p58
      %p60 = scmp.ne.s32.totalorder %s48, %s49
      %p61 = scmp.eq.s32.totalorder %s18, 3
      %p62 = por %p60, %p61
      %p64 = scmp.ne.s32.totalorder %s49, %s63
      %p65 = scmp.eq.s32.totalorder %s18, 0
      %p66 = por %p64, %p65
      %s68 = sadd.s32 %s67, 1
      %p71 = scmp.eq.s32.totalorder %s12, 3
      %p72 = scmp.ne.s32.totalorder %s67, %s69
      %p73 = scmp.eq.s32.totalorder %s12, 0
      %p74 = por %p72, %p73
      %p75 = scmp.ne.s32.totalorder %s67, %s69
      %p76 = scmp.eq.s32.totalorder %s17, 3
      %p77 = por %p75, %p76
      %p78 = scmp.ne.s32.totalorder %s69, %s70
      %p79 = scmp.eq.s32.totalorder %s17, 0
      %p80 = por %p78, %p79
      %p81 = scmp.ne.s32.totalorder %s69, %s70
      %p82 = scmp.eq.s32.totalorder %s18, 3
      %p83 = por %p81, %p82
      %p85 = scmp.ne.s32.totalorder %s70, %s84
      %p86 = scmp.eq.s32.totalorder %s18, 0
      %p87 = por %p85, %p86
      %s88 = ssub.s32 %s12, %s19
      %p89 = scmp.eq.s32.totalorder %s88, 0
      %s91 = sadd.s32 %s90, 1
      %s92 = scalar_select %p89, %s90, %s91
      %p95 = pneg %p89
      %p96 = scmp.eq.s32.totalorder %s12, 3
      %p97 = por %p95, %p96
      %p98 = scmp.ne.s32.totalorder %s90, %s93
      %p99 = scmp.eq.s32.totalorder %s12, 0
      %p100 = por %p98, %p99
      %p101 = scmp.ne.s32.totalorder %s90, %s93
      %p102 = scmp.eq.s32.totalorder %s17, 3
      %p103 = por %p101, %p102
      %p104 = scmp.ne.s32.totalorder %s93, %s94
      %p105 = scmp.eq.s32.totalorder %s17, 0
      %p106 = por %p104, %p105
      %p107 = scmp.ne.s32.totalorder %s93, %s94
      %p108 = scmp.eq.s32.totalorder %s18, 3
      %p109 = por %p107, %p108
      %p111 = scmp.ne.s32.totalorder %s94, %s110
      %p112 = scmp.eq.s32.totalorder %s18, 0
      %p113 = por %p111, %p112
      %p114 = scmp.le.s32.totalorder 1, %s12
      %p115 = scmp.lt.s32.totalorder %s12, 5
      %p116 = pnand %p114, %p115
      %p117 = pneg %p116
      // Predicated region
      $region9: #{fused_residual_layer_fwd.1} parent=5 // pred_check
        _
      $region10: #{fused_residual_layer_fwd.1} parent=5 // pred_check_branch
        %119 = sbr.rel (%p116) target = $region12
      $region11: #{fused_residual_layer_fwd.1} parent=5 // pred_region
        %s120 = ssub.s32 %s12, 1
        // Predicated region
        $region13: #{fused_residual_layer_fwd.1} parent=11 // pred_check
          %p121 = pneg %p59
        $region14: #{fused_residual_layer_fwd.1} parent=11 // pred_check_branch
          %123 = sbr.rel (%p121) target = $region16
        $region15: #{fused_residual_layer_fwd.1} parent=11 // pred_region
          _
        $region16: #{fused_residual_layer_fwd.1} parent=11 // pred_fallthru
          _
        // Predicated region
        $region17: #{fused_residual_layer_fwd.1} parent=11 // pred_check
          %p124 = pneg %p80
        $region18: #{fused_residual_layer_fwd.1} parent=11 // pred_check_branch
          %126 = sbr.rel (%p124) target = $region20
        $region19: #{fused_residual_layer_fwd.1} parent=11 // pred_region
          _
        $region20: #{fused_residual_layer_fwd.1} parent=11 // pred_fallthru
          _
      $region12: #{fused_residual_layer_fwd.1} parent=5 // pred_fallthru
        _
      %p127 = scmp.lt.s32.totalorder %s12, 4
      // Predicated region
      $region21: #{fused_residual_layer_fwd.1} parent=5 // pred_check
        %p128 = pneg %p127
      $region22: #{fused_residual_layer_fwd.1} parent=5 // pred_check_branch
        %130 = sbr.rel (%p128) target = $region24
      $region23: #{fused_residual_layer_fwd.1} parent=5 // pred_region
        // Predicated region
        $region25: #{fused_residual_layer_fwd.1} parent=23 // pred_check
          %p131 = pneg %p32
        $region26: #{fused_residual_layer_fwd.1} parent=23 // pred_check_branch
          %133 = sbr.rel (%p131) target = $region28
        $region27: #{fused_residual_layer_fwd.1} parent=23 // pred_region
          %s134 = smul.u32 20, %s12
          %p135 = scmp.lt.s32.totalorder %s134, 79
          %s136 = scalar_select %p135, %s134, 79
          %s137 = smul.addr %s136, 8
          %s138 = scalar_lea.vmem %s0, %s137
          %s139 = smul.u32 20, %s12
        $region28: #{fused_residual_layer_fwd.1} parent=23 // pred_fallthru
          _
      $region24: #{fused_residual_layer_fwd.1} parent=5 // pred_fallthru
        _
      %p140 = scmp.le.s32.totalorder 1, %s12
      %p141 = scmp.lt.s32.totalorder %s12, 5
      %p142 = pnand %p140, %p141
      %p143 = pneg %p142
      // Predicated region
      $region29: #{fused_residual_layer_fwd.1} parent=5 // pred_check
        _
      $region30: #{fused_residual_layer_fwd.1} parent=5 // pred_check_branch
        %145 = sbr.rel (%p142) target = $region32
      $region31: #{fused_residual_layer_fwd.1} parent=5 // pred_region
        %s146 = ssub.s32 %s12, 1
        %s147 = smul.u32 20, %s17
        %p148 = scmp.lt.s32.totalorder %s147, 79
        %s149 = scalar_select %p148, %s147, 79
        %s150 = smul.addr %s149, 8
        %s151 = scalar_lea.vmem %s0, %s150
        %p152 = pneg %p38
        %p153 = pneg %p35
        %p154 = pneg %p59
        %p155 = pneg %p56
        %p156 = pneg %p80
        %p157 = pneg %p77
        %p158 = pneg %p106
        %p159 = pneg %p103
        %s160 = sand.u32 %s93, 1
        %s161 = scalar_lea.sflag [#allocation5], %s160
        %s162 = sand.u32 %s93, 1
        %s163 = smul.addr %s162, 128
        %s164 = scalar_lea.vmem [#allocation4], %s163
        %s165 = smul.u32 20, %s17
        %p166 = scmp.lt.s32.totalorder %s165, 79
        %s167 = scalar_select %p166, %s165, 79
        %s168 = smul.addr %s167, 8
        %s169 = scalar_lea.vmem %s0, %s168
        %s170 = smul.u32 20, %s17
        %s171 = smul.u32 4, %s17
        %173 = vst [vmem:[#allocation2] sm:$0xf] 0
        %174 = vst [vmem:[#allocation2 + $0x4] sm:$0xf] 0
        %175 = vst [vmem:[#allocation2 + $0x8] sm:$0xf] 0
        %176 = vst [vmem:[#allocation2 + $0xc] sm:$0xf] 0
        %177 = vst [vmem:[#allocation2 + $0x10] sm:$0xf] 0
        %178 = vst [vmem:[#allocation2 + $0x14] sm:$0xf] 0
        %179 = vst [vmem:[#allocation2 + $0x18] sm:$0xf] 0
        %180 = vst [vmem:[#allocation2 + $0x1c] sm:$0xf] 0
        %181 = vst [vmem:[#allocation2 + $0x20] sm:$0xf] 0
        %182 = vst [vmem:[#allocation2 + $0x24] sm:$0xf] 0
        %183 = vst [vmem:[#allocation2 + $0x28] sm:$0xf] 0
        %184 = vst [vmem:[#allocation2 + $0x2c] sm:$0xf] 0
        %185 = vst [vmem:[#allocation2 + $0x30] sm:$0xf] 0
        %186 = vst [vmem:[#allocation2 + $0x34] sm:$0xf] 0
        %187 = vst [vmem:[#allocation2 + $0x38] sm:$0xf] 0
        %188 = vst [vmem:[#allocation2 + $0x3c] sm:$0xf] 0
        %189 = vst [vmem:[#allocation2 + $0x40] sm:$0xf] 0
        %190 = vst [vmem:[#allocation2 + $0x44] sm:$0xf] 0
        %191 = vst [vmem:[#allocation2 + $0x48] sm:$0xf] 0
        %192 = vst [vmem:[#allocation2 + $0x4c] sm:$0xf] 0
        %193 = vst [vmem:[#allocation2 + $0x50] sm:$0xf] 0
        %194 = vst [vmem:[#allocation3] sm:$0xf] 0
        %195 = vst [vmem:[#allocation3 + $0x4] sm:$0xf] 0
        %196 = vst [vmem:[#allocation3 + $0x8] sm:$0xf] 0
        %197 = vst [vmem:[#allocation3 + $0xc] sm:$0xf] 0
        %198 = vst [vmem:[#allocation3 + $0x10] sm:$0xf] 0
        %199 = vst [vmem:[#allocation3 + $0x14] sm:$0xf] 0
        %200 = vst [vmem:[#allocation3 + $0x18] sm:$0xf] 0
        %201 = vst [vmem:[#allocation3 + $0x1c] sm:$0xf] 0
        %202 = vst [vmem:[#allocation3 + $0x20] sm:$0xf] 0
        %203 = vst [vmem:[#allocation3 + $0x24] sm:$0xf] 0
        %204 = vst [vmem:[#allocation3 + $0x28] sm:$0xf] 0
        %205 = vst [vmem:[#allocation3 + $0x2c] sm:$0xf] 0
        %206 = vst [vmem:[#allocation3 + $0x30] sm:$0xf] 0
        %207 = vst [vmem:[#allocation3 + $0x34] sm:$0xf] 0
        %208 = vst [vmem:[#allocation3 + $0x38] sm:$0xf] 0
        %209 = vst [vmem:[#allocation3 + $0x3c] sm:$0xf] 0
        %210 = vst [vmem:[#allocation3 + $0x40] sm:$0xf] 0
        %211 = vst [vmem:[#allocation3 + $0x44] sm:$0xf] 0
        %212 = vst [vmem:[#allocation3 + $0x48] sm:$0xf] 0
        %213 = vst [vmem:[#allocation3 + $0x4c] sm:$0xf] 0
        %214 = vst [vmem:[#allocation3 + $0x50] sm:$0xf] 0
        %v215 = vld [vmem:[%s169] sm:$0xff]
        %v216 = vld [vmem:[%s169 + $0x8] sm:$0xff]
        %v217 = vld [vmem:[%s169 + $0x10] sm:$0xff]
        %v218 = vld [vmem:[%s169 + $0x18] sm:$0xff]
        %v219 = vld [vmem:[%s169 + $0x20] sm:$0xff]
        %v220 = vld [vmem:[%s169 + $0x28] sm:$0xff]
        %v221 = vld [vmem:[%s169 + $0x30] sm:$0xff]
        %v222 = vld [vmem:[%s169 + $0x38] sm:$0xff]
        %v223 = vld [vmem:[%s169 + $0x40] sm:$0xff]
        %v224 = vld [vmem:[%s169 + $0x48] sm:$0xff]
        %v225 = vld [vmem:[%s169 + $0x50] sm:$0xff]
        %v226 = vld [vmem:[%s169 + $0x58] sm:$0xff]
        %v227 = vld [vmem:[%s169 + $0x60] sm:$0xff]
        %v228 = vld [vmem:[%s169 + $0x68] sm:$0xff]
        %v229 = vld [vmem:[%s169 + $0x70] sm:$0xff]
        %v230 = vld [vmem:[%s169 + $0x78] sm:$0xff]
        %v231 = vld [vmem:[%s169 + $0x80] sm:$0xff]
        %v232 = vld [vmem:[%s169 + $0x88] sm:$0xff]
        %v233 = vld [vmem:[%s169 + $0x90] sm:$0xff]
        %v234 = vld [vmem:[%s169 + $0x98] sm:$0xff]
        %v235 = vpack.c.bf16 %v216, %v215
        %v236 = vpack.c.bf16 %v218, %v217
        %v237 = vpack.c.bf16 %v220, %v219
        %v238 = vpack.c.bf16 %v222, %v221
        %v239 = vpack.c.bf16 %v224, %v223
        %v240 = vpack.c.bf16 %v226, %v225
        %v241 = vpack.c.bf16 %v228, %v227
        %v242 = vpack.c.bf16 %v230, %v229
        %v243 = vpack.c.bf16 %v232, %v231
        %v244 = vpack.c.bf16 %v234, %v233
        %v245 = vld [vmem:[%s1] sm:$0xf]
        %v246 = vld [vmem:[%s1 + $0x4] sm:$0xf]
        %v247 = vld [vmem:[%s1 + $0x8] sm:$0xf]
        %v248 = vld [vmem:[%s1 + $0xc] sm:$0xf]
        %v249 = vld [vmem:[%s1 + $0x10] sm:$0xf]
        %v250 = vld [vmem:[%s1 + $0x14] sm:$0xf]
        %v251 = vld [vmem:[%s1 + $0x18] sm:$0xf]
        %v252 = vld [vmem:[%s1 + $0x1c] sm:$0xf]
        %v253 = vld [vmem:[%s1 + $0x20] sm:$0xf]
        %v254 = vld [vmem:[%s1 + $0x24] sm:$0xf]
        %v255 = vld [vmem:[%s1 + $0x28] sm:$0xf]
        %v256 = vld [vmem:[%s1 + $0x2c] sm:$0xf]
        %v257 = vld [vmem:[%s1 + $0x30] sm:$0xf]
        %v258 = vld [vmem:[%s1 + $0x34] sm:$0xf]
        %v259 = vld [vmem:[%s1 + $0x38] sm:$0xf]
        %v260 = vld [vmem:[%s1 + $0x3c] sm:$0xf]
        %v261 = vld [vmem:[%s1 + $0x40] sm:$0xf]
        %v262 = vld [vmem:[%s1 + $0x44] sm:$0xf]
        %v263 = vld [vmem:[%s1 + $0x48] sm:$0xf]
        %v264 = vld [vmem:[%s1 + $0x4c] sm:$0xf]
        %v265 = vld [vmem:[%s1 + $0x50] sm:$0xf]
        %v266 = vld [vmem:[%s1 + $0x54] sm:$0xf]
        %v267 = vld [vmem:[%s1 + $0x58] sm:$0xf]
        %v268 = vld [vmem:[%s1 + $0x5c] sm:$0xf]
        %v269 = vld [vmem:[%s1 + $0x60] sm:$0xf]
        %v270 = vld [vmem:[%s1 + $0x64] sm:$0xf]
        %v271 = vld [vmem:[%s1 + $0x68] sm:$0xf]
        %v272 = vld [vmem:[%s1 + $0x6c] sm:$0xf]
        %v273 = vld [vmem:[%s1 + $0x70] sm:$0xf]
        %v274 = vld [vmem:[%s1 + $0x74] sm:$0xf]
        %v275 = vld [vmem:[%s1 + $0x78] sm:$0xf]
        %v276 = vld [vmem:[%s1 + $0x7c] sm:$0xf]
        %vm277 = vsmask.f32 7424
        %v279 = vshrl.u32 %v235, 16
        %v281 = vshll.u32 %v235, 16
        %v283 = vrot.slane %v281, 1
        %v284 = vor.u32 %v279, %v283
        %v286 = vshll.u32 %v236, 16
        %v288 = vrot.slane %v286, 1
        %v289 = vsel %vm277, %v284, %v288
        %v290 = vshrl.u32 %v236, 16
        %v292 = vor.u32 %v290, %v288
        %v294 = vshll.u32 %v237, 16
        %v296 = vrot.slane %v294, 1
        %v297 = vsel %vm277, %v292, %v296
        %v298 = vshrl.u32 %v237, 16
        %v300 = vor.u32 %v298, %v296
        %v302 = vshll.u32 %v238, 16
        %v304 = vrot.slane %v302, 1
        %v305 = vsel %vm277, %v300, %v304
        %v306 = vshrl.u32 %v238, 16
        %v308 = vor.u32 %v306, %v304
        %v310 = vshll.u32 %v239, 16
        %v312 = vrot.slane %v310, 1
        %v313 = vsel %vm277, %v308, %v312
        %v314 = vshrl.u32 %v239, 16
        %v316 = vor.u32 %v314, %v312
        %v318 = vshll.u32 %v240, 16
        %v320 = vrot.slane %v318, 1
        %v321 = vsel %vm277, %v316, %v320
        %v322 = vshrl.u32 %v240, 16
        %v324 = vor.u32 %v322, %v320
        %v326 = vshll.u32 %v241, 16
        %v328 = vrot.slane %v326, 1
        %v329 = vsel %vm277, %v324, %v328
        %v330 = vshrl.u32 %v241, 16
        %v332 = vor.u32 %v330, %v328
        %v334 = vshll.u32 %v242, 16
        %v336 = vrot.slane %v334, 1
        %v337 = vsel %vm277, %v332, %v336
        %v338 = vshrl.u32 %v242, 16
        %v340 = vor.u32 %v338, %v336
        %v342 = vshll.u32 %v243, 16
        %v344 = vrot.slane %v342, 1
        %v345 = vsel %vm277, %v340, %v344
        %v346 = vshrl.u32 %v243, 16
        %v348 = vor.u32 %v346, %v344
        %v350 = vshll.u32 %v244, 16
        %v352 = vrot.slane %v350, 1
        %v353 = vsel %vm277, %v348, %v352
        %v354 = vshrl.u32 %v244, 16
        %v356 = vor.u32 %v354, %v352
        %v383 = vunpack.c.l.b16 %v261
        %v384 = vunpack.c.l.b16 %v262
        %v385 = vunpack.c.l.b16 %v263
        %v386 = vunpack.c.l.b16 %v264
        %v387 = vunpack.c.l.b16 %v265
        %v388 = vunpack.c.l.b16 %v266
        %v389 = vunpack.c.l.b16 %v267
        %v390 = vunpack.c.l.b16 %v268
        %v391 = vunpack.c.l.b16 %v269
        %v392 = vunpack.c.l.b16 %v270
        %v393 = vunpack.c.l.b16 %v271
        %v394 = vunpack.c.l.b16 %v272
        %v395 = vunpack.c.l.b16 %v273
        %v396 = vunpack.c.l.b16 %v274
        %v397 = vunpack.c.l.b16 %v275
        %v398 = vunpack.c.l.b16 %v276
        %v399 = vpack.c.b16 %v384, %v383
        %v400 = vpack.c.b16 %v386, %v385
        %v401 = vpack.c.b16 %v388, %v387
        %v402 = vpack.c.b16 %v390, %v389
        %v403 = vpack.c.b16 %v392, %v391
        %v404 = vpack.c.b16 %v394, %v393
        %v405 = vpack.c.b16 %v396, %v395
        %v406 = vpack.c.b16 %v398, %v397
        %415 = vmatprep.subr.bf16.mxu0 0
        %416 = vmatpush1.bf16.msra.mxu0 %v399
        %417 = vmatprep.subr.bf16.mxu0 0
        %418 = vmatpush1.bf16.msra.mxu0 %v400
        %419 = vmatprep.subr.bf16.mxu0 0
        %420 = vmatpush1.bf16.msra.mxu0 %v401
        %421 = vmatprep.subr.bf16.mxu0 0
        %422 = vmatpush1.bf16.msra.mxu0 %v402
        %423 = vmatprep.subr.bf16.mxu0 0
        %424 = vmatpush1.bf16.msra.mxu0 %v403
        %425 = vmatprep.subr.bf16.mxu0 0
        %426 = vmatpush1.bf16.msra.mxu0 %v404
        %427 = vmatprep.subr.bf16.mxu0 0
        %428 = vmatpush1.bf16.msra.mxu0 %v405
        %429 = vmatprep.subr.bf16.mxu0 0
        %430 = vmatpush1.bf16.msra.mxu0 %v406
        %431 = vmatprep.subr.bf16.mxu0 0
        %432 = vmatpush1.bf16.msra.mxu0 0
        %433 = vmatprep.subr.bf16.mxu0 0
        %434 = vmatpush1.bf16.msra.mxu0 0
        %435 = vmatprep.subr.bf16.mxu0 0
        %436 = vmatpush1.bf16.msra.mxu0 0
        %437 = vmatprep.subr.bf16.mxu0 0
        %438 = vmatpush1.bf16.msra.mxu0 0
        %439 = vmatprep.subr.bf16.mxu0 0
        %440 = vmatpush1.bf16.msra.mxu0 0
        %441 = vmatprep.subr.bf16.mxu0 0
        %442 = vmatpush1.bf16.msra.mxu0 0
        %443 = vmatprep.subr.bf16.mxu0 0
        %444 = vmatpush1.bf16.msra.mxu0 0
        %445 = vmatprep.subr.bf16.mxu0 0
        %446 = vmatpush1.bf16.msra.mxu0 0
        %447 = vmatprep.mubr.bf16.mxu0 0
        %448 = vmatmul.mubr.bf16.gmra.mrb[0].mxu0 %v289
        %v449 = vpop.f32.mrb[0].mxu0
        %v450 = vadd.f32 0.0, %v449
        %v451 = vpop.f32.mrb[0].mxu0
        %v452 = vpop.f32.mrb[0].mxu0
        %v453 = vadd.f32 0.0, %v452
        %v454 = vpop.f32.mrb[0].mxu0
        %455 = vmatprep.mubr.bf16.mxu0 0
        %456 = vmatmul.mubr.bf16.gmra.mrb[0].mxu0 %v297
        %v457 = vpop.f32.mrb[0].mxu0
        %v458 = vadd.f32 0.0, %v457
        %v459 = vpop.f32.mrb[0].mxu0
        %v460 = vpop.f32.mrb[0].mxu0
        %v461 = vadd.f32 0.0, %v460
        %v462 = vpop.f32.mrb[0].mxu0
        %463 = vmatprep.mubr.bf16.mxu0 0
        %464 = vmatmul.mubr.bf16.gmra.mrb[0].mxu0 %v305
        %v465 = vpop.f32.mrb[0].mxu0
        %v466 = vpop.f32.mrb[0].mxu0
        %v467 = vpop.f32.mrb[0].mxu0
        %v468 = vadd.f32 0.0, %v467
        %v469 = vpop.f32.mrb[0].mxu0
        %470 = vmatprep.mubr.bf16.mxu0 0
        %471 = vmatmul.mubr.bf16.gmra.mrb[0].mxu0 %v313
        %v472 = vpop.f32.mrb[0].mxu0
        %v473 = vadd.f32 0.0, %v472
        %v474 = vpop.f32.mrb[0].mxu0
        %v475 = vpop.f32.mrb[0].mxu0
        %v476 = vadd.f32 0.0, %v475
        %v477 = vpop.f32.mrb[0].mxu0
        %478 = vmatprep.mubr.bf16.mxu0 0
        %479 = vmatmul.mubr.bf16.gmra.mrb[0].mxu0 %v321
        %v480 = vpop.f32.mrb[0].mxu0
        %v481 = vadd.f32 0.0, %v480
        %v482 = vpop.f32.mrb[0].mxu0
        %v483 = vpop.f32.mrb[0].mxu0
        %v484 = vpop.f32.mrb[0].mxu0
        %485 = vmatprep.mubr.bf16.mxu0 0
        %486 = vmatmul.mubr.bf16.gmra.mrb[0].mxu0 %v329
        %v487 = vpop.f32.mrb[0].mxu0
        %v488 = vadd.f32 0.0, %v487
        %v489 = vpop.f32.mrb[0].mxu0
        %v490 = vpop.f32.mrb[0].mxu0
        %v491 = vadd.f32 0.0, %v490
        %v492 = vpop.f32.mrb[0].mxu0
        %493 = vmatprep.mubr.bf16.mxu0 0
        %494 = vmatmul.mubr.bf16.gmra.mrb[0].mxu0 %v337
        %v495 = vpop.f32.mrb[0].mxu0
        %v496 = vadd.f32 0.0, %v495
        %v497 = vpop.f32.mrb[0].mxu0
        %v498 = vpop.f32.mrb[0].mxu0
        %v499 = vadd.f32 0.0, %v498
        %v500 = vpop.f32.mrb[0].mxu0
        %501 = vmatprep.mubr.bf16.mxu0 0
        %502 = vmatmul.mubr.bf16.gmra.mrb[0].mxu0 %v345
        %v503 = vpop.f32.mrb[0].mxu0
        %v504 = vpop.f32.mrb[0].mxu0
        %v505 = vpop.f32.mrb[0].mxu0
        %v506 = vadd.f32 0.0, %v505
        %v507 = vpop.f32.mrb[0].mxu0
        %508 = vmatprep.mubr.bf16.mxu0 0
        %509 = vmatmul.mubr.bf16.gmra.mrb[0].mxu0 %v353
        %v510 = vpop.f32.mrb[0].mxu0
        %v511 = vadd.f32 0.0, %v510
        %v512 = vpop.f32.mrb[0].mxu0
        %v513 = vpop.f32.mrb[0].mxu0
        %v514 = vadd.f32 0.0, %v513
        %v515 = vpop.f32.mrb[0].mxu0
        %516 = vmatprep.mubr.bf16.mxu0 0
        %517 = vmatmul.mubr.bf16.gmra.mrb[0].mxu0 %v356
        %v518 = vpop.f32.mrb[0].mxu0
        %v519 = vadd.f32 0.0, %v518
        %v520 = vpop.f32.mrb[0].mxu0
        %v521 = vpop.f32.mrb[0].mxu0
        %v522 = vpop.f32.mrb[0].mxu0
        %523 = vdwg.mxu0
        %v540 = vunpack.c.l.b16 %v245
        %v541 = vunpack.c.l.b16 %v246
        %v542 = vunpack.c.l.b16 %v247
        %v543 = vunpack.c.l.b16 %v248
        %v544 = vunpack.c.l.b16 %v249
        %v545 = vunpack.c.l.b16 %v250
        %v546 = vunpack.c.l.b16 %v251
        %v547 = vunpack.c.l.b16 %v252
        %v548 = vunpack.c.l.b16 %v253
        %v549 = vunpack.c.l.b16 %v254
        %v550 = vunpack.c.l.b16 %v255
        %v551 = vunpack.c.l.b16 %v256
        %v552 = vunpack.c.l.b16 %v257
        %v553 = vunpack.c.l.b16 %v258
        %v554 = vunpack.c.l.b16 %v259
        %v555 = vunpack.c.l.b16 %v260
        %v556 = vpack.c.b16 %v541, %v540
        %v557 = vpack.c.b16 %v543, %v542
        %v558 = vpack.c.b16 %v545, %v544
        %v559 = vpack.c.b16 %v547, %v546
        %v560 = vpack.c.b16 %v549, %v548
        %v561 = vpack.c.b16 %v551, %v550
        %v562 = vpack.c.b16 %v553, %v552
        %v563 = vpack.c.b16 %v555, %v554
        %572 = vmatprep.subr.bf16.mxu0 0
        %573 = vmatpush1.bf16.msra.mxu0 %v556
        %574 = vmatprep.subr.bf16.mxu0 0
        %575 = vmatpush1.bf16.msra.mxu0 %v557
        %576 = vmatprep.subr.bf16.mxu0 0
        %577 = vmatpush1.bf16.msra.mxu0 %v558
        %578 = vmatprep.subr.bf16.mxu0 0
        %579 = vmatpush1.bf16.msra.mxu0 %v559
        %580 = vmatprep.subr.bf16.mxu0 0
        %581 = vmatpush1.bf16.msra.mxu0 %v560
        %582 = vmatprep.subr.bf16.mxu0 0
        %583 = vmatpush1.bf16.msra.mxu0 %v561
        %584 = vmatprep.subr.bf16.mxu0 0
        %585 = vmatpush1.bf16.msra.mxu0 %v562
        %586 = vmatprep.subr.bf16.mxu0 0
        %587 = vmatpush1.bf16.msra.mxu0 %v563
        %588 = vmatprep.subr.bf16.mxu0 0
        %589 = vmatpush1.bf16.msra.mxu0 0
        %590 = vmatprep.subr.bf16.mxu0 0
        %591 = vmatpush1.bf16.msra.mxu0 0
        %592 = vmatprep.subr.bf16.mxu0 0
        %593 = vmatpush1.bf16.msra.mxu0 0
        %594 = vmatprep.subr.bf16.mxu0 0
        %595 = vmatpush1.bf16.msra.mxu0 0
        %596 = vmatprep.subr.bf16.mxu0 0
        %597 = vmatpush1.bf16.msra.mxu0 0
        %598 = vmatprep.subr.bf16.mxu0 0
        %599 = vmatpush1.bf16.msra.mxu0 0
        %600 = vmatprep.subr.bf16.mxu0 0
        %601 = vmatpush1.bf16.msra.mxu0 0
        %602 = vmatprep.subr.bf16.mxu0 0
        %603 = vmatpush1.bf16.msra.mxu0 0
        %604 = vmatprep.mubr.bf16.mxu0 0
        %605 = vmatmul.mubr.bf16.gmra.mrb[0].mxu0 %v235
        %v606 = vpop.f32.mrb[0].mxu0
        %v607 = vadd.f32 %v450, %v606
        %v608 = vpop.f32.mrb[0].mxu0
        %v609 = vpop.f32.mrb[0].mxu0
        %v610 = vadd.f32 %v453, %v609
        %v611 = vpop.f32.mrb[0].mxu0
        %612 = vmatprep.mubr.bf16.mxu0 0
        %613 = vmatmul.mubr.bf16.gmra.mrb[0].mxu0 %v236
        %v614 = vpop.f32.mrb[0].mxu0
        %v615 = vadd.f32 %v458, %v614
        %v616 = vpop.f32.mrb[0].mxu0
        %v617 = vpop.f32.mrb[0].mxu0
        %v618 = vadd.f32 %v461, %v617
        %v619 = vpop.f32.mrb[0].mxu0
        %620 = vmatprep.mubr.bf16.mxu0 0
        %621 = vmatmul.mubr.bf16.gmra.mrb[0].mxu0 %v237
        %v622 = vpop.f32.mrb[0].mxu0
        %v623 = vpop.f32.mrb[0].mxu0
        %v624 = vpop.f32.mrb[0].mxu0
        %v625 = vadd.f32 %v468, %v624
        %v626 = vpop.f32.mrb[0].mxu0
        %627 = vmatprep.mubr.bf16.mxu0 0
        %628 = vmatmul.mubr.bf16.gmra.mrb[0].mxu0 %v238
        %v629 = vpop.f32.mrb[0].mxu0
        %v630 = vadd.f32 %v473, %v629
        %v631 = vpop.f32.mrb[0].mxu0
        %v632 = vpop.f32.mrb[0].mxu0
        %v633 = vadd.f32 %v476, %v632
        %v634 = vpop.f32.mrb[0].mxu0
        %635 = vmatprep.mubr.bf16.mxu0 0
        %636 = vmatmul.mubr.bf16.gmra.mrb[0].mxu0 %v239
        %v637 = vpop.f32.mrb[0].mxu0
        %v638 = vadd.f32 %v481, %v637
        %v639 = vpop.f32.mrb[0].mxu0
        %v640 = vpop.f32.mrb[0].mxu0
        %v641 = vpop.f32.mrb[0].mxu0
        %642 = vmatprep.mubr.bf16.mxu0 0
        %643 = vmatmul.mubr.bf16.gmra.mrb[0].mxu0 %v240
        %v644 = vpop.f32.mrb[0].mxu0
        %v645 = vadd.f32 %v488, %v644
        %v646 = vpop.f32.mrb[0].mxu0
        %v647 = vpop.f32.mrb[0].mxu0
        %v648 = vadd.f32 %v491, %v647
        %v649 = vpop.f32.mrb[0].mxu0
        %650 = vmatprep.mubr.bf16.mxu0 0
        %651 = vmatmul.mubr.bf16.gmra.mrb[0].mxu0 %v241
        %v652 = vpop.f32.mrb[0].mxu0
        %v653 = vadd.f32 %v496, %v652
        %v654 = vpop.f32.mrb[0].mxu0
        %v655 = vpop.f32.mrb[0].mxu0
        %v656 = vadd.f32 %v499, %v655
        %v657 = vpop.f32.mrb[0].mxu0
        %658 = vmatprep.mubr.bf16.mxu0 0
        %659 = vmatmul.mubr.bf16.gmra.mrb[0].mxu0 %v242
        %v660 = vpop.f32.mrb[0].mxu0
        %v661 = vpop.f32.mrb[0].mxu0
        %v662 = vpop.f32.mrb[0].mxu0
        %v663 = vadd.f32 %v506, %v662
        %v664 = vpop.f32.mrb[0].mxu0
        %665 = vmatprep.mubr.bf16.mxu0 0
        %666 = vmatmul.mubr.bf16.gmra.mrb[0].mxu0 %v243
        %v667 = vpop.f32.mrb[0].mxu0
        %v668 = vadd.f32 %v511, %v667
        %v669 = vpop.f32.mrb[0].mxu0
        %v670 = vpop.f32.mrb[0].mxu0
        %v671 = vadd.f32 %v514, %v670
        %v672 = vpop.f32.mrb[0].mxu0
        %673 = vmatprep.mubr.bf16.mxu0 0
        %674 = vmatmul.mubr.bf16.gmra.mrb[0].mxu0 %v244
        %v675 = vpop.f32.mrb[0].mxu0
        %v676 = vadd.f32 %v519, %v675
        %v677 = vpop.f32.mrb[0].mxu0
        %v678 = vpop.f32.mrb[0].mxu0
        %v679 = vpop.f32.mrb[0].mxu0
        %680 = vdwg.mxu0
        %v681 = vld [vmem:[%s2] sm:$0x1]
        %v682 = vld [vmem:[%s2 + $0x1] sm:$0x1]
        %v683 = vlaneseq
        %v684 = vshrl.u32 %v683, 7
        %v685 = vsub.s32 0, %v684
        %v686 = vrot.slane %v681, %v685
        %v687 = vmul.f32 %v607, %v686
        %v688 = vmul.f32 %v610, %v686
        %v689 = vmul.f32 %v615, %v686
        %v690 = vmul.f32 %v618, %v686
        %v691 = vmul.f32 %v625, %v686
        %v692 = vmul.f32 %v630, %v686
        %v693 = vmul.f32 %v633, %v686
        %v694 = vmul.f32 %v638, %v686
        %v695 = vmul.f32 %v645, %v686
        %v696 = vmul.f32 %v648, %v686
        %v697 = vmul.f32 %v653, %v686
        %v698 = vmul.f32 %v656, %v686
        %v699 = vmul.f32 %v663, %v686
        %v700 = vmul.f32 %v668, %v686
        %v701 = vmul.f32 %v671, %v686
        %v702 = vmul.f32 %v676, %v686
        %v703 = vlaneseq
        %v704 = vshrl.u32 %v703, 7
        %v705 = vsub.s32 0, %v704
        %v706 = vrot.slane %v682, %v705
        %v707 = vadd.f32 %v687, %v706
        %v708 = vadd.f32 %v688, %v706
        %v709 = vadd.f32 %v689, %v706
        %v710 = vadd.f32 %v690, %v706
        %v711 = vadd.f32 %v691, %v706
        %v712 = vadd.f32 %v692, %v706
        %v713 = vadd.f32 %v693, %v706
        %v714 = vadd.f32 %v694, %v706
        %v715 = vadd.f32 %v695, %v706
        %v716 = vadd.f32 %v696, %v706
        %v717 = vadd.f32 %v697, %v706
        %v718 = vadd.f32 %v698, %v706
        %v719 = vadd.f32 %v699, %v706
        %v720 = vadd.f32 %v700, %v706
        %v721 = vadd.f32 %v701, %v706
        %v722 = vadd.f32 %v702, %v706
        %v723 = vmax.f32 %v707, 0.0
        %v724 = vmax.f32 %v708, 0.0
        %v725 = vmax.f32 %v709, 0.0
        %v726 = vmax.f32 %v710, 0.0
        %v727 = vmax.f32 %v711, 0.0
        %v728 = vmax.f32 %v712, 0.0
        %v729 = vmax.f32 %v713, 0.0
        %v730 = vmax.f32 %v714, 0.0
        %v731 = vmax.f32 %v715, 0.0
        %v732 = vmax.f32 %v716, 0.0
        %v733 = vmax.f32 %v717, 0.0
        %v734 = vmax.f32 %v718, 0.0
        %v735 = vmax.f32 %v719, 0.0
        %v736 = vmax.f32 %v720, 0.0
        %v737 = vmax.f32 %v721, 0.0
        %v738 = vmax.f32 %v722, 0.0
        %v739 = vld [vmem:[%s1 + $0x80] sm:$0xf]
        %v740 = vld [vmem:[%s1 + $0x84] sm:$0xf]
        %v741 = vld [vmem:[%s1 + $0x88] sm:$0xf]
        %v742 = vld [vmem:[%s1 + $0x8c] sm:$0xf]
        %v743 = vld [vmem:[%s1 + $0x90] sm:$0xf]
        %v744 = vld [vmem:[%s1 + $0x94] sm:$0xf]
        %v745 = vld [vmem:[%s1 + $0x98] sm:$0xf]
        %v746 = vld [vmem:[%s1 + $0x9c] sm:$0xf]
        %v747 = vld [vmem:[%s1 + $0xa0] sm:$0xf]
        %v748 = vld [vmem:[%s1 + $0xa4] sm:$0xf]
        %v749 = vld [vmem:[%s1 + $0xa8] sm:$0xf]
        %v750 = vld [vmem:[%s1 + $0xac] sm:$0xf]
        %v751 = vld [vmem:[%s1 + $0xb0] sm:$0xf]
        %v752 = vld [vmem:[%s1 + $0xb4] sm:$0xf]
        %v753 = vld [vmem:[%s1 + $0xb8] sm:$0xf]
        %v754 = vld [vmem:[%s1 + $0xbc] sm:$0xf]
        %v755 = vld [vmem:[%s2 + $0x2] sm:$0x1]
        %v756 = vld [vmem:[%s2 + $0x3] sm:$0x1]
        %v773 = vunpack.c.l.b16 %v739
        %v774 = vunpack.c.l.b16 %v740
        %v775 = vunpack.c.l.b16 %v741
        %v776 = vunpack.c.l.b16 %v742
        %v777 = vunpack.c.l.b16 %v743
        %v778 = vunpack.c.l.b16 %v744
        %v779 = vunpack.c.l.b16 %v745
        %v780 = vunpack.c.l.b16 %v746
        %v781 = vunpack.c.l.b16 %v747
        %v782 = vunpack.c.l.b16 %v748
        %v783 = vunpack.c.l.b16 %v749
        %v784 = vunpack.c.l.b16 %v750
        %v785 = vunpack.c.l.b16 %v751
        %v786 = vunpack.c.l.b16 %v752
        %v787 = vunpack.c.l.b16 %v753
        %v788 = vunpack.c.l.b16 %v754
        %v789 = vpack.c.b16 %v774, %v773
        %v790 = vpack.c.b16 %v776, %v775
        %v791 = vpack.c.b16 %v778, %v777
        %v792 = vpack.c.b16 %v780, %v779
        %v793 = vpack.c.b16 %v782, %v781
        %v794 = vpack.c.b16 %v784, %v783
        %v795 = vpack.c.b16 %v786, %v785
        %v796 = vpack.c.b16 %v788, %v787
        %805 = vmatprep.subr.bf16.mxu0 0
        %806 = vmatpush1.bf16.msra.mxu0 %v789
        %807 = vmatprep.subr.bf16.mxu0 0
        %808 = vmatpush1.bf16.msra.mxu0 %v790
        %809 = vmatprep.subr.bf16.mxu0 0
        %810 = vmatpush1.bf16.msra.mxu0 %v791
        %811 = vmatprep.subr.bf16.mxu0 0
        %812 = vmatpush1.bf16.msra.mxu0 %v792
        %813 = vmatprep.subr.bf16.mxu0 0
        %814 = vmatpush1.bf16.msra.mxu0 %v793
        %815 = vmatprep.subr.bf16.mxu0 0
        %816 = vmatpush1.bf16.msra.mxu0 %v794
        %817 = vmatprep.subr.bf16.mxu0 0
        %818 = vmatpush1.bf16.msra.mxu0 %v795
        %819 = vmatprep.subr.bf16.mxu0 0
        %820 = vmatpush1.bf16.msra.mxu0 %v796
        %821 = vmatprep.subr.bf16.mxu0 0
        %822 = vmatpush1.bf16.msra.mxu0 0
        %823 = vmatprep.subr.bf16.mxu0 0
        %824 = vmatpush1.bf16.msra.mxu0 0
        %825 = vmatprep.subr.bf16.mxu0 0
        %826 = vmatpush1.bf16.msra.mxu0 0
        %827 = vmatprep.subr.bf16.mxu0 0
        %828 = vmatpush1.bf16.msra.mxu0 0
        %829 = vmatprep.subr.bf16.mxu0 0
        %830 = vmatpush1.bf16.msra.mxu0 0
        %831 = vmatprep.subr.bf16.mxu0 0
        %832 = vmatpush1.bf16.msra.mxu0 0
        %833 = vmatprep.subr.bf16.mxu0 0
        %834 = vmatpush1.bf16.msra.mxu0 0
        %835 = vmatprep.subr.bf16.mxu0 0
        %836 = vmatpush1.bf16.msra.mxu0 0
        %837 = vmatprep.mubr.bf16.mxu0 0
        %838 = vmatmul.mubr.bf16.gmra.mrb[0].mxu0 %v235
        %v839 = vpop.f32.mrb[0].mxu0
        %v840 = vadd.f32 0.0, %v839
        %v841 = vpop.f32.mrb[0].mxu0
        %v842 = vpop.f32.mrb[0].mxu0
        %v843 = vadd.f32 0.0, %v842
        %v844 = vpop.f32.mrb[0].mxu0
        %845 = vmatprep.mubr.bf16.mxu0 0
        %846 = vmatmul.mubr.bf16.gmra.mrb[0].mxu0 %v236
        %v847 = vpop.f32.mrb[0].mxu0
        %v848 = vadd.f32 0.0, %v847
        %v849 = vpop.f32.mrb[0].mxu0
        %v850 = vpop.f32.mrb[0].mxu0
        %v851 = vadd.f32 0.0, %v850
        %v852 = vpop.f32.mrb[0].mxu0
        %853 = vmatprep.mubr.bf16.mxu0 0
        %854 = vmatmul.mubr.bf16.gmra.mrb[0].mxu0 %v237
        %v855 = vpop.f32.mrb[0].mxu0
        %v856 = vpop.f32.mrb[0].mxu0
        %v857 = vpop.f32.mrb[0].mxu0
        %v858 = vadd.f32 0.0, %v857
        %v859 = vpop.f32.mrb[0].mxu0
        %860 = vmatprep.mubr.bf16.mxu0 0
        %861 = vmatmul.mubr.bf16.gmra.mrb[0].mxu0 %v238
        %v862 = vpop.f32.mrb[0].mxu0
        %v863 = vadd.f32 0.0, %v862
        %v864 = vpop.f32.mrb[0].mxu0
        %v865 = vpop.f32.mrb[0].mxu0
        %v866 = vadd.f32 0.0, %v865
        %v867 = vpop.f32.mrb[0].mxu0
        %868 = vmatprep.mubr.bf16.mxu0 0
        %869 = vmatmul.mubr.bf16.gmra.mrb[0].mxu0 %v239
        %v870 = vpop.f32.mrb[0].mxu0
        %v871 = vadd.f32 0.0, %v870
        %v872 = vpop.f32.mrb[0].mxu0
        %v873 = vpop.f32.mrb[0].mxu0
        %v874 = vpop.f32.mrb[0].mxu0
        %875 = vmatprep.mubr.bf16.mxu0 0
        %876 = vmatmul.mubr.bf16.gmra.mrb[0].mxu0 %v240
        %v877 = vpop.f32.mrb[0].mxu0
        %v878 = vadd.f32 0.0, %v877
        %v879 = vpop.f32.mrb[0].mxu0
        %v880 = vpop.f32.mrb[0].mxu0
        %v881 = vadd.f32 0.0, %v880
        %v882 = vpop.f32.mrb[0].mxu0
        %883 = vmatprep.mubr.bf16.mxu0 0
        %884 = vmatmul.mubr.bf16.gmra.mrb[0].mxu0 %v241
        %v885 = vpop.f32.mrb[0].mxu0
        %v886 = vadd.f32 0.0, %v885
        %v887 = vpop.f32.mrb[0].mxu0
        %v888 = vpop.f32.mrb[0].mxu0
        %v889 = vadd.f32 0.0, %v888
        %v890 = vpop.f32.mrb[0].mxu0
        %891 = vmatprep.mubr.bf16.mxu0 0
        %892 = vmatmul.mubr.bf16.gmra.mrb[0].mxu0 %v242
        %v893 = vpop.f32.mrb[0].mxu0
        %v894 = vpop.f32.mrb[0].mxu0
        %v895 = vpop.f32.mrb[0].mxu0
        %v896 = vadd.f32 0.0, %v895
        %v897 = vpop.f32.mrb[0].mxu0
        %898 = vmatprep.mubr.bf16.mxu0 0
        %899 = vmatmul.mubr.bf16.gmra.mrb[0].mxu0 %v243
        %v900 = vpop.f32.mrb[0].mxu0
        %v901 = vadd.f32 0.0, %v900
        %v902 = vpop.f32.mrb[0].mxu0
        %v903 = vpop.f32.mrb[0].mxu0
        %v904 = vadd.f32 0.0, %v903
        %v905 = vpop.f32.mrb[0].mxu0
        %906 = vmatprep.mubr.bf16.mxu0 0
        %907 = vmatmul.mubr.bf16.gmra.mrb[0].mxu0 %v244
        %v908 = vpop.f32.mrb[0].mxu0
        %v909 = vadd.f32 0.0, %v908
        %v910 = vpop.f32.mrb[0].mxu0
        %v911 = vpop.f32.mrb[0].mxu0
        %v912 = vpop.f32.mrb[0].mxu0
        %913 = vdwg.mxu0
        %v914 = vlaneseq
        %v915 = vshrl.u32 %v914, 7
        %v916 = vsub.s32 0, %v915
        %v917 = vrot.slane %v755, %v916
        %v918 = vmul.f32 %v840, %v917
        %v919 = vmul.f32 %v843, %v917
        %v920 = vmul.f32 %v848, %v917
        %v921 = vmul.f32 %v851, %v917
        %v922 = vmul.f32 %v858, %v917
        %v923 = vmul.f32 %v863, %v917
        %v924 = vmul.f32 %v866, %v917
        %v925 = vmul.f32 %v871, %v917
        %v926 = vmul.f32 %v878, %v917
        %v927 = vmul.f32 %v881, %v917
        %v928 = vmul.f32 %v886, %v917
        %v929 = vmul.f32 %v889, %v917
        %v930 = vmul.f32 %v896, %v917
        %v931 = vmul.f32 %v901, %v917
        %v932 = vmul.f32 %v904, %v917
        %v933 = vmul.f32 %v909, %v917
        %v934 = vlaneseq
        %v935 = vshrl.u32 %v934, 7
        %v936 = vsub.s32 0, %v935
        %v937 = vrot.slane %v756, %v936
        %v938 = vadd.f32 %v918, %v937
        %v939 = vadd.f32 %v919, %v937
        %v940 = vadd.f32 %v920, %v937
        %v941 = vadd.f32 %v921, %v937
        %v942 = vadd.f32 %v922, %v937
        %v943 = vadd.f32 %v923, %v937
        %v944 = vadd.f32 %v924, %v937
        %v945 = vadd.f32 %v925, %v937
        %v946 = vadd.f32 %v926, %v937
        %v947 = vadd.f32 %v927, %v937
        %v948 = vadd.f32 %v928, %v937
        %v949 = vadd.f32 %v929, %v937
        %v950 = vadd.f32 %v930, %v937
        %v951 = vadd.f32 %v931, %v937
        %v952 = vadd.f32 %v932, %v937
        %v953 = vadd.f32 %v933, %v937
        %v954 = vpack.c.bf16 %v724, %v723
        %v955 = vpack.c.bf16 %v726, %v725
        %v958 = vunpack.c.l.b16 %v954
        %v959 = vunpack.c.h.b16 %v954
        %v960 = vunpack.c.l.b16 %v955
        %v961 = vunpack.c.h.b16 %v955
        %v962 = vpack.c.b16 %v958, %v958
        %v963 = vpack.c.b16 %v959, %v959
        %v964 = vpack.c.b16 %v960, %v960
        %v965 = vpack.c.b16 %v961, %v961
        %970 = vst [vmem:[#allocation2 + $0x4] sm:$0xf] %v962
        %971 = vst [vmem:[#allocation2 + $0x8] sm:$0xf] %v963
        %972 = vst [vmem:[#allocation2 + $0xc] sm:$0xf] %v964
        %973 = vst [vmem:[#allocation2 + $0x10] sm:$0xf] %v965
        %v974 = vpack.c.bf16 %v728, %v727
        %v975 = vpack.c.bf16 %v730, %v729
        %v978 = vunpack.c.l.b16 %v974
        %v979 = vunpack.c.h.b16 %v974
        %v980 = vunpack.c.l.b16 %v975
        %v981 = vunpack.c.h.b16 %v975
        %v982 = vpack.c.b16 %v978, %v978
        %v983 = vpack.c.b16 %v979, %v979
        %v984 = vpack.c.b16 %v980, %v980
        %v985 = vpack.c.b16 %v981, %v981
        %990 = vst [vmem:[#allocation2 + $0x18] sm:$0xf] %v982
        %991 = vst [vmem:[#allocation2 + $0x1c] sm:$0xf] %v983
        %992 = vst [vmem:[#allocation2 + $0x20] sm:$0xf] %v984
        %993 = vst [vmem:[#allocation2 + $0x24] sm:$0xf] %v985
        %v994 = vpack.c.bf16 %v732, %v731
        %v995 = vpack.c.bf16 %v734, %v733
        %v998 = vunpack.c.l.b16 %v994
        %v999 = vunpack.c.h.b16 %v994
        %v1000 = vunpack.c.l.b16 %v995
        %v1001 = vunpack.c.h.b16 %v995
        %v1002 = vpack.c.b16 %v998, %v998
        %v1003 = vpack.c.b16 %v999, %v999
        %v1004 = vpack.c.b16 %v1000, %v1000
        %v1005 = vpack.c.b16 %v1001, %v1001
        %1010 = vst [vmem:[#allocation2 + $0x2c] sm:$0xf] %v1002
        %1011 = vst [vmem:[#allocation2 + $0x30] sm:$0xf] %v1003
        %1012 = vst [vmem:[#allocation2 + $0x34] sm:$0xf] %v1004
        %1013 = vst [vmem:[#allocation2 + $0x38] sm:$0xf] %v1005
        %v1014 = vpack.c.bf16 %v736, %v735
        %v1015 = vpack.c.bf16 %v738, %v737
        %v1018 = vunpack.c.l.b16 %v1014
        %v1019 = vunpack.c.h.b16 %v1014
        %v1020 = vunpack.c.l.b16 %v1015
        %v1021 = vunpack.c.h.b16 %v1015
        %v1022 = vpack.c.b16 %v1018, %v1018
        %v1023 = vpack.c.b16 %v1019, %v1019
        %v1024 = vpack.c.b16 %v1020, %v1020
        %v1025 = vpack.c.b16 %v1021, %v1021
        %1030 = vst [vmem:[#allocation2 + $0x40] sm:$0xf] %v1022
        %1031 = vst [vmem:[#allocation2 + $0x44] sm:$0xf] %v1023
        %1032 = vst [vmem:[#allocation2 + $0x48] sm:$0xf] %v1024
        %1033 = vst [vmem:[#allocation2 + $0x4c] sm:$0xf] %v1025
        %v1034 = vld [vmem:[#allocation2] sm:$0x8]
        %v1035 = vld [vmem:[#allocation2 + $0x4] sm:$0xf]
        %v1036 = vld [vmem:[#allocation2 + $0x8] sm:$0xf]
        %v1037 = vld [vmem:[#allocation2 + $0xc] sm:$0xf]
        %v1038 = vld [vmem:[#allocation2 + $0x10] sm:$0xf]
        %v1039 = vld [vmem:[#allocation2 + $0x14] sm:$0xf]
        %v1040 = vld [vmem:[#allocation2 + $0x18] sm:$0xf]
        %v1041 = vld [vmem:[#allocation2 + $0x1c] sm:$0xf]
        %v1042 = vld [vmem:[#allocation2 + $0x20] sm:$0xf]
        %v1043 = vld [vmem:[#allocation2 + $0x24] sm:$0xf]
        %v1044 = vld [vmem:[#allocation2 + $0x28] sm:$0xf]
        %v1045 = vld [vmem:[#allocation2 + $0x2c] sm:$0xf]
        %v1046 = vld [vmem:[#allocation2 + $0x30] sm:$0xf]
        %v1047 = vld [vmem:[#allocation2 + $0x34] sm:$0xf]
        %v1048 = vld [vmem:[#allocation2 + $0x38] sm:$0xf]
        %v1049 = vld [vmem:[#allocation2 + $0x3c] sm:$0xf]
        %v1050 = vld [vmem:[#allocation2 + $0x40] sm:$0xf]
        %v1051 = vld [vmem:[#allocation2 + $0x44] sm:$0xf]
        %v1052 = vld [vmem:[#allocation2 + $0x48] sm:$0xf]
        %v1053 = vld [vmem:[#allocation2 + $0x4c] sm:$0xf]
        %v1054 = vld [vmem:[%s1 + $0xc0] sm:$0xf]
        %v1055 = vld [vmem:[%s1 + $0xc4] sm:$0xf]
        %v1056 = vld [vmem:[%s1 + $0xc8] sm:$0xf]
        %v1057 = vld [vmem:[%s1 + $0xcc] sm:$0xf]
        %v1058 = vld [vmem:[%s1 + $0xd0] sm:$0xf]
        %v1059 = vld [vmem:[%s1 + $0xd4] sm:$0xf]
        %v1060 = vld [vmem:[%s1 + $0xd8] sm:$0xf]
        %v1061 = vld [vmem:[%s1 + $0xdc] sm:$0xf]
        %v1062 = vld [vmem:[%s1 + $0xe0] sm:$0xf]
        %v1063 = vld [vmem:[%s1 + $0xe4] sm:$0xf]
        %v1064 = vld [vmem:[%s1 + $0xe8] sm:$0xf]
        %v1065 = vld [vmem:[%s1 + $0xec] sm:$0xf]
        %v1066 = vld [vmem:[%s1 + $0xf0] sm:$0xf]
        %v1067 = vld [vmem:[%s1 + $0xf4] sm:$0xf]
        %v1068 = vld [vmem:[%s1 + $0xf8] sm:$0xf]
        %v1069 = vld [vmem:[%s1 + $0xfc] sm:$0xf]
        %v1070 = vld [vmem:[%s1 + $0x100] sm:$0xf]
        %v1071 = vld [vmem:[%s1 + $0x104] sm:$0xf]
        %v1072 = vld [vmem:[%s1 + $0x108] sm:$0xf]
        %v1073 = vld [vmem:[%s1 + $0x10c] sm:$0xf]
        %v1074 = vld [vmem:[%s1 + $0x110] sm:$0xf]
        %v1075 = vld [vmem:[%s1 + $0x114] sm:$0xf]
        %v1076 = vld [vmem:[%s1 + $0x118] sm:$0xf]
        %v1077 = vld [vmem:[%s1 + $0x11c] sm:$0xf]
        %v1078 = vld [vmem:[%s1 + $0x120] sm:$0xf]
        %v1079 = vld [vmem:[%s1 + $0x124] sm:$0xf]
        %v1080 = vld [vmem:[%s1 + $0x128] sm:$0xf]
        %v1081 = vld [vmem:[%s1 + $0x12c] sm:$0xf]
        %v1082 = vld [vmem:[%s1 + $0x130] sm:$0xf]
        %v1083 = vld [vmem:[%s1 + $0x134] sm:$0xf]
        %v1084 = vld [vmem:[%s1 + $0x138] sm:$0xf]
        %v1085 = vld [vmem:[%s1 + $0x13c] sm:$0xf]
        %v1105 = vunpack.c.l.b16 %v1035
        %v1106 = vunpack.c.l.b16 %v1036
        %v1107 = vunpack.c.l.b16 %v1037
        %v1108 = vunpack.c.l.b16 %v1038
        %v1109 = vunpack.c.l.b16 %v1039
        %v1110 = vunpack.c.l.b16 %v1040
        %v1111 = vunpack.c.l.b16 %v1041
        %v1112 = vunpack.c.l.b16 %v1042
        %v1113 = vunpack.c.l.b16 %v1043
        %v1114 = vunpack.c.l.b16 %v1044
        %v1115 = vunpack.c.l.b16 %v1045
        %v1116 = vunpack.c.l.b16 %v1046
        %v1117 = vunpack.c.l.b16 %v1047
        %v1118 = vunpack.c.l.b16 %v1048
        %v1119 = vunpack.c.l.b16 %v1049
        %v1120 = vunpack.c.l.b16 %v1050
        %v1121 = vunpack.c.l.b16 %v1051
        %v1122 = vunpack.c.l.b16 %v1052
        %v1123 = vunpack.c.l.b16 %v1053
        %v1124 = vpack.c.b16 %v1106, %v1105
        %v1125 = vpack.c.b16 %v1108, %v1107
        %v1126 = vpack.c.b16 %v1110, %v1109
        %v1127 = vpack.c.b16 %v1112, %v1111
        %v1128 = vpack.c.b16 %v1114, %v1113
        %v1129 = vpack.c.b16 %v1116, %v1115
        %v1130 = vpack.c.b16 %v1118, %v1117
        %v1131 = vpack.c.b16 %v1120, %v1119
        %v1132 = vpack.c.b16 %v1122, %v1121
        %v1133 = vpack.c.b16 %v1123, %v1123
        %v1160 = vunpack.c.l.b16 %v1070
        %v1161 = vunpack.c.l.b16 %v1071
        %v1162 = vunpack.c.l.b16 %v1072
        %v1163 = vunpack.c.l.b16 %v1073
        %v1164 = vunpack.c.l.b16 %v1074
        %v1165 = vunpack.c.l.b16 %v1075
        %v1166 = vunpack.c.l.b16 %v1076
        %v1167 = vunpack.c.l.b16 %v1077
        %v1168 = vunpack.c.l.b16 %v1078
        %v1169 = vunpack.c.l.b16 %v1079
        %v1170 = vunpack.c.l.b16 %v1080
        %v1171 = vunpack.c.l.b16 %v1081
        %v1172 = vunpack.c.l.b16 %v1082
        %v1173 = vunpack.c.l.b16 %v1083
        %v1174 = vunpack.c.l.b16 %v1084
        %v1175 = vunpack.c.l.b16 %v1085
        %v1176 = vpack.c.b16 %v1161, %v1160
        %v1177 = vpack.c.b16 %v1163, %v1162
        %v1178 = vpack.c.b16 %v1165, %v1164
        %v1179 = vpack.c.b16 %v1167, %v1166
        %v1180 = vpack.c.b16 %v1169, %v1168
        %v1181 = vpack.c.b16 %v1171, %v1170
        %v1182 = vpack.c.b16 %v1173, %v1172
        %v1183 = vpack.c.b16 %v1175, %v1174
        %1192 = vmatprep.subr.bf16.mxu0 0
        %1193 = vmatpush1.bf16.msra.mxu0 %v1176
        %1194 = vmatprep.subr.bf16.mxu0 0
        %1195 = vmatpush1.bf16.msra.mxu0 %v1177
        %1196 = vmatprep.subr.bf16.mxu0 0
        %1197 = vmatpush1.bf16.msra.mxu0 %v1178
        %1198 = vmatprep.subr.bf16.mxu0 0
        %1199 = vmatpush1.bf16.msra.mxu0 %v1179
        %1200 = vmatprep.subr.bf16.mxu0 0
        %1201 = vmatpush1.bf16.msra.mxu0 %v1180
        %1202 = vmatprep.subr.bf16.mxu0 0
        %1203 = vmatpush1.bf16.msra.mxu0 %v1181
        %1204 = vmatprep.subr.bf16.mxu0 0
        %1205 = vmatpush1.bf16.msra.mxu0 %v1182
        %1206 = vmatprep.subr.bf16.mxu0 0
        %1207 = vmatpush1.bf16.msra.mxu0 %v1183
        %1208 = vmatprep.subr.bf16.mxu0 0
        %1209 = vmatpush1.bf16.msra.mxu0 0
        %1210 = vmatprep.subr.bf16.mxu0 0
        %1211 = vmatpush1.bf16.msra.mxu0 0
        %1212 = vmatprep.subr.bf16.mxu0 0
        %1213 = vmatpush1.bf16.msra.mxu0 0
        %1214 = vmatprep.subr.bf16.mxu0 0
        %1215 = vmatpush1.bf16.msra.mxu0 0
        %1216 = vmatprep.subr.bf16.mxu0 0
        %1217 = vmatpush1.bf16.msra.mxu0 0
        %1218 = vmatprep.subr.bf16.mxu0 0
        %1219 = vmatpush1.bf16.msra.mxu0 0
        %1220 = vmatprep.subr.bf16.mxu0 0
        %1221 = vmatpush1.bf16.msra.mxu0 0
        %1222 = vmatprep.subr.bf16.mxu0 0
        %1223 = vmatpush1.bf16.msra.mxu0 0
        %1224 = vmatprep.mubr.bf16.mxu0 0
        %1225 = vmatmul.mubr.bf16.gmra.mrb[0].mxu0 %v1124
        %v1226 = vpop.f32.mrb[0].mxu0
        %v1227 = vadd.f32 0.0, %v1226
        %v1228 = vpop.f32.mrb[0].mxu0
        %v1229 = vpop.f32.mrb[0].mxu0
        %v1230 = vadd.f32 0.0, %v1229
        %v1231 = vpop.f32.mrb[0].mxu0
        %1232 = vmatprep.mubr.bf16.mxu0 0
        %1233 = vmatmul.mubr.bf16.gmra.mrb[0].mxu0 %v1125
        %v1234 = vpop.f32.mrb[0].mxu0
        %v1235 = vadd.f32 0.0, %v1234
        %v1236 = vpop.f32.mrb[0].mxu0
        %v1237 = vpop.f32.mrb[0].mxu0
        %v1238 = vadd.f32 0.0, %v1237
        %v1239 = vpop.f32.mrb[0].mxu0
        %1240 = vmatprep.mubr.bf16.mxu0 0
        %1241 = vmatmul.mubr.bf16.gmra.mrb[0].mxu0 %v1126
        %v1242 = vpop.f32.mrb[0].mxu0
        %v1243 = vpop.f32.mrb[0].mxu0
        %v1244 = vpop.f32.mrb[0].mxu0
        %v1245 = vadd.f32 0.0, %v1244
        %v1246 = vpop.f32.mrb[0].mxu0
        %1247 = vmatprep.mubr.bf16.mxu0 0
        %1248 = vmatmul.mubr.bf16.gmra.mrb[0].mxu0 %v1127
        %v1249 = vpop.f32.mrb[0].mxu0
        %v1250 = vadd.f32 0.0, %v1249
        %v1251 = vpop.f32.mrb[0].mxu0
        %v1252 = vpop.f32.mrb[0].mxu0
        %v1253 = vadd.f32 0.0, %v1252
        %v1254 = vpop.f32.mrb[0].mxu0
        %1255 = vmatprep.mubr.bf16.mxu0 0
        %1256 = vmatmul.mubr.bf16.gmra.mrb[0].mxu0 %v1128
        %v1257 = vpop.f32.mrb[0].mxu0
        %v1258 = vadd.f32 0.0, %v1257
        %v1259 = vpop.f32.mrb[0].mxu0
        %v1260 = vpop.f32.mrb[0].mxu0
        %v1261 = vpop.f32.mrb[0].mxu0
        %1262 = vmatprep.mubr.bf16.mxu0 0
        %1263 = vmatmul.mubr.bf16.gmra.mrb[0].mxu0 %v1129
        %v1264 = vpop.f32.mrb[0].mxu0
        %v1265 = vadd.f32 0.0, %v1264
        %v1266 = vpop.f32.mrb[0].mxu0
        %v1267 = vpop.f32.mrb[0].mxu0
        %v1268 = vadd.f32 0.0, %v1267
        %v1269 = vpop.f32.mrb[0].mxu0
        %1270 = vmatprep.mubr.bf16.mxu0 0
        %1271 = vmatmul.mubr.bf16.gmra.mrb[0].mxu0 %v1130
        %v1272 = vpop.f32.mrb[0].mxu0
        %v1273 = vadd.f32 0.0, %v1272
        %v1274 = vpop.f32.mrb[0].mxu0
        %v1275 = vpop.f32.mrb[0].mxu0
        %v1276 = vadd.f32 0.0, %v1275
        %v1277 = vpop.f32.mrb[0].mxu0
        %1278 = vmatprep.mubr.bf16.mxu0 0
        %1279 = vmatmul.mubr.bf16.gmra.mrb[0].mxu0 %v1131
        %v1280 = vpop.f32.mrb[0].mxu0
        %v1281 = vpop.f32.mrb[0].mxu0
        %v1282 = vpop.f32.mrb[0].mxu0
        %v1283 = vadd.f32 0.0, %v1282
        %v1284 = vpop.f32.mrb[0].mxu0
        %1285 = vmatprep.mubr.bf16.mxu0 0
        %1286 = vmatmul.mubr.bf16.gmra.mrb[0].mxu0 %v1132
        %v1287 = vpop.f32.mrb[0].mxu0
        %v1288 = vadd.f32 0.0, %v1287
        %v1289 = vpop.f32.mrb[0].mxu0
        %v1290 = vpop.f32.mrb[0].mxu0
        %v1291 = vadd.f32 0.0, %v1290
        %v1292 = vpop.f32.mrb[0].mxu0
        %1293 = vmatprep.mubr.bf16.mxu0 0
        %1294 = vmatmul.mubr.bf16.gmra.mrb[0].mxu0 %v1133
        %v1295 = vpop.f32.mrb[0].mxu0
        %v1296 = vadd.f32 0.0, %v1295
        %v1297 = vpop.f32.mrb[0].mxu0
        %v1298 = vpop.f32.mrb[0].mxu0
        %v1299 = vpop.f32.mrb[0].mxu0
        %1300 = vdwg.mxu0
        %v1302 = vunpack.c.l.b16 %v1034
        %v1303 = vpack.c.b16 %v1105, %v1302
        %v1304 = vpack.c.b16 %v1107, %v1106
        %v1305 = vpack.c.b16 %v1109, %v1108
        %v1306 = vpack.c.b16 %v1111, %v1110
        %v1307 = vpack.c.b16 %v1113, %v1112
        %v1308 = vpack.c.b16 %v1115, %v1114
        %v1309 = vpack.c.b16 %v1117, %v1116
        %v1310 = vpack.c.b16 %v1119, %v1118
        %v1311 = vpack.c.b16 %v1121, %v1120
        %v1312 = vpack.c.b16 %v1123, %v1122
        %vm1313 = vsmask.f32 4352
        %v1315 = vshrl.u32 %v1303, 16
        %v1317 = vrot.slane %v1315, 3
        %v1318 = vshll.u32 %v1303, 16
        %v1320 = vrot.slane %v1318, 4
        %v1321 = vor.u32 %v1317, %v1320
        %v1323 = vshrl.u32 %v1304, 16
        %v1325 = vrot.slane %v1323, 3
        %v1326 = vshll.u32 %v1304, 16
        %v1328 = vrot.slane %v1326, 4
        %v1329 = vor.u32 %v1325, %v1328
        %v1330 = vsel %vm1313, %v1321, %v1329
        %v1332 = vshrl.u32 %v1305, 16
        %v1334 = vrot.slane %v1332, 3
        %v1335 = vshll.u32 %v1305, 16
        %v1337 = vrot.slane %v1335, 4
        %v1338 = vor.u32 %v1334, %v1337
        %v1339 = vsel %vm1313, %v1329, %v1338
        %v1341 = vshrl.u32 %v1306, 16
        %v1343 = vrot.slane %v1341, 3
        %v1344 = vshll.u32 %v1306, 16
        %v1346 = vrot.slane %v1344, 4
        %v1347 = vor.u32 %v1343, %v1346
        %v1348 = vsel %vm1313, %v1338, %v1347
        %v1350 = vshrl.u32 %v1307, 16
        %v1352 = vrot.slane %v1350, 3
        %v1353 = vshll.u32 %v1307, 16
        %v1355 = vrot.slane %v1353, 4
        %v1356 = vor.u32 %v1352, %v1355
        %v1357 = vsel %vm1313, %v1347, %v1356
        %v1359 = vshrl.u32 %v1308, 16
        %v1361 = vrot.slane %v1359, 3
        %v1362 = vshll.u32 %v1308, 16
        %v1364 = vrot.slane %v1362, 4
        %v1365 = vor.u32 %v1361, %v1364
        %v1366 = vsel %vm1313, %v1356, %v1365
        %v1368 = vshrl.u32 %v1309, 16
        %v1370 = vrot.slane %v1368, 3
        %v1371 = vshll.u32 %v1309, 16
        %v1373 = vrot.slane %v1371, 4
        %v1374 = vor.u32 %v1370, %v1373
        %v1375 = vsel %vm1313, %v1365, %v1374
        %v1377 = vshrl.u32 %v1310, 16
        %v1379 = vrot.slane %v1377, 3
        %v1380 = vshll.u32 %v1310, 16
        %v1382 = vrot.slane %v1380, 4
        %v1383 = vor.u32 %v1379, %v1382
        %v1384 = vsel %vm1313, %v1374, %v1383
        %v1386 = vshrl.u32 %v1311, 16
        %v1388 = vrot.slane %v1386, 3
        %v1389 = vshll.u32 %v1311, 16
        %v1391 = vrot.slane %v1389, 4
        %v1392 = vor.u32 %v1388, %v1391
        %v1393 = vsel %vm1313, %v1383, %v1392
        %v1395 = vshrl.u32 %v1312, 16
        %v1397 = vrot.slane %v1395, 3
        %v1398 = vshll.u32 %v1312, 16
        %v1400 = vrot.slane %v1398, 4
        %v1401 = vor.u32 %v1397, %v1400
        %v1402 = vsel %vm1313, %v1392, %v1401
        %v1429 = vunpack.c.l.b16 %v1054
        %v1430 = vunpack.c.l.b16 %v1055
        %v1431 = vunpack.c.l.b16 %v1056
        %v1432 = vunpack.c.l.b16 %v1057
        %v1433 = vunpack.c.l.b16 %v1058
        %v1434 = vunpack.c.l.b16 %v1059
        %v1435 = vunpack.c.l.b16 %v1060
        %v1436 = vunpack.c.l.b16 %v1061
        %v1437 = vunpack.c.l.b16 %v1062
        %v1438 = vunpack.c.l.b16 %v1063
        %v1439 = vunpack.c.l.b16 %v1064
        %v1440 = vunpack.c.l.b16 %v1065
        %v1441 = vunpack.c.l.b16 %v1066
        %v1442 = vunpack.c.l.b16 %v1067
        %v1443 = vunpack.c.l.b16 %v1068
        %v1444 = vunpack.c.l.b16 %v1069
        %v1445 = vpack.c.b16 %v1430, %v1429
        %v1446 = vpack.c.b16 %v1432, %v1431
        %v1447 = vpack.c.b16 %v1434, %v1433
        %v1448 = vpack.c.b16 %v1436, %v1435
        %v1449 = vpack.c.b16 %v1438, %v1437
        %v1450 = vpack.c.b16 %v1440, %v1439
        %v1451 = vpack.c.b16 %v1442, %v1441
        %v1452 = vpack.c.b16 %v1444, %v1443
        %1461 = vmatprep.subr.bf16.mxu0 0
        %1462 = vmatpush1.bf16.msra.mxu0 %v1445
        %1463 = vmatprep.subr.bf16.mxu0 0
        %1464 = vmatpush1.bf16.msra.mxu0 %v1446
        %1465 = vmatprep.subr.bf16.mxu0 0
        %1466 = vmatpush1.bf16.msra.mxu0 %v1447
        %1467 = vmatprep.subr.bf16.mxu0 0
        %1468 = vmatpush1.bf16.msra.mxu0 %v1448
        %1469 = vmatprep.subr.bf16.mxu0 0
        %1470 = vmatpush1.bf16.msra.mxu0 %v1449
        %1471 = vmatprep.subr.bf16.mxu0 0
        %1472 = vmatpush1.bf16.msra.mxu0 %v1450
        %1473 = vmatprep.subr.bf16.mxu0 0
        %1474 = vmatpush1.bf16.msra.mxu0 %v1451
        %1475 = vmatprep.subr.bf16.mxu0 0
        %1476 = vmatpush1.bf16.msra.mxu0 %v1452
        %1477 = vmatprep.subr.bf16.mxu0 0
        %1478 = vmatpush1.bf16.msra.mxu0 0
        %1479 = vmatprep.subr.bf16.mxu0 0
        %1480 = vmatpush1.bf16.msra.mxu0 0
        %1481 = vmatprep.subr.bf16.mxu0 0
        %1482 = vmatpush1.bf16.msra.mxu0 0
        %1483 = vmatprep.subr.bf16.mxu0 0
        %1484 = vmatpush1.bf16.msra.mxu0 0
        %1485 = vmatprep.subr.bf16.mxu0 0
        %1486 = vmatpush1.bf16.msra.mxu0 0
        %1487 = vmatprep.subr.bf16.mxu0 0
        %1488 = vmatpush1.bf16.msra.mxu0 0
        %1489 = vmatprep.subr.bf16.mxu0 0
        %1490 = vmatpush1.bf16.msra.mxu0 0
        %1491 = vmatprep.subr.bf16.mxu0 0
        %1492 = vmatpush1.bf16.msra.mxu0 0
        %1493 = vmatprep.mubr.bf16.mxu0 0
        %1494 = vmatmul.mubr.bf16.gmra.mrb[0].mxu0 %v1330
        %v1495 = vpop.f32.mrb[0].mxu0
        %v1496 = vadd.f32 %v1227, %v1495
        %v1497 = vpop.f32.mrb[0].mxu0
        %v1498 = vpop.f32.mrb[0].mxu0
        %v1499 = vadd.f32 %v1230, %v1498
        %v1500 = vpop.f32.mrb[0].mxu0
        %1501 = vmatprep.mubr.bf16.mxu0 0
        %1502 = vmatmul.mubr.bf16.gmra.mrb[0].mxu0 %v1339
        %v1503 = vpop.f32.mrb[0].mxu0
        %v1504 = vadd.f32 %v1235, %v1503
        %v1505 = vpop.f32.mrb[0].mxu0
        %v1506 = vpop.f32.mrb[0].mxu0
        %v1507 = vadd.f32 %v1238, %v1506
        %v1508 = vpop.f32.mrb[0].mxu0
        %1509 = vmatprep.mubr.bf16.mxu0 0
        %1510 = vmatmul.mubr.bf16.gmra.mrb[0].mxu0 %v1348
        %v1511 = vpop.f32.mrb[0].mxu0
        %v1512 = vpop.f32.mrb[0].mxu0
        %v1513 = vpop.f32.mrb[0].mxu0
        %v1514 = vadd.f32 %v1245, %v1513
        %v1515 = vpop.f32.mrb[0].mxu0
        %1516 = vmatprep.mubr.bf16.mxu0 0
        %1517 = vmatmul.mubr.bf16.gmra.mrb[0].mxu0 %v1357
        %v1518 = vpop.f32.mrb[0].mxu0
        %v1519 = vadd.f32 %v1250, %v1518
        %v1520 = vpop.f32.mrb[0].mxu0
        %v1521 = vpop.f32.mrb[0].mxu0
        %v1522 = vadd.f32 %v1253, %v1521
        %v1523 = vpop.f32.mrb[0].mxu0
        %1524 = vmatprep.mubr.bf16.mxu0 0
        %1525 = vmatmul.mubr.bf16.gmra.mrb[0].mxu0 %v1366
        %v1526 = vpop.f32.mrb[0].mxu0
        %v1527 = vadd.f32 %v1258, %v1526
        %v1528 = vpop.f32.mrb[0].mxu0
        %v1529 = vpop.f32.mrb[0].mxu0
        %v1530 = vpop.f32.mrb[0].mxu0
        %1531 = vmatprep.mubr.bf16.mxu0 0
        %1532 = vmatmul.mubr.bf16.gmra.mrb[0].mxu0 %v1375
        %v1533 = vpop.f32.mrb[0].mxu0
        %v1534 = vadd.f32 %v1265, %v1533
        %v1535 = vpop.f32.mrb[0].mxu0
        %v1536 = vpop.f32.mrb[0].mxu0
        %v1537 = vadd.f32 %v1268, %v1536
        %v1538 = vpop.f32.mrb[0].mxu0
        %1539 = vmatprep.mubr.bf16.mxu0 0
        %1540 = vmatmul.mubr.bf16.gmra.mrb[0].mxu0 %v1384
        %v1541 = vpop.f32.mrb[0].mxu0
        %v1542 = vadd.f32 %v1273, %v1541
        %v1543 = vpop.f32.mrb[0].mxu0
        %v1544 = vpop.f32.mrb[0].mxu0
        %v1545 = vadd.f32 %v1276, %v1544
        %v1546 = vpop.f32.mrb[0].mxu0
        %1547 = vmatprep.mubr.bf16.mxu0 0
        %1548 = vmatmul.mubr.bf16.gmra.mrb[0].mxu0 %v1393
        %v1549 = vpop.f32.mrb[0].mxu0
        %v1550 = vpop.f32.mrb[0].mxu0
        %v1551 = vpop.f32.mrb[0].mxu0
        %v1552 = vadd.f32 %v1283, %v1551
        %v1553 = vpop.f32.mrb[0].mxu0
        %1554 = vmatprep.mubr.bf16.mxu0 0
        %1555 = vmatmul.mubr.bf16.gmra.mrb[0].mxu0 %v1402
        %v1556 = vpop.f32.mrb[0].mxu0
        %v1557 = vadd.f32 %v1288, %v1556
        %v1558 = vpop.f32.mrb[0].mxu0
        %v1559 = vpop.f32.mrb[0].mxu0
        %v1560 = vadd.f32 %v1291, %v1559
        %v1561 = vpop.f32.mrb[0].mxu0
        %1562 = vmatprep.mubr.bf16.mxu0 0
        %1563 = vmatmul.mubr.bf16.gmra.mrb[0].mxu0 %v1401
        %v1564 = vpop.f32.mrb[0].mxu0
        %v1565 = vadd.f32 %v1296, %v1564
        %v1566 = vpop.f32.mrb[0].mxu0
        %v1567 = vpop.f32.mrb[0].mxu0
        %v1568 = vpop.f32.mrb[0].mxu0
        %1569 = vdwg.mxu0
        %v1570 = vld [vmem:[#allocation2 + $0x4] sm:$0xf]
        %v1571 = vld [vmem:[#allocation2 + $0x8] sm:$0xf]
        %v1572 = vld [vmem:[#allocation2 + $0xc] sm:$0xf]
        %v1573 = vld [vmem:[#allocation2 + $0x10] sm:$0xf]
        %v1574 = vld [vmem:[#allocation2 + $0x14] sm:$0xf]
        %v1575 = vld [vmem:[#allocation2 + $0x18] sm:$0xf]
        %v1576 = vld [vmem:[#allocation2 + $0x1c] sm:$0xf]
        %v1577 = vld [vmem:[#allocation2 + $0x20] sm:$0xf]
        %v1578 = vld [vmem:[#allocation2 + $0x24] sm:$0xf]
        %v1579 = vld [vmem:[#allocation2 + $0x28] sm:$0xf]
        %v1580 = vld [vmem:[#allocation2 + $0x2c] sm:$0xf]
        %v1581 = vld [vmem:[#allocation2 + $0x30] sm:$0xf]
        %v1582 = vld [vmem:[#allocation2 + $0x34] sm:$0xf]
        %v1583 = vld [vmem:[#allocation2 + $0x38] sm:$0xf]
        %v1584 = vld [vmem:[#allocation2 + $0x3c] sm:$0xf]
        %v1585 = vld [vmem:[#allocation2 + $0x40] sm:$0xf]
        %v1586 = vld [vmem:[#allocation2 + $0x44] sm:$0xf]
        %v1587 = vld [vmem:[#allocation2 + $0x48] sm:$0xf]
        %v1588 = vld [vmem:[#allocation2 + $0x4c] sm:$0xf]
        %v1589 = vld [vmem:[#allocation2 + $0x50] sm:$0x1]
        %v1590 = vld [vmem:[%s1 + $0x140] sm:$0xf]
        %v1591 = vld [vmem:[%s1 + $0x144] sm:$0xf]
        %v1592 = vld [vmem:[%s1 + $0x148] sm:$0xf]
        %v1593 = vld [vmem:[%s1 + $0x14c] sm:$0xf]
        %v1594 = vld [vmem:[%s1 + $0x150] sm:$0xf]
        %v1595 = vld [vmem:[%s1 + $0x154] sm:$0xf]
        %v1596 = vld [vmem:[%s1 + $0x158] sm:$0xf]
        %v1597 = vld [vmem:[%s1 + $0x15c] sm:$0xf]
        %v1598 = vld [vmem:[%s1 + $0x160] sm:$0xf]
        %v1599 = vld [vmem:[%s1 + $0x164] sm:$0xf]
        %v1600 = vld [vmem:[%s1 + $0x168] sm:$0xf]
        %v1601 = vld [vmem:[%s1 + $0x16c] sm:$0xf]
        %v1602 = vld [vmem:[%s1 + $0x170] sm:$0xf]
        %v1603 = vld [vmem:[%s1 + $0x174] sm:$0xf]
        %v1604 = vld [vmem:[%s1 + $0x178] sm:$0xf]
        %v1605 = vld [vmem:[%s1 + $0x17c] sm:$0xf]
        %v1626 = vunpack.c.l.b16 %v1570
        %v1627 = vunpack.c.l.b16 %v1571
        %v1628 = vunpack.c.l.b16 %v1572
        %v1629 = vunpack.c.l.b16 %v1573
        %v1630 = vunpack.c.l.b16 %v1574
        %v1631 = vunpack.c.l.b16 %v1575
        %v1632 = vunpack.c.l.b16 %v1576
        %v1633 = vunpack.c.l.b16 %v1577
        %v1634 = vunpack.c.l.b16 %v1578
        %v1635 = vunpack.c.l.b16 %v1579
        %v1636 = vunpack.c.l.b16 %v1580
        %v1637 = vunpack.c.l.b16 %v1581
        %v1638 = vunpack.c.l.b16 %v1582
        %v1639 = vunpack.c.l.b16 %v1583
        %v1640 = vunpack.c.l.b16 %v1584
        %v1641 = vunpack.c.l.b16 %v1585
        %v1642 = vunpack.c.l.b16 %v1586
        %v1643 = vunpack.c.l.b16 %v1587
        %v1644 = vunpack.c.l.b16 %v1588
        %v1645 = vunpack.c.l.b16 %v1589
        %v1646 = vpack.c.b16 %v1627, %v1626
        %v1647 = vpack.c.b16 %v1629, %v1628
        %v1648 = vpack.c.b16 %v1631, %v1630
        %v1649 = vpack.c.b16 %v1633, %v1632
        %v1650 = vpack.c.b16 %v1635, %v1634
        %v1651 = vpack.c.b16 %v1637, %v1636
        %v1652 = vpack.c.b16 %v1639, %v1638
        %v1653 = vpack.c.b16 %v1641, %v1640
        %v1654 = vpack.c.b16 %v1643, %v1642
        %v1655 = vpack.c.b16 %v1645, %v1644
        %v1657 = vshrl.u32 %v1646, 16
        %v1659 = vshll.u32 %v1646, 16
        %v1661 = vrot.slane %v1659, 1
        %v1662 = vor.u32 %v1657, %v1661
        %v1664 = vshll.u32 %v1647, 16
        %v1666 = vrot.slane %v1664, 1
        %v1667 = vsel %vm277, %v1662, %v1666
        %v1668 = vshrl.u32 %v1647, 16
        %v1670 = vor.u32 %v1668, %v1666
        %v1672 = vshll.u32 %v1648, 16
        %v1674 = vrot.slane %v1672, 1
        %v1675 = vsel %vm277, %v1670, %v1674
        %v1676 = vshrl.u32 %v1648, 16
        %v1678 = vor.u32 %v1676, %v1674
        %v1680 = vshll.u32 %v1649, 16
        %v1682 = vrot.slane %v1680, 1
        %v1683 = vsel %vm277, %v1678, %v1682
        %v1684 = vshrl.u32 %v1649, 16
        %v1686 = vor.u32 %v1684, %v1682
        %v1688 = vshll.u32 %v1650, 16
        %v1690 = vrot.slane %v1688, 1
        %v1691 = vsel %vm277, %v1686, %v1690
        %v1692 = vshrl.u32 %v1650, 16
        %v1694 = vor.u32 %v1692, %v1690
        %v1696 = vshll.u32 %v1651, 16
        %v1698 = vrot.slane %v1696, 1
        %v1699 = vsel %vm277, %v1694, %v1698
        %v1700 = vshrl.u32 %v1651, 16
        %v1702 = vor.u32 %v1700, %v1698
        %v1704 = vshll.u32 %v1652, 16
        %v1706 = vrot.slane %v1704, 1
        %v1707 = vsel %vm277, %v1702, %v1706
        %v1708 = vshrl.u32 %v1652, 16
        %v1710 = vor.u32 %v1708, %v1706
        %v1712 = vshll.u32 %v1653, 16
        %v1714 = vrot.slane %v1712, 1
        %v1715 = vsel %vm277, %v1710, %v1714
        %v1716 = vshrl.u32 %v1653, 16
        %v1718 = vor.u32 %v1716, %v1714
        %v1720 = vshll.u32 %v1654, 16
        %v1722 = vrot.slane %v1720, 1
        %v1723 = vsel %vm277, %v1718, %v1722
        %v1724 = vshrl.u32 %v1654, 16
        %v1726 = vor.u32 %v1724, %v1722
        %v1728 = vshll.u32 %v1655, 16
        %v1730 = vrot.slane %v1728, 1
        %v1731 = vsel %vm277, %v1726, %v1730
        %v1732 = vshrl.u32 %v1655, 16
        %v1734 = vor.u32 %v1732, %v1730
        %v1761 = vunpack.c.l.b16 %v1590
        %v1762 = vunpack.c.l.b16 %v1591
        %v1763 = vunpack.c.l.b16 %v1592
        %v1764 = vunpack.c.l.b16 %v1593
        %v1765 = vunpack.c.l.b16 %v1594
        %v1766 = vunpack.c.l.b16 %v1595
        %v1767 = vunpack.c.l.b16 %v1596
        %v1768 = vunpack.c.l.b16 %v1597
        %v1769 = vunpack.c.l.b16 %v1598
        %v1770 = vunpack.c.l.b16 %v1599
        %v1771 = vunpack.c.l.b16 %v1600
        %v1772 = vunpack.c.l.b16 %v1601
        %v1773 = vunpack.c.l.b16 %v1602
        %v1774 = vunpack.c.l.b16 %v1603
        %v1775 = vunpack.c.l.b16 %v1604
        %v1776 = vunpack.c.l.b16 %v1605
        %v1777 = vpack.c.b16 %v1762, %v1761
        %v1778 = vpack.c.b16 %v1764, %v1763
        %v1779 = vpack.c.b16 %v1766, %v1765
        %v1780 = vpack.c.b16 %v1768, %v1767
        %v1781 = vpack.c.b16 %v1770, %v1769
        %v1782 = vpack.c.b16 %v1772, %v1771
        %v1783 = vpack.c.b16 %v1774, %v1773
        %v1784 = vpack.c.b16 %v1776, %v1775
        %1793 = vmatprep.subr.bf16.mxu0 0
        %1794 = vmatpush1.bf16.msra.mxu0 %v1777
        %1795 = vmatprep.subr.bf16.mxu0 0
        %1796 = vmatpush1.bf16.msra.mxu0 %v1778
        %1797 = vmatprep.subr.bf16.mxu0 0
        %1798 = vmatpush1.bf16.msra.mxu0 %v1779
        %1799 = vmatprep.subr.bf16.mxu0 0
        %1800 = vmatpush1.bf16.msra.mxu0 %v1780
        %1801 = vmatprep.subr.bf16.mxu0 0
        %1802 = vmatpush1.bf16.msra.mxu0 %v1781
        %1803 = vmatprep.subr.bf16.mxu0 0
        %1804 = vmatpush1.bf16.msra.mxu0 %v1782
        %1805 = vmatprep.subr.bf16.mxu0 0
        %1806 = vmatpush1.bf16.msra.mxu0 %v1783
        %1807 = vmatprep.subr.bf16.mxu0 0
        %1808 = vmatpush1.bf16.msra.mxu0 %v1784
        %1809 = vmatprep.subr.bf16.mxu0 0
        %1810 = vmatpush1.bf16.msra.mxu0 0
        %1811 = vmatprep.subr.bf16.mxu0 0
        %1812 = vmatpush1.bf16.msra.mxu0 0
        %1813 = vmatprep.subr.bf16.mxu0 0
        %1814 = vmatpush1.bf16.msra.mxu0 0
        %1815 = vmatprep.subr.bf16.mxu0 0
        %1816 = vmatpush1.bf16.msra.mxu0 0
        %1817 = vmatprep.subr.bf16.mxu0 0
        %1818 = vmatpush1.bf16.msra.mxu0 0
        %1819 = vmatprep.subr.bf16.mxu0 0
        %1820 = vmatpush1.bf16.msra.mxu0 0
        %1821 = vmatprep.subr.bf16.mxu0 0
        %1822 = vmatpush1.bf16.msra.mxu0 0
        %1823 = vmatprep.subr.bf16.mxu0 0
        %1824 = vmatpush1.bf16.msra.mxu0 0
        %1825 = vmatprep.mubr.bf16.mxu0 0
        %1826 = vmatmul.mubr.bf16.gmra.mrb[0].mxu0 %v1667
        %v1827 = vpop.f32.mrb[0].mxu0
        %v1828 = vadd.f32 0.0, %v1827
        %v1829 = vpop.f32.mrb[0].mxu0
        %v1830 = vpop.f32.mrb[0].mxu0
        %v1831 = vadd.f32 0.0, %v1830
        %v1832 = vpop.f32.mrb[0].mxu0
        %1833 = vmatprep.mubr.bf16.mxu0 0
        %1834 = vmatmul.mubr.bf16.gmra.mrb[0].mxu0 %v1675
        %v1835 = vpop.f32.mrb[0].mxu0
        %v1836 = vadd.f32 0.0, %v1835
        %v1837 = vpop.f32.mrb[0].mxu0
        %v1838 = vpop.f32.mrb[0].mxu0
        %v1839 = vadd.f32 0.0, %v1838
        %v1840 = vpop.f32.mrb[0].mxu0
        %1841 = vmatprep.mubr.bf16.mxu0 0
        %1842 = vmatmul.mubr.bf16.gmra.mrb[0].mxu0 %v1683
        %v1843 = vpop.f32.mrb[0].mxu0
        %v1844 = vpop.f32.mrb[0].mxu0
        %v1845 = vpop.f32.mrb[0].mxu0
        %v1846 = vadd.f32 0.0, %v1845
        %v1847 = vpop.f32.mrb[0].mxu0
        %1848 = vmatprep.mubr.bf16.mxu0 0
        %1849 = vmatmul.mubr.bf16.gmra.mrb[0].mxu0 %v1691
        %v1850 = vpop.f32.mrb[0].mxu0
        %v1851 = vadd.f32 0.0, %v1850
        %v1852 = vpop.f32.mrb[0].mxu0
        %v1853 = vpop.f32.mrb[0].mxu0
        %v1854 = vadd.f32 0.0, %v1853
        %v1855 = vpop.f32.mrb[0].mxu0
        %1856 = vmatprep.mubr.bf16.mxu0 0
        %1857 = vmatmul.mubr.bf16.gmra.mrb[0].mxu0 %v1699
        %v1858 = vpop.f32.mrb[0].mxu0
        %v1859 = vadd.f32 0.0, %v1858
        %v1860 = vpop.f32.mrb[0].mxu0
        %v1861 = vpop.f32.mrb[0].mxu0
        %v1862 = vpop.f32.mrb[0].mxu0
        %1863 = vmatprep.mubr.bf16.mxu0 0
        %1864 = vmatmul.mubr.bf16.gmra.mrb[0].mxu0 %v1707
        %v1865 = vpop.f32.mrb[0].mxu0
        %v1866 = vadd.f32 0.0, %v1865
        %v1867 = vpop.f32.mrb[0].mxu0
        %v1868 = vpop.f32.mrb[0].mxu0
        %v1869 = vadd.f32 0.0, %v1868
        %v1870 = vpop.f32.mrb[0].mxu0
        %1871 = vmatprep.mubr.bf16.mxu0 0
        %1872 = vmatmul.mubr.bf16.gmra.mrb[0].mxu0 %v1715
        %v1873 = vpop.f32.mrb[0].mxu0
        %v1874 = vadd.f32 0.0, %v1873
        %v1875 = vpop.f32.mrb[0].mxu0
        %v1876 = vpop.f32.mrb[0].mxu0
        %v1877 = vadd.f32 0.0, %v1876
        %v1878 = vpop.f32.mrb[0].mxu0
        %1879 = vmatprep.mubr.bf16.mxu0 0
        %1880 = vmatmul.mubr.bf16.gmra.mrb[0].mxu0 %v1723
        %v1881 = vpop.f32.mrb[0].mxu0
        %v1882 = vpop.f32.mrb[0].mxu0
        %v1883 = vpop.f32.mrb[0].mxu0
        %v1884 = vadd.f32 0.0, %v1883
        %v1885 = vpop.f32.mrb[0].mxu0
        %1886 = vmatprep.mubr.bf16.mxu0 0
        %1887 = vmatmul.mubr.bf16.gmra.mrb[0].mxu0 %v1731
        %v1888 = vpop.f32.mrb[0].mxu0
        %v1889 = vadd.f32 0.0, %v1888
        %v1890 = vpop.f32.mrb[0].mxu0
        %v1891 = vpop.f32.mrb[0].mxu0
        %v1892 = vadd.f32 0.0, %v1891
        %v1893 = vpop.f32.mrb[0].mxu0
        %1894 = vmatprep.mubr.bf16.mxu0 0
        %1895 = vmatmul.mubr.bf16.gmra.mrb[0].mxu0 %v1734
        %v1896 = vpop.f32.mrb[0].mxu0
        %v1897 = vadd.f32 0.0, %v1896
        %v1898 = vpop.f32.mrb[0].mxu0
        %v1899 = vpop.f32.mrb[0].mxu0
        %v1900 = vpop.f32.mrb[0].mxu0
        %1901 = vdwg.mxu0
        %v1902 = vadd.f32 %v1496, %v1828
        %v1903 = vadd.f32 %v1499, %v1831
        %v1904 = vadd.f32 %v1504, %v1836
        %v1905 = vadd.f32 %v1507, %v1839
        %v1906 = vadd.f32 %v1514, %v1846
        %v1907 = vadd.f32 %v1519, %v1851
        %v1908 = vadd.f32 %v1522, %v1854
        %v1909 = vadd.f32 %v1527, %v1859
        %v1910 = vadd.f32 %v1534, %v1866
        %v1911 = vadd.f32 %v1537, %v1869
        %v1912 = vadd.f32 %v1542, %v1874
        %v1913 = vadd.f32 %v1545, %v1877
        %v1914 = vadd.f32 %v1552, %v1884
        %v1915 = vadd.f32 %v1557, %v1889
        %v1916 = vadd.f32 %v1560, %v1892
        %v1917 = vadd.f32 %v1565, %v1897
        %v1918 = vld [vmem:[%s2 + $0x4] sm:$0x1]
        %v1919 = vld [vmem:[%s2 + $0x5] sm:$0x1]
        %v1920 = vlaneseq
        %v1921 = vshrl.u32 %v1920, 7
        %v1922 = vsub.s32 0, %v1921
        %v1923 = vrot.slane %v1918, %v1922
        %v1924 = vmul.f32 %v1902, %v1923
        %v1925 = vmul.f32 %v1903, %v1923
        %v1926 = vmul.f32 %v1904, %v1923
        %v1927 = vmul.f32 %v1905, %v1923
        %v1928 = vmul.f32 %v1906, %v1923
        %v1929 = vmul.f32 %v1907, %v1923
        %v1930 = vmul.f32 %v1908, %v1923
        %v1931 = vmul.f32 %v1909, %v1923
        %v1932 = vmul.f32 %v1910, %v1923
        %v1933 = vmul.f32 %v1911, %v1923
        %v1934 = vmul.f32 %v1912, %v1923
        %v1935 = vmul.f32 %v1913, %v1923
        %v1936 = vmul.f32 %v1914, %v1923
        %v1937 = vmul.f32 %v1915, %v1923
        %v1938 = vmul.f32 %v1916, %v1923
        %v1939 = vmul.f32 %v1917, %v1923
        %v1940 = vlaneseq
        %v1941 = vshrl.u32 %v1940, 7
        %v1942 = vsub.s32 0, %v1941
        %v1943 = vrot.slane %v1919, %v1942
        %v1944 = vadd.f32 %v1924, %v1943
        %v1945 = vadd.f32 %v1925, %v1943
        %v1946 = vadd.f32 %v1926, %v1943
        %v1947 = vadd.f32 %v1927, %v1943
        %v1948 = vadd.f32 %v1928, %v1943
        %v1949 = vadd.f32 %v1929, %v1943
        %v1950 = vadd.f32 %v1930, %v1943
        %v1951 = vadd.f32 %v1931, %v1943
        %v1952 = vadd.f32 %v1932, %v1943
        %v1953 = vadd.f32 %v1933, %v1943
        %v1954 = vadd.f32 %v1934, %v1943
        %v1955 = vadd.f32 %v1935, %v1943
        %v1956 = vadd.f32 %v1936, %v1943
        %v1957 = vadd.f32 %v1937, %v1943
        %v1958 = vadd.f32 %v1938, %v1943
        %v1959 = vadd.f32 %v1939, %v1943
        %v1960 = vadd.f32 %v1944, %v938
        %v1961 = vadd.f32 %v1945, %v939
        %v1962 = vadd.f32 %v1946, %v940
        %v1963 = vadd.f32 %v1947, %v941
        %v1964 = vadd.f32 %v1948, %v942
        %v1965 = vadd.f32 %v1949, %v943
        %v1966 = vadd.f32 %v1950, %v944
        %v1967 = vadd.f32 %v1951, %v945
        %v1968 = vadd.f32 %v1952, %v946
        %v1969 = vadd.f32 %v1953, %v947
        %v1970 = vadd.f32 %v1954, %v948
        %v1971 = vadd.f32 %v1955, %v949
        %v1972 = vadd.f32 %v1956, %v950
        %v1973 = vadd.f32 %v1957, %v951
        %v1974 = vadd.f32 %v1958, %v952
        %v1975 = vadd.f32 %v1959, %v953
        %v1976 = vmax.f32 %v1960, 0.0
        %v1977 = vmax.f32 %v1961, 0.0
        %v1978 = vmax.f32 %v1962, 0.0
        %v1979 = vmax.f32 %v1963, 0.0
        %v1980 = vmax.f32 %v1964, 0.0
        %v1981 = vmax.f32 %v1965, 0.0
        %v1982 = vmax.f32 %v1966, 0.0
        %v1983 = vmax.f32 %v1967, 0.0
        %v1984 = vmax.f32 %v1968, 0.0
        %v1985 = vmax.f32 %v1969, 0.0
        %v1986 = vmax.f32 %v1970, 0.0
        %v1987 = vmax.f32 %v1971, 0.0
        %v1988 = vmax.f32 %v1972, 0.0
        %v1989 = vmax.f32 %v1973, 0.0
        %v1990 = vmax.f32 %v1974, 0.0
        %v1991 = vmax.f32 %v1975, 0.0
        %v1992 = vpack.c.bf16 %v1977, %v1976
        %v1993 = vpack.c.bf16 %v1979, %v1978
        %v1996 = vunpack.c.l.b16 %v1992
        %v1997 = vunpack.c.h.b16 %v1992
        %v1998 = vunpack.c.l.b16 %v1993
        %v1999 = vunpack.c.h.b16 %v1993
        %v2000 = vpack.c.b16 %v1996, %v1996
        %v2001 = vpack.c.b16 %v1997, %v1997
        %v2002 = vpack.c.b16 %v1998, %v1998
        %v2003 = vpack.c.b16 %v1999, %v1999
        %2008 = vst [vmem:[#allocation3 + $0x4] sm:$0xf] %v2000
        %2009 = vst [vmem:[#allocation3 + $0x8] sm:$0xf] %v2001
        %2010 = vst [vmem:[#allocation3 + $0xc] sm:$0xf] %v2002
        %2011 = vst [vmem:[#allocation3 + $0x10] sm:$0xf] %v2003
        %v2012 = vpack.c.bf16 %v1981, %v1980
        %v2013 = vpack.c.bf16 %v1983, %v1982
        %v2016 = vunpack.c.l.b16 %v2012
        %v2017 = vunpack.c.h.b16 %v2012
        %v2018 = vunpack.c.l.b16 %v2013
        %v2019 = vunpack.c.h.b16 %v2013
        %v2020 = vpack.c.b16 %v2016, %v2016
        %v2021 = vpack.c.b16 %v2017, %v2017
        %v2022 = vpack.c.b16 %v2018, %v2018
        %v2023 = vpack.c.b16 %v2019, %v2019
        %2028 = vst [vmem:[#allocation3 + $0x18] sm:$0xf] %v2020
        %2029 = vst [vmem:[#allocation3 + $0x1c] sm:$0xf] %v2021
        %2030 = vst [vmem:[#allocation3 + $0x20] sm:$0xf] %v2022
        %2031 = vst [vmem:[#allocation3 + $0x24] sm:$0xf] %v2023
        %v2032 = vpack.c.bf16 %v1985, %v1984
        %v2033 = vpack.c.bf16 %v1987, %v1986
        %v2036 = vunpack.c.l.b16 %v2032
        %v2037 = vunpack.c.h.b16 %v2032
        %v2038 = vunpack.c.l.b16 %v2033
        %v2039 = vunpack.c.h.b16 %v2033
        %v2040 = vpack.c.b16 %v2036, %v2036
        %v2041 = vpack.c.b16 %v2037, %v2037
        %v2042 = vpack.c.b16 %v2038, %v2038
        %v2043 = vpack.c.b16 %v2039, %v2039
        %2048 = vst [vmem:[#allocation3 + $0x2c] sm:$0xf] %v2040
        %2049 = vst [vmem:[#allocation3 + $0x30] sm:$0xf] %v2041
        %2050 = vst [vmem:[#allocation3 + $0x34] sm:$0xf] %v2042
        %2051 = vst [vmem:[#allocation3 + $0x38] sm:$0xf] %v2043
        %v2052 = vpack.c.bf16 %v1989, %v1988
        %v2053 = vpack.c.bf16 %v1991, %v1990
        %v2056 = vunpack.c.l.b16 %v2052
        %v2057 = vunpack.c.h.b16 %v2052
        %v2058 = vunpack.c.l.b16 %v2053
        %v2059 = vunpack.c.h.b16 %v2053
        %v2060 = vpack.c.b16 %v2056, %v2056
        %v2061 = vpack.c.b16 %v2057, %v2057
        %v2062 = vpack.c.b16 %v2058, %v2058
        %v2063 = vpack.c.b16 %v2059, %v2059
        %2068 = vst [vmem:[#allocation3 + $0x40] sm:$0xf] %v2060
        %2069 = vst [vmem:[#allocation3 + $0x44] sm:$0xf] %v2061
        %2070 = vst [vmem:[#allocation3 + $0x48] sm:$0xf] %v2062
        %2071 = vst [vmem:[#allocation3 + $0x4c] sm:$0xf] %v2063
        %v2072 = vld [vmem:[#allocation3] sm:$0x8]
        %v2073 = vld [vmem:[#allocation3 + $0x4] sm:$0xf]
        %v2074 = vld [vmem:[#allocation3 + $0x8] sm:$0xf]
        %v2075 = vld [vmem:[#allocation3 + $0xc] sm:$0xf]
        %v2076 = vld [vmem:[#allocation3 + $0x10] sm:$0xf]
        %v2077 = vld [vmem:[#allocation3 + $0x14] sm:$0xf]
        %v2078 = vld [vmem:[#allocation3 + $0x18] sm:$0xf]
        %v2079 = vld [vmem:[#allocation3 + $0x1c] sm:$0xf]
        %v2080 = vld [vmem:[#allocation3 + $0x20] sm:$0xf]
        %v2081 = vld [vmem:[#allocation3 + $0x24] sm:$0xf]
        %v2082 = vld [vmem:[#allocation3 + $0x28] sm:$0xf]
        %v2083 = vld [vmem:[#allocation3 + $0x2c] sm:$0xf]
        %v2084 = vld [vmem:[#allocation3 + $0x30] sm:$0xf]
        %v2085 = vld [vmem:[#allocation3 + $0x34] sm:$0xf]
        %v2086 = vld [vmem:[#allocation3 + $0x38] sm:$0xf]
        %v2087 = vld [vmem:[#allocation3 + $0x3c] sm:$0xf]
        %v2088 = vld [vmem:[#allocation3 + $0x40] sm:$0xf]
        %v2089 = vld [vmem:[#allocation3 + $0x44] sm:$0xf]
        %v2090 = vld [vmem:[#allocation3 + $0x48] sm:$0xf]
        %v2091 = vld [vmem:[#allocation3 + $0x4c] sm:$0xf]
        %v2092 = vld [vmem:[%s1 + $0x180] sm:$0xf]
        %v2093 = vld [vmem:[%s1 + $0x184] sm:$0xf]
        %v2094 = vld [vmem:[%s1 + $0x188] sm:$0xf]
        %v2095 = vld [vmem:[%s1 + $0x18c] sm:$0xf]
        %v2096 = vld [vmem:[%s1 + $0x190] sm:$0xf]
        %v2097 = vld [vmem:[%s1 + $0x194] sm:$0xf]
        %v2098 = vld [vmem:[%s1 + $0x198] sm:$0xf]
        %v2099 = vld [vmem:[%s1 + $0x19c] sm:$0xf]
        %v2100 = vld [vmem:[%s1 + $0x1a0] sm:$0xf]
        %v2101 = vld [vmem:[%s1 + $0x1a4] sm:$0xf]
        %v2102 = vld [vmem:[%s1 + $0x1a8] sm:$0xf]
        %v2103 = vld [vmem:[%s1 + $0x1ac] sm:$0xf]
        %v2104 = vld [vmem:[%s1 + $0x1b0] sm:$0xf]
        %v2105 = vld [vmem:[%s1 + $0x1b4] sm:$0xf]
        %v2106 = vld [vmem:[%s1 + $0x1b8] sm:$0xf]
        %v2107 = vld [vmem:[%s1 + $0x1bc] sm:$0xf]
        %v2108 = vld [vmem:[%s1 + $0x1c0] sm:$0xf]
        %v2109 = vld [vmem:[%s1 + $0x1c4] sm:$0xf]
        %v2110 = vld [vmem:[%s1 + $0x1c8] sm:$0xf]
        %v2111 = vld [vmem:[%s1 + $0x1cc] sm:$0xf]
        %v2112 = vld [vmem:[%s1 + $0x1d0] sm:$0xf]
        %v2113 = vld [vmem:[%s1 + $0x1d4] sm:$0xf]
        %v2114 = vld [vmem:[%s1 + $0x1d8] sm:$0xf]
        %v2115 = vld [vmem:[%s1 + $0x1dc] sm:$0xf]
        %v2116 = vld [vmem:[%s1 + $0x1e0] sm:$0xf]
        %v2117 = vld [vmem:[%s1 + $0x1e4] sm:$0xf]
        %v2118 = vld [vmem:[%s1 + $0x1e8] sm:$0xf]
        %v2119 = vld [vmem:[%s1 + $0x1ec] sm:$0xf]
        %v2120 = vld [vmem:[%s1 + $0x1f0] sm:$0xf]
        %v2121 = vld [vmem:[%s1 + $0x1f4] sm:$0xf]
        %v2122 = vld [vmem:[%s1 + $0x1f8] sm:$0xf]
        %v2123 = vld [vmem:[%s1 + $0x1fc] sm:$0xf]
        %v2143 = vunpack.c.l.b16 %v2073
        %v2144 = vunpack.c.l.b16 %v2074
        %v2145 = vunpack.c.l.b16 %v2075
        %v2146 = vunpack.c.l.b16 %v2076
        %v2147 = vunpack.c.l.b16 %v2077
        %v2148 = vunpack.c.l.b16 %v2078
        %v2149 = vunpack.c.l.b16 %v2079
        %v2150 = vunpack.c.l.b16 %v2080
        %v2151 = vunpack.c.l.b16 %v2081
        %v2152 = vunpack.c.l.b16 %v2082
        %v2153 = vunpack.c.l.b16 %v2083
        %v2154 = vunpack.c.l.b16 %v2084
        %v2155 = vunpack.c.l.b16 %v2085
        %v2156 = vunpack.c.l.b16 %v2086
        %v2157 = vunpack.c.l.b16 %v2087
        %v2158 = vunpack.c.l.b16 %v2088
        %v2159 = vunpack.c.l.b16 %v2089
        %v2160 = vunpack.c.l.b16 %v2090
        %v2161 = vunpack.c.l.b16 %v2091
        %v2162 = vpack.c.b16 %v2144, %v2143
        %v2163 = vpack.c.b16 %v2146, %v2145
        %v2164 = vpack.c.b16 %v2148, %v2147
        %v2165 = vpack.c.b16 %v2150, %v2149
        %v2166 = vpack.c.b16 %v2152, %v2151
        %v2167 = vpack.c.b16 %v2154, %v2153
        %v2168 = vpack.c.b16 %v2156, %v2155
        %v2169 = vpack.c.b16 %v2158, %v2157
        %v2170 = vpack.c.b16 %v2160, %v2159
        %v2171 = vpack.c.b16 %v2161, %v2161
        %v2198 = vunpack.c.l.b16 %v2108
        %v2199 = vunpack.c.l.b16 %v2109
        %v2200 = vunpack.c.l.b16 %v2110
        %v2201 = vunpack.c.l.b16 %v2111
        %v2202 = vunpack.c.l.b16 %v2112
        %v2203 = vunpack.c.l.b16 %v2113
        %v2204 = vunpack.c.l.b16 %v2114
        %v2205 = vunpack.c.l.b16 %v2115
        %v2206 = vunpack.c.l.b16 %v2116
        %v2207 = vunpack.c.l.b16 %v2117
        %v2208 = vunpack.c.l.b16 %v2118
        %v2209 = vunpack.c.l.b16 %v2119
        %v2210 = vunpack.c.l.b16 %v2120
        %v2211 = vunpack.c.l.b16 %v2121
        %v2212 = vunpack.c.l.b16 %v2122
        %v2213 = vunpack.c.l.b16 %v2123
        %v2214 = vpack.c.b16 %v2199, %v2198
        %v2215 = vpack.c.b16 %v2201, %v2200
        %v2216 = vpack.c.b16 %v2203, %v2202
        %v2217 = vpack.c.b16 %v2205, %v2204
        %v2218 = vpack.c.b16 %v2207, %v2206
        %v2219 = vpack.c.b16 %v2209, %v2208
        %v2220 = vpack.c.b16 %v2211, %v2210
        %v2221 = vpack.c.b16 %v2213, %v2212
        %2230 = vmatprep.subr.bf16.mxu0 0
        %2231 = vmatpush1.bf16.msra.mxu0 %v2214
        %2232 = vmatprep.subr.bf16.mxu0 0
        %2233 = vmatpush1.bf16.msra.mxu0 %v2215
        %2234 = vmatprep.subr.bf16.mxu0 0
        %2235 = vmatpush1.bf16.msra.mxu0 %v2216
        %2236 = vmatprep.subr.bf16.mxu0 0
        %2237 = vmatpush1.bf16.msra.mxu0 %v2217
        %2238 = vmatprep.subr.bf16.mxu0 0
        %2239 = vmatpush1.bf16.msra.mxu0 %v2218
        %2240 = vmatprep.subr.bf16.mxu0 0
        %2241 = vmatpush1.bf16.msra.mxu0 %v2219
        %2242 = vmatprep.subr.bf16.mxu0 0
        %2243 = vmatpush1.bf16.msra.mxu0 %v2220
        %2244 = vmatprep.subr.bf16.mxu0 0
        %2245 = vmatpush1.bf16.msra.mxu0 %v2221
        %2246 = vmatprep.subr.bf16.mxu0 0
        %2247 = vmatpush1.bf16.msra.mxu0 0
        %2248 = vmatprep.subr.bf16.mxu0 0
        %2249 = vmatpush1.bf16.msra.mxu0 0
        %2250 = vmatprep.subr.bf16.mxu0 0
        %2251 = vmatpush1.bf16.msra.mxu0 0
        %2252 = vmatprep.subr.bf16.mxu0 0
        %2253 = vmatpush1.bf16.msra.mxu0 0
        %2254 = vmatprep.subr.bf16.mxu0 0
        %2255 = vmatpush1.bf16.msra.mxu0 0
        %2256 = vmatprep.subr.bf16.mxu0 0
        %2257 = vmatpush1.bf16.msra.mxu0 0
        %2258 = vmatprep.subr.bf16.mxu0 0
        %2259 = vmatpush1.bf16.msra.mxu0 0
        %2260 = vmatprep.subr.bf16.mxu0 0
        %2261 = vmatpush1.bf16.msra.mxu0 0
        %2262 = vmatprep.mubr.bf16.mxu0 0
        %2263 = vmatmul.mubr.bf16.gmra.mrb[0].mxu0 %v2162
        %v2264 = vpop.f32.mrb[0].mxu0
        %v2265 = vadd.f32 0.0, %v2264
        %v2266 = vpop.f32.mrb[0].mxu0
        %v2267 = vpop.f32.mrb[0].mxu0
        %v2268 = vadd.f32 0.0, %v2267
        %v2269 = vpop.f32.mrb[0].mxu0
        %2270 = vmatprep.mubr.bf16.mxu0 0
        %2271 = vmatmul.mubr.bf16.gmra.mrb[0].mxu0 %v2163
        %v2272 = vpop.f32.mrb[0].mxu0
        %v2273 = vadd.f32 0.0, %v2272
        %v2274 = vpop.f32.mrb[0].mxu0
        %v2275 = vpop.f32.mrb[0].mxu0
        %v2276 = vadd.f32 0.0, %v2275
        %v2277 = vpop.f32.mrb[0].mxu0
        %2278 = vmatprep.mubr.bf16.mxu0 0
        %2279 = vmatmul.mubr.bf16.gmra.mrb[0].mxu0 %v2164
        %v2280 = vpop.f32.mrb[0].mxu0
        %v2281 = vpop.f32.mrb[0].mxu0
        %v2282 = vpop.f32.mrb[0].mxu0
        %v2283 = vadd.f32 0.0, %v2282
        %v2284 = vpop.f32.mrb[0].mxu0
        %2285 = vmatprep.mubr.bf16.mxu0 0
        %2286 = vmatmul.mubr.bf16.gmra.mrb[0].mxu0 %v2165
        %v2287 = vpop.f32.mrb[0].mxu0
        %v2288 = vadd.f32 0.0, %v2287
        %v2289 = vpop.f32.mrb[0].mxu0
        %v2290 = vpop.f32.mrb[0].mxu0
        %v2291 = vadd.f32 0.0, %v2290
        %v2292 = vpop.f32.mrb[0].mxu0
        %2293 = vmatprep.mubr.bf16.mxu0 0
        %2294 = vmatmul.mubr.bf16.gmra.mrb[0].mxu0 %v2166
        %v2295 = vpop.f32.mrb[0].mxu0
        %v2296 = vadd.f32 0.0, %v2295
        %v2297 = vpop.f32.mrb[0].mxu0
        %v2298 = vpop.f32.mrb[0].mxu0
        %v2299 = vpop.f32.mrb[0].mxu0
        %2300 = vmatprep.mubr.bf16.mxu0 0
        %2301 = vmatmul.mubr.bf16.gmra.mrb[0].mxu0 %v2167
        %v2302 = vpop.f32.mrb[0].mxu0
        %v2303 = vadd.f32 0.0, %v2302
        %v2304 = vpop.f32.mrb[0].mxu0
        %v2305 = vpop.f32.mrb[0].mxu0
        %v2306 = vadd.f32 0.0, %v2305
        %v2307 = vpop.f32.mrb[0].mxu0
        %2308 = vmatprep.mubr.bf16.mxu0 0
        %2309 = vmatmul.mubr.bf16.gmra.mrb[0].mxu0 %v2168
        %v2310 = vpop.f32.mrb[0].mxu0
        %v2311 = vadd.f32 0.0, %v2310
        %v2312 = vpop.f32.mrb[0].mxu0
        %v2313 = vpop.f32.mrb[0].mxu0
        %v2314 = vadd.f32 0.0, %v2313
        %v2315 = vpop.f32.mrb[0].mxu0
        %2316 = vmatprep.mubr.bf16.mxu0 0
        %2317 = vmatmul.mubr.bf16.gmra.mrb[0].mxu0 %v2169
        %v2318 = vpop.f32.mrb[0].mxu0
        %v2319 = vpop.f32.mrb[0].mxu0
        %v2320 = vpop.f32.mrb[0].mxu0
        %v2321 = vadd.f32 0.0, %v2320
        %v2322 = vpop.f32.mrb[0].mxu0
        %2323 = vmatprep.mubr.bf16.mxu0 0
        %2324 = vmatmul.mubr.bf16.gmra.mrb[0].mxu0 %v2170
        %v2325 = vpop.f32.mrb[0].mxu0
        %v2326 = vadd.f32 0.0, %v2325
        %v2327 = vpop.f32.mrb[0].mxu0
        %v2328 = vpop.f32.mrb[0].mxu0
        %v2329 = vadd.f32 0.0, %v2328
        %v2330 = vpop.f32.mrb[0].mxu0
        %2331 = vmatprep.mubr.bf16.mxu0 0
        %2332 = vmatmul.mubr.bf16.gmra.mrb[0].mxu0 %v2171
        %v2333 = vpop.f32.mrb[0].mxu0
        %v2334 = vadd.f32 0.0, %v2333
        %v2335 = vpop.f32.mrb[0].mxu0
        %v2336 = vpop.f32.mrb[0].mxu0
        %v2337 = vpop.f32.mrb[0].mxu0
        %2338 = vdwg.mxu0
        %v2340 = vunpack.c.l.b16 %v2072
        %v2341 = vpack.c.b16 %v2143, %v2340
        %v2342 = vpack.c.b16 %v2145, %v2144
        %v2343 = vpack.c.b16 %v2147, %v2146
        %v2344 = vpack.c.b16 %v2149, %v2148
        %v2345 = vpack.c.b16 %v2151, %v2150
        %v2346 = vpack.c.b16 %v2153, %v2152
        %v2347 = vpack.c.b16 %v2155, %v2154
        %v2348 = vpack.c.b16 %v2157, %v2156
        %v2349 = vpack.c.b16 %v2159, %v2158
        %v2350 = vpack.c.b16 %v2161, %v2160
        %v2352 = vshrl.u32 %v2341, 16
        %v2354 = vrot.slane %v2352, 3
        %v2355 = vshll.u32 %v2341, 16
        %v2357 = vrot.slane %v2355, 4
        %v2358 = vor.u32 %v2354, %v2357
        %v2360 = vshrl.u32 %v2342, 16
        %v2362 = vrot.slane %v2360, 3
        %v2363 = vshll.u32 %v2342, 16
        %v2365 = vrot.slane %v2363, 4
        %v2366 = vor.u32 %v2362, %v2365
        %v2367 = vsel %vm1313, %v2358, %v2366
        %v2369 = vshrl.u32 %v2343, 16
        %v2371 = vrot.slane %v2369, 3
        %v2372 = vshll.u32 %v2343, 16
        %v2374 = vrot.slane %v2372, 4
        %v2375 = vor.u32 %v2371, %v2374
        %v2376 = vsel %vm1313, %v2366, %v2375
        %v2378 = vshrl.u32 %v2344, 16
        %v2380 = vrot.slane %v2378, 3
        %v2381 = vshll.u32 %v2344, 16
        %v2383 = vrot.slane %v2381, 4
        %v2384 = vor.u32 %v2380, %v2383
        %v2385 = vsel %vm1313, %v2375, %v2384
        %v2387 = vshrl.u32 %v2345, 16
        %v2389 = vrot.slane %v2387, 3
        %v2390 = vshll.u32 %v2345, 16
        %v2392 = vrot.slane %v2390, 4
        %v2393 = vor.u32 %v2389, %v2392
        %v2394 = vsel %vm1313, %v2384, %v2393
        %v2396 = vshrl.u32 %v2346, 16
        %v2398 = vrot.slane %v2396, 3
        %v2399 = vshll.u32 %v2346, 16
        %v2401 = vrot.slane %v2399, 4
        %v2402 = vor.u32 %v2398, %v2401
        %v2403 = vsel %vm1313, %v2393, %v2402
        %v2405 = vshrl.u32 %v2347, 16
        %v2407 = vrot.slane %v2405, 3
        %v2408 = vshll.u32 %v2347, 16
        %v2410 = vrot.slane %v2408, 4
        %v2411 = vor.u32 %v2407, %v2410
        %v2412 = vsel %vm1313, %v2402, %v2411
        %v2414 = vshrl.u32 %v2348, 16
        %v2416 = vrot.slane %v2414, 3
        %v2417 = vshll.u32 %v2348, 16
        %v2419 = vrot.slane %v2417, 4
        %v2420 = vor.u32 %v2416, %v2419
        %v2421 = vsel %vm1313, %v2411, %v2420
        %v2423 = vshrl.u32 %v2349, 16
        %v2425 = vrot.slane %v2423, 3
        %v2426 = vshll.u32 %v2349, 16
        %v2428 = vrot.slane %v2426, 4
        %v2429 = vor.u32 %v2425, %v2428
        %v2430 = vsel %vm1313, %v2420, %v2429
        %v2432 = vshrl.u32 %v2350, 16
        %v2434 = vrot.slane %v2432, 3
        %v2435 = vshll.u32 %v2350, 16
        %v2437 = vrot.slane %v2435, 4
        %v2438 = vor.u32 %v2434, %v2437
        %v2439 = vsel %vm1313, %v2429, %v2438
        %v2466 = vunpack.c.l.b16 %v2092
        %v2467 = vunpack.c.l.b16 %v2093
        %v2468 = vunpack.c.l.b16 %v2094
        %v2469 = vunpack.c.l.b16 %v2095
        %v2470 = vunpack.c.l.b16 %v2096
        %v2471 = vunpack.c.l.b16 %v2097
        %v2472 = vunpack.c.l.b16 %v2098
        %v2473 = vunpack.c.l.b16 %v2099
        %v2474 = vunpack.c.l.b16 %v2100
        %v2475 = vunpack.c.l.b16 %v2101
        %v2476 = vunpack.c.l.b16 %v2102
        %v2477 = vunpack.c.l.b16 %v2103
        %v2478 = vunpack.c.l.b16 %v2104
        %v2479 = vunpack.c.l.b16 %v2105
        %v2480 = vunpack.c.l.b16 %v2106
        %v2481 = vunpack.c.l.b16 %v2107
        %v2482 = vpack.c.b16 %v2467, %v2466
        %v2483 = vpack.c.b16 %v2469, %v2468
        %v2484 = vpack.c.b16 %v2471, %v2470
        %v2485 = vpack.c.b16 %v2473, %v2472
        %v2486 = vpack.c.b16 %v2475, %v2474
        %v2487 = vpack.c.b16 %v2477, %v2476
        %v2488 = vpack.c.b16 %v2479, %v2478
        %v2489 = vpack.c.b16 %v2481, %v2480
        %2498 = vmatprep.subr.bf16.mxu0 0
        %2499 = vmatpush1.bf16.msra.mxu0 %v2482
        %2500 = vmatprep.subr.bf16.mxu0 0
        %2501 = vmatpush1.bf16.msra.mxu0 %v2483
        %2502 = vmatprep.subr.bf16.mxu0 0
        %2503 = vmatpush1.bf16.msra.mxu0 %v2484
        %2504 = vmatprep.subr.bf16.mxu0 0
        %2505 = vmatpush1.bf16.msra.mxu0 %v2485
        %2506 = vmatprep.subr.bf16.mxu0 0
        %2507 = vmatpush1.bf16.msra.mxu0 %v2486
        %2508 = vmatprep.subr.bf16.mxu0 0
        %2509 = vmatpush1.bf16.msra.mxu0 %v2487
        %2510 = vmatprep.subr.bf16.mxu0 0
        %2511 = vmatpush1.bf16.msra.mxu0 %v2488
        %2512 = vmatprep.subr.bf16.mxu0 0
        %2513 = vmatpush1.bf16.msra.mxu0 %v2489
        %2514 = vmatprep.subr.bf16.mxu0 0
        %2515 = vmatpush1.bf16.msra.mxu0 0
        %2516 = vmatprep.subr.bf16.mxu0 0
        %2517 = vmatpush1.bf16.msra.mxu0 0
        %2518 = vmatprep.subr.bf16.mxu0 0
        %2519 = vmatpush1.bf16.msra.mxu0 0
        %2520 = vmatprep.subr.bf16.mxu0 0
        %2521 = vmatpush1.bf16.msra.mxu0 0
        %2522 = vmatprep.subr.bf16.mxu0 0
        %2523 = vmatpush1.bf16.msra.mxu0 0
        %2524 = vmatprep.subr.bf16.mxu0 0
        %2525 = vmatpush1.bf16.msra.mxu0 0
        %2526 = vmatprep.subr.bf16.mxu0 0
        %2527 = vmatpush1.bf16.msra.mxu0 0
        %2528 = vmatprep.subr.bf16.mxu0 0
        %2529 = vmatpush1.bf16.msra.mxu0 0
        %2530 = vmatprep.mubr.bf16.mxu0 0
        %2531 = vmatmul.mubr.bf16.gmra.mrb[0].mxu0 %v2367
        %v2532 = vpop.f32.mrb[0].mxu0
        %v2533 = vadd.f32 %v2265, %v2532
        %v2534 = vpop.f32.mrb[0].mxu0
        %v2535 = vpop.f32.mrb[0].mxu0
        %v2536 = vadd.f32 %v2268, %v2535
        %v2537 = vpop.f32.mrb[0].mxu0
        %2538 = vmatprep.mubr.bf16.mxu0 0
        %2539 = vmatmul.mubr.bf16.gmra.mrb[0].mxu0 %v2376
        %v2540 = vpop.f32.mrb[0].mxu0
        %v2541 = vadd.f32 %v2273, %v2540
        %v2542 = vpop.f32.mrb[0].mxu0
        %v2543 = vpop.f32.mrb[0].mxu0
        %v2544 = vadd.f32 %v2276, %v2543
        %v2545 = vpop.f32.mrb[0].mxu0
        %2546 = vmatprep.mubr.bf16.mxu0 0
        %2547 = vmatmul.mubr.bf16.gmra.mrb[0].mxu0 %v2385
        %v2548 = vpop.f32.mrb[0].mxu0
        %v2549 = vpop.f32.mrb[0].mxu0
        %v2550 = vpop.f32.mrb[0].mxu0
        %v2551 = vadd.f32 %v2283, %v2550
        %v2552 = vpop.f32.mrb[0].mxu0
        %2553 = vmatprep.mubr.bf16.mxu0 0
        %2554 = vmatmul.mubr.bf16.gmra.mrb[0].mxu0 %v2394
        %v2555 = vpop.f32.mrb[0].mxu0
        %v2556 = vadd.f32 %v2288, %v2555
        %v2557 = vpop.f32.mrb[0].mxu0
        %v2558 = vpop.f32.mrb[0].mxu0
        %v2559 = vadd.f32 %v2291, %v2558
        %v2560 = vpop.f32.mrb[0].mxu0
        %2561 = vmatprep.mubr.bf16.mxu0 0
        %2562 = vmatmul.mubr.bf16.gmra.mrb[0].mxu0 %v2403
        %v2563 = vpop.f32.mrb[0].mxu0
        %v2564 = vadd.f32 %v2296, %v2563
        %v2565 = vpop.f32.mrb[0].mxu0
        %v2566 = vpop.f32.mrb[0].mxu0
        %v2567 = vpop.f32.mrb[0].mxu0
        %2568 = vmatprep.mubr.bf16.mxu0 0
        %2569 = vmatmul.mubr.bf16.gmra.mrb[0].mxu0 %v2412
        %v2570 = vpop.f32.mrb[0].mxu0
        %v2571 = vadd.f32 %v2303, %v2570
        %v2572 = vpop.f32.mrb[0].mxu0
        %v2573 = vpop.f32.mrb[0].mxu0
        %v2574 = vadd.f32 %v2306, %v2573
        %v2575 = vpop.f32.mrb[0].mxu0
        %2576 = vmatprep.mubr.bf16.mxu0 0
        %2577 = vmatmul.mubr.bf16.gmra.mrb[0].mxu0 %v2421
        %v2578 = vpop.f32.mrb[0].mxu0
        %v2579 = vadd.f32 %v2311, %v2578
        %v2580 = vpop.f32.mrb[0].mxu0
        %v2581 = vpop.f32.mrb[0].mxu0
        %v2582 = vadd.f32 %v2314, %v2581
        %v2583 = vpop.f32.mrb[0].mxu0
        %2584 = vmatprep.mubr.bf16.mxu0 0
        %2585 = vmatmul.mubr.bf16.gmra.mrb[0].mxu0 %v2430
        %v2586 = vpop.f32.mrb[0].mxu0
        %v2587 = vpop.f32.mrb[0].mxu0
        %v2588 = vpop.f32.mrb[0].mxu0
        %v2589 = vadd.f32 %v2321, %v2588
        %v2590 = vpop.f32.mrb[0].mxu0
        %2591 = vmatprep.mubr.bf16.mxu0 0
        %2592 = vmatmul.mubr.bf16.gmra.mrb[0].mxu0 %v2439
        %v2593 = vpop.f32.mrb[0].mxu0
        %v2594 = vadd.f32 %v2326, %v2593
        %v2595 = vpop.f32.mrb[0].mxu0
        %v2596 = vpop.f32.mrb[0].mxu0
        %v2597 = vadd.f32 %v2329, %v2596
        %v2598 = vpop.f32.mrb[0].mxu0
        %2599 = vmatprep.mubr.bf16.mxu0 0
        %2600 = vmatmul.mubr.bf16.gmra.mrb[0].mxu0 %v2438
        %v2601 = vpop.f32.mrb[0].mxu0
        %v2602 = vadd.f32 %v2334, %v2601
        %v2603 = vpop.f32.mrb[0].mxu0
        %v2604 = vpop.f32.mrb[0].mxu0
        %v2605 = vpop.f32.mrb[0].mxu0
        %2606 = vdwg.mxu0
        %v2607 = vld [vmem:[#allocation3 + $0x4] sm:$0xf]
        %v2608 = vld [vmem:[#allocation3 + $0x8] sm:$0xf]
        %v2609 = vld [vmem:[#allocation3 + $0xc] sm:$0xf]
        %v2610 = vld [vmem:[#allocation3 + $0x10] sm:$0xf]
        %v2611 = vld [vmem:[#allocation3 + $0x14] sm:$0xf]
        %v2612 = vld [vmem:[#allocation3 + $0x18] sm:$0xf]
        %v2613 = vld [vmem:[#allocation3 + $0x1c] sm:$0xf]
        %v2614 = vld [vmem:[#allocation3 + $0x20] sm:$0xf]
        %v2615 = vld [vmem:[#allocation3 + $0x24] sm:$0xf]
        %v2616 = vld [vmem:[#allocation3 + $0x28] sm:$0xf]
        %v2617 = vld [vmem:[#allocation3 + $0x2c] sm:$0xf]
        %v2618 = vld [vmem:[#allocation3 + $0x30] sm:$0xf]
        %v2619 = vld [vmem:[#allocation3 + $0x34] sm:$0xf]
        %v2620 = vld [vmem:[#allocation3 + $0x38] sm:$0xf]
        %v2621 = vld [vmem:[#allocation3 + $0x3c] sm:$0xf]
        %v2622 = vld [vmem:[#allocation3 + $0x40] sm:$0xf]
        %v2623 = vld [vmem:[#allocation3 + $0x44] sm:$0xf]
        %v2624 = vld [vmem:[#allocation3 + $0x48] sm:$0xf]
        %v2625 = vld [vmem:[#allocation3 + $0x4c] sm:$0xf]
        %v2626 = vld [vmem:[#allocation3 + $0x50] sm:$0x1]
        %v2627 = vld [vmem:[%s1 + $0x200] sm:$0xf]
        %v2628 = vld [vmem:[%s1 + $0x204] sm:$0xf]
        %v2629 = vld [vmem:[%s1 + $0x208] sm:$0xf]
        %v2630 = vld [vmem:[%s1 + $0x20c] sm:$0xf]
        %v2631 = vld [vmem:[%s1 + $0x210] sm:$0xf]
        %v2632 = vld [vmem:[%s1 + $0x214] sm:$0xf]
        %v2633 = vld [vmem:[%s1 + $0x218] sm:$0xf]
        %v2634 = vld [vmem:[%s1 + $0x21c] sm:$0xf]
        %v2635 = vld [vmem:[%s1 + $0x220] sm:$0xf]
        %v2636 = vld [vmem:[%s1 + $0x224] sm:$0xf]
        %v2637 = vld [vmem:[%s1 + $0x228] sm:$0xf]
        %v2638 = vld [vmem:[%s1 + $0x22c] sm:$0xf]
        %v2639 = vld [vmem:[%s1 + $0x230] sm:$0xf]
        %v2640 = vld [vmem:[%s1 + $0x234] sm:$0xf]
        %v2641 = vld [vmem:[%s1 + $0x238] sm:$0xf]
        %v2642 = vld [vmem:[%s1 + $0x23c] sm:$0xf]
        %v2663 = vunpack.c.l.b16 %v2607
        %v2664 = vunpack.c.l.b16 %v2608
        %v2665 = vunpack.c.l.b16 %v2609
        %v2666 = vunpack.c.l.b16 %v2610
        %v2667 = vunpack.c.l.b16 %v2611
        %v2668 = vunpack.c.l.b16 %v2612
        %v2669 = vunpack.c.l.b16 %v2613
        %v2670 = vunpack.c.l.b16 %v2614
        %v2671 = vunpack.c.l.b16 %v2615
        %v2672 = vunpack.c.l.b16 %v2616
        %v2673 = vunpack.c.l.b16 %v2617
        %v2674 = vunpack.c.l.b16 %v2618
        %v2675 = vunpack.c.l.b16 %v2619
        %v2676 = vunpack.c.l.b16 %v2620
        %v2677 = vunpack.c.l.b16 %v2621
        %v2678 = vunpack.c.l.b16 %v2622
        %v2679 = vunpack.c.l.b16 %v2623
        %v2680 = vunpack.c.l.b16 %v2624
        %v2681 = vunpack.c.l.b16 %v2625
        %v2682 = vunpack.c.l.b16 %v2626
        %v2683 = vpack.c.b16 %v2664, %v2663
        %v2684 = vpack.c.b16 %v2666, %v2665
        %v2685 = vpack.c.b16 %v2668, %v2667
        %v2686 = vpack.c.b16 %v2670, %v2669
        %v2687 = vpack.c.b16 %v2672, %v2671
        %v2688 = vpack.c.b16 %v2674, %v2673
        %v2689 = vpack.c.b16 %v2676, %v2675
        %v2690 = vpack.c.b16 %v2678, %v2677
        %v2691 = vpack.c.b16 %v2680, %v2679
        %v2692 = vpack.c.b16 %v2682, %v2681
        %v2694 = vshrl.u32 %v2683, 16
        %v2696 = vshll.u32 %v2683, 16
        %v2698 = vrot.slane %v2696, 1
        %v2699 = vor.u32 %v2694, %v2698
        %v2701 = vshll.u32 %v2684, 16
        %v2703 = vrot.slane %v2701, 1
        %v2704 = vsel %vm277, %v2699, %v2703
        %v2705 = vshrl.u32 %v2684, 16
        %v2707 = vor.u32 %v2705, %v2703
        %v2709 = vshll.u32 %v2685, 16
        %v2711 = vrot.slane %v2709, 1
        %v2712 = vsel %vm277, %v2707, %v2711
        %v2713 = vshrl.u32 %v2685, 16
        %v2715 = vor.u32 %v2713, %v2711
        %v2717 = vshll.u32 %v2686, 16
        %v2719 = vrot.slane %v2717, 1
        %v2720 = vsel %vm277, %v2715, %v2719
        %v2721 = vshrl.u32 %v2686, 16
        %v2723 = vor.u32 %v2721, %v2719
        %v2725 = vshll.u32 %v2687, 16
        %v2727 = vrot.slane %v2725, 1
        %v2728 = vsel %vm277, %v2723, %v2727
        %v2729 = vshrl.u32 %v2687, 16
        %v2731 = vor.u32 %v2729, %v2727
        %v2733 = vshll.u32 %v2688, 16
        %v2735 = vrot.slane %v2733, 1
        %v2736 = vsel %vm277, %v2731, %v2735
        %v2737 = vshrl.u32 %v2688, 16
        %v2739 = vor.u32 %v2737, %v2735
        %v2741 = vshll.u32 %v2689, 16
        %v2743 = vrot.slane %v2741, 1
        %v2744 = vsel %vm277, %v2739, %v2743
        %v2745 = vshrl.u32 %v2689, 16
        %v2747 = vor.u32 %v2745, %v2743
        %v2749 = vshll.u32 %v2690, 16
        %v2751 = vrot.slane %v2749, 1
        %v2752 = vsel %vm277, %v2747, %v2751
        %v2753 = vshrl.u32 %v2690, 16
        %v2755 = vor.u32 %v2753, %v2751
        %v2757 = vshll.u32 %v2691, 16
        %v2759 = vrot.slane %v2757, 1
        %v2760 = vsel %vm277, %v2755, %v2759
        %v2761 = vshrl.u32 %v2691, 16
        %v2763 = vor.u32 %v2761, %v2759
        %v2765 = vshll.u32 %v2692, 16
        %v2767 = vrot.slane %v2765, 1
        %v2768 = vsel %vm277, %v2763, %v2767
        %v2769 = vshrl.u32 %v2692, 16
        %v2771 = vor.u32 %v2769, %v2767
        %v2798 = vunpack.c.l.b16 %v2627
        %v2799 = vunpack.c.l.b16 %v2628
        %v2800 = vunpack.c.l.b16 %v2629
        %v2801 = vunpack.c.l.b16 %v2630
        %v2802 = vunpack.c.l.b16 %v2631
        %v2803 = vunpack.c.l.b16 %v2632
        %v2804 = vunpack.c.l.b16 %v2633
        %v2805 = vunpack.c.l.b16 %v2634
        %v2806 = vunpack.c.l.b16 %v2635
        %v2807 = vunpack.c.l.b16 %v2636
        %v2808 = vunpack.c.l.b16 %v2637
        %v2809 = vunpack.c.l.b16 %v2638
        %v2810 = vunpack.c.l.b16 %v2639
        %v2811 = vunpack.c.l.b16 %v2640
        %v2812 = vunpack.c.l.b16 %v2641
        %v2813 = vunpack.c.l.b16 %v2642
        %v2814 = vpack.c.b16 %v2799, %v2798
        %v2815 = vpack.c.b16 %v2801, %v2800
        %v2816 = vpack.c.b16 %v2803, %v2802
        %v2817 = vpack.c.b16 %v2805, %v2804
        %v2818 = vpack.c.b16 %v2807, %v2806
        %v2819 = vpack.c.b16 %v2809, %v2808
        %v2820 = vpack.c.b16 %v2811, %v2810
        %v2821 = vpack.c.b16 %v2813, %v2812
        %2830 = vmatprep.subr.bf16.mxu0 0
        %2831 = vmatpush1.bf16.msra.mxu0 %v2814
        %2832 = vmatprep.subr.bf16.mxu0 0
        %2833 = vmatpush1.bf16.msra.mxu0 %v2815
        %2834 = vmatprep.subr.bf16.mxu0 0
        %2835 = vmatpush1.bf16.msra.mxu0 %v2816
        %2836 = vmatprep.subr.bf16.mxu0 0
        %2837 = vmatpush1.bf16.msra.mxu0 %v2817
        %2838 = vmatprep.subr.bf16.mxu0 0
        %2839 = vmatpush1.bf16.msra.mxu0 %v2818
        %2840 = vmatprep.subr.bf16.mxu0 0
        %2841 = vmatpush1.bf16.msra.mxu0 %v2819
        %2842 = vmatprep.subr.bf16.mxu0 0
        %2843 = vmatpush1.bf16.msra.mxu0 %v2820
        %2844 = vmatprep.subr.bf16.mxu0 0
        %2845 = vmatpush1.bf16.msra.mxu0 %v2821
        %2846 = vmatprep.subr.bf16.mxu0 0
        %2847 = vmatpush1.bf16.msra.mxu0 0
        %2848 = vmatprep.subr.bf16.mxu0 0
        %2849 = vmatpush1.bf16.msra.mxu0 0
        %2850 = vmatprep.subr.bf16.mxu0 0
        %2851 = vmatpush1.bf16.msra.mxu0 0
        %2852 = vmatprep.subr.bf16.mxu0 0
        %2853 = vmatpush1.bf16.msra.mxu0 0
        %2854 = vmatprep.subr.bf16.mxu0 0
        %2855 = vmatpush1.bf16.msra.mxu0 0
        %2856 = vmatprep.subr.bf16.mxu0 0
        %2857 = vmatpush1.bf16.msra.mxu0 0
        %2858 = vmatprep.subr.bf16.mxu0 0
        %2859 = vmatpush1.bf16.msra.mxu0 0
        %2860 = vmatprep.subr.bf16.mxu0 0
        %2861 = vmatpush1.bf16.msra.mxu0 0
        %2862 = vmatprep.mubr.bf16.mxu0 0
        %2863 = vmatmul.mubr.bf16.gmra.mrb[0].mxu0 %v2704
        %v2864 = vpop.f32.mrb[0].mxu0
        %v2865 = vadd.f32 0.0, %v2864
        %v2866 = vpop.f32.mrb[0].mxu0
        %v2867 = vpop.f32.mrb[0].mxu0
        %v2868 = vadd.f32 0.0, %v2867
        %v2869 = vpop.f32.mrb[0].mxu0
        %2870 = vmatprep.mubr.bf16.mxu0 0
        %2871 = vmatmul.mubr.bf16.gmra.mrb[0].mxu0 %v2712
        %v2872 = vpop.f32.mrb[0].mxu0
        %v2873 = vadd.f32 0.0, %v2872
        %v2874 = vpop.f32.mrb[0].mxu0
        %v2875 = vpop.f32.mrb[0].mxu0
        %v2876 = vadd.f32 0.0, %v2875
        %v2877 = vpop.f32.mrb[0].mxu0
        %2878 = vmatprep.mubr.bf16.mxu0 0
        %2879 = vmatmul.mubr.bf16.gmra.mrb[0].mxu0 %v2720
        %v2880 = vpop.f32.mrb[0].mxu0
        %v2881 = vpop.f32.mrb[0].mxu0
        %v2882 = vpop.f32.mrb[0].mxu0
        %v2883 = vadd.f32 0.0, %v2882
        %v2884 = vpop.f32.mrb[0].mxu0
        %2885 = vmatprep.mubr.bf16.mxu0 0
        %2886 = vmatmul.mubr.bf16.gmra.mrb[0].mxu0 %v2728
        %v2887 = vpop.f32.mrb[0].mxu0
        %v2888 = vadd.f32 0.0, %v2887
        %v2889 = vpop.f32.mrb[0].mxu0
        %v2890 = vpop.f32.mrb[0].mxu0
        %v2891 = vadd.f32 0.0, %v2890
        %v2892 = vpop.f32.mrb[0].mxu0
        %2893 = vmatprep.mubr.bf16.mxu0 0
        %2894 = vmatmul.mubr.bf16.gmra.mrb[0].mxu0 %v2736
        %v2895 = vpop.f32.mrb[0].mxu0
        %v2896 = vadd.f32 0.0, %v2895
        %v2897 = vpop.f32.mrb[0].mxu0
        %v2898 = vpop.f32.mrb[0].mxu0
        %v2899 = vpop.f32.mrb[0].mxu0
        %2900 = vmatprep.mubr.bf16.mxu0 0
        %2901 = vmatmul.mubr.bf16.gmra.mrb[0].mxu0 %v2744
        %v2902 = vpop.f32.mrb[0].mxu0
        %v2903 = vadd.f32 0.0, %v2902
        %v2904 = vpop.f32.mrb[0].mxu0
        %v2905 = vpop.f32.mrb[0].mxu0
        %v2906 = vadd.f32 0.0, %v2905
        %v2907 = vpop.f32.mrb[0].mxu0
        %2908 = vmatprep.mubr.bf16.mxu0 0
        %2909 = vmatmul.mubr.bf16.gmra.mrb[0].mxu0 %v2752
        %v2910 = vpop.f32.mrb[0].mxu0
        %v2911 = vadd.f32 0.0, %v2910
        %v2912 = vpop.f32.mrb[0].mxu0
        %v2913 = vpop.f32.mrb[0].mxu0
        %v2914 = vadd.f32 0.0, %v2913
        %v2915 = vpop.f32.mrb[0].mxu0
        %2916 = vmatprep.mubr.bf16.mxu0 0
        %2917 = vmatmul.mubr.bf16.gmra.mrb[0].mxu0 %v2760
        %v2918 = vpop.f32.mrb[0].mxu0
        %v2919 = vpop.f32.mrb[0].mxu0
        %v2920 = vpop.f32.mrb[0].mxu0
        %v2921 = vadd.f32 0.0, %v2920
        %v2922 = vpop.f32.mrb[0].mxu0
        %2923 = vmatprep.mubr.bf16.mxu0 0
        %2924 = vmatmul.mubr.bf16.gmra.mrb[0].mxu0 %v2768
        %v2925 = vpop.f32.mrb[0].mxu0
        %v2926 = vadd.f32 0.0, %v2925
        %v2927 = vpop.f32.mrb[0].mxu0
        %v2928 = vpop.f32.mrb[0].mxu0
        %v2929 = vadd.f32 0.0, %v2928
        %v2930 = vpop.f32.mrb[0].mxu0
        %2931 = vmatprep.mubr.bf16.mxu0 0
        %2932 = vmatmul.mubr.bf16.gmra.mrb[0].mxu0 %v2771
        %v2933 = vpop.f32.mrb[0].mxu0
        %v2934 = vadd.f32 0.0, %v2933
        %v2935 = vpop.f32.mrb[0].mxu0
        %v2936 = vpop.f32.mrb[0].mxu0
        %v2937 = vpop.f32.mrb[0].mxu0
        %2938 = vdwg.mxu0
        %v2939 = vadd.f32 %v2533, %v2865
        %v2940 = vadd.f32 %v2536, %v2868
        %v2941 = vadd.f32 %v2541, %v2873
        %v2942 = vadd.f32 %v2544, %v2876
        %v2943 = vadd.f32 %v2551, %v2883
        %v2944 = vadd.f32 %v2556, %v2888
        %v2945 = vadd.f32 %v2559, %v2891
        %v2946 = vadd.f32 %v2564, %v2896
        %v2947 = vadd.f32 %v2571, %v2903
        %v2948 = vadd.f32 %v2574, %v2906
        %v2949 = vadd.f32 %v2579, %v2911
        %v2950 = vadd.f32 %v2582, %v2914
        %v2951 = vadd.f32 %v2589, %v2921
        %v2952 = vadd.f32 %v2594, %v2926
        %v2953 = vadd.f32 %v2597, %v2929
        %v2954 = vadd.f32 %v2602, %v2934
        %v2955 = vld [vmem:[%s2 + $0x6] sm:$0x1]
        %v2956 = vld [vmem:[%s2 + $0x7] sm:$0x1]
        %v2957 = vlaneseq
        %v2958 = vshrl.u32 %v2957, 7
        %v2959 = vsub.s32 0, %v2958
        %v2960 = vrot.slane %v2955, %v2959
        %v2961 = vmul.f32 %v2939, %v2960
        %v2962 = vmul.f32 %v2940, %v2960
        %v2963 = vmul.f32 %v2941, %v2960
        %v2964 = vmul.f32 %v2942, %v2960
        %v2965 = vmul.f32 %v2943, %v2960
        %v2966 = vmul.f32 %v2944, %v2960
        %v2967 = vmul.f32 %v2945, %v2960
        %v2968 = vmul.f32 %v2946, %v2960
        %v2969 = vmul.f32 %v2947, %v2960
        %v2970 = vmul.f32 %v2948, %v2960
        %v2971 = vmul.f32 %v2949, %v2960
        %v2972 = vmul.f32 %v2950, %v2960
        %v2973 = vmul.f32 %v2951, %v2960
        %v2974 = vmul.f32 %v2952, %v2960
        %v2975 = vmul.f32 %v2953, %v2960
        %v2976 = vmul.f32 %v2954, %v2960
        %v2977 = vlaneseq
        %v2978 = vshrl.u32 %v2977, 7
        %v2979 = vsub.s32 0, %v2978
        %v2980 = vrot.slane %v2956, %v2979
        %v2981 = vadd.f32 %v2961, %v2980
        %v2982 = vadd.f32 %v2962, %v2980
        %v2983 = vadd.f32 %v2963, %v2980
        %v2984 = vadd.f32 %v2964, %v2980
        %v2985 = vadd.f32 %v2965, %v2980
        %v2986 = vadd.f32 %v2966, %v2980
        %v2987 = vadd.f32 %v2967, %v2980
        %v2988 = vadd.f32 %v2968, %v2980
        %v2989 = vadd.f32 %v2969, %v2980
        %v2990 = vadd.f32 %v2970, %v2980
        %v2991 = vadd.f32 %v2971, %v2980
        %v2992 = vadd.f32 %v2972, %v2980
        %v2993 = vadd.f32 %v2973, %v2980
        %v2994 = vadd.f32 %v2974, %v2980
        %v2995 = vadd.f32 %v2975, %v2980
        %v2996 = vadd.f32 %v2976, %v2980
        %v2997 = vmax.f32 %v2981, 0.0
        %v2998 = vmax.f32 %v2982, 0.0
        %v2999 = vmax.f32 %v2983, 0.0
        %v3000 = vmax.f32 %v2984, 0.0
        %v3001 = vmax.f32 %v2985, 0.0
        %v3002 = vmax.f32 %v2986, 0.0
        %v3003 = vmax.f32 %v2987, 0.0
        %v3004 = vmax.f32 %v2988, 0.0
        %v3005 = vmax.f32 %v2989, 0.0
        %v3006 = vmax.f32 %v2990, 0.0
        %v3007 = vmax.f32 %v2991, 0.0
        %v3008 = vmax.f32 %v2992, 0.0
        %v3009 = vmax.f32 %v2993, 0.0
        %v3010 = vmax.f32 %v2994, 0.0
        %v3011 = vmax.f32 %v2995, 0.0
        %v3012 = vmax.f32 %v2996, 0.0
        %v3013 = vpack.c.bf16 %v2998, %v2997
        %v3014 = vpack.c.bf16 %v3000, %v2999
        %v3017 = vunpack.c.l.b16 %v3013
        %v3018 = vunpack.c.h.b16 %v3013
        %v3019 = vunpack.c.l.b16 %v3014
        %v3020 = vunpack.c.h.b16 %v3014
        %v3021 = vpack.c.b16 %v3017, %v3017
        %v3022 = vpack.c.b16 %v3018, %v3018
        %v3023 = vpack.c.b16 %v3019, %v3019
        %v3024 = vpack.c.b16 %v3020, %v3020
        %3029 = vst [vmem:[#allocation2 + $0x4] sm:$0xf] %v3021
        %3030 = vst [vmem:[#allocation2 + $0x8] sm:$0xf] %v3022
        %3031 = vst [vmem:[#allocation2 + $0xc] sm:$0xf] %v3023
        %3032 = vst [vmem:[#allocation2 + $0x10] sm:$0xf] %v3024
        %v3033 = vpack.c.bf16 %v3002, %v3001
        %v3034 = vpack.c.bf16 %v3004, %v3003
        %v3037 = vunpack.c.l.b16 %v3033
        %v3038 = vunpack.c.h.b16 %v3033
        %v3039 = vunpack.c.l.b16 %v3034
        %v3040 = vunpack.c.h.b16 %v3034
        %v3041 = vpack.c.b16 %v3037, %v3037
        %v3042 = vpack.c.b16 %v3038, %v3038
        %v3043 = vpack.c.b16 %v3039, %v3039
        %v3044 = vpack.c.b16 %v3040, %v3040
        %3049 = vst [vmem:[#allocation2 + $0x18] sm:$0xf] %v3041
        %3050 = vst [vmem:[#allocation2 + $0x1c] sm:$0xf] %v3042
        %3051 = vst [vmem:[#allocation2 + $0x20] sm:$0xf] %v3043
        %3052 = vst [vmem:[#allocation2 + $0x24] sm:$0xf] %v3044
        %v3053 = vpack.c.bf16 %v3006, %v3005
        %v3054 = vpack.c.bf16 %v3008, %v3007
        %v3057 = vunpack.c.l.b16 %v3053
        %v3058 = vunpack.c.h.b16 %v3053
        %v3059 = vunpack.c.l.b16 %v3054
        %v3060 = vunpack.c.h.b16 %v3054
        %v3061 = vpack.c.b16 %v3057, %v3057
        %v3062 = vpack.c.b16 %v3058, %v3058
        %v3063 = vpack.c.b16 %v3059, %v3059
        %v3064 = vpack.c.b16 %v3060, %v3060
        %3069 = vst [vmem:[#allocation2 + $0x2c] sm:$0xf] %v3061
        %3070 = vst [vmem:[#allocation2 + $0x30] sm:$0xf] %v3062
        %3071 = vst [vmem:[#allocation2 + $0x34] sm:$0xf] %v3063
        %3072 = vst [vmem:[#allocation2 + $0x38] sm:$0xf] %v3064
        %v3073 = vpack.c.bf16 %v3010, %v3009
        %v3074 = vpack.c.bf16 %v3012, %v3011
        %v3077 = vunpack.c.l.b16 %v3073
        %v3078 = vunpack.c.h.b16 %v3073
        %v3079 = vunpack.c.l.b16 %v3074
        %v3080 = vunpack.c.h.b16 %v3074
        %v3081 = vpack.c.b16 %v3077, %v3077
        %v3082 = vpack.c.b16 %v3078, %v3078
        %v3083 = vpack.c.b16 %v3079, %v3079
        %v3084 = vpack.c.b16 %v3080, %v3080
        %3089 = vst [vmem:[#allocation2 + $0x40] sm:$0xf] %v3081
        %3090 = vst [vmem:[#allocation2 + $0x44] sm:$0xf] %v3082
        %3091 = vst [vmem:[#allocation2 + $0x48] sm:$0xf] %v3083
        %3092 = vst [vmem:[#allocation2 + $0x4c] sm:$0xf] %v3084
        %v3093 = vld [vmem:[#allocation2] sm:$0x8]
        %v3094 = vld [vmem:[#allocation2 + $0x4] sm:$0xf]
        %v3095 = vld [vmem:[#allocation2 + $0x8] sm:$0xf]
        %v3096 = vld [vmem:[#allocation2 + $0xc] sm:$0xf]
        %v3097 = vld [vmem:[#allocation2 + $0x10] sm:$0xf]
        %v3098 = vld [vmem:[#allocation2 + $0x14] sm:$0xf]
        %v3099 = vld [vmem:[#allocation2 + $0x18] sm:$0xf]
        %v3100 = vld [vmem:[#allocation2 + $0x1c] sm:$0xf]
        %v3101 = vld [vmem:[#allocation2 + $0x20] sm:$0xf]
        %v3102 = vld [vmem:[#allocation2 + $0x24] sm:$0xf]
        %v3103 = vld [vmem:[#allocation2 + $0x28] sm:$0xf]
        %v3104 = vld [vmem:[#allocation2 + $0x2c] sm:$0xf]
        %v3105 = vld [vmem:[#allocation2 + $0x30] sm:$0xf]
        %v3106 = vld [vmem:[#allocation2 + $0x34] sm:$0xf]
        %v3107 = vld [vmem:[#allocation2 + $0x38] sm:$0xf]
        %v3108 = vld [vmem:[#allocation2 + $0x3c] sm:$0xf]
        %v3109 = vld [vmem:[#allocation2 + $0x40] sm:$0xf]
        %v3110 = vld [vmem:[#allocation2 + $0x44] sm:$0xf]
        %v3111 = vld [vmem:[#allocation2 + $0x48] sm:$0xf]
        %v3112 = vld [vmem:[#allocation2 + $0x4c] sm:$0xf]
        %v3113 = vld [vmem:[%s1 + $0x240] sm:$0xf]
        %v3114 = vld [vmem:[%s1 + $0x244] sm:$0xf]
        %v3115 = vld [vmem:[%s1 + $0x248] sm:$0xf]
        %v3116 = vld [vmem:[%s1 + $0x24c] sm:$0xf]
        %v3117 = vld [vmem:[%s1 + $0x250] sm:$0xf]
        %v3118 = vld [vmem:[%s1 + $0x254] sm:$0xf]
        %v3119 = vld [vmem:[%s1 + $0x258] sm:$0xf]
        %v3120 = vld [vmem:[%s1 + $0x25c] sm:$0xf]
        %v3121 = vld [vmem:[%s1 + $0x260] sm:$0xf]
        %v3122 = vld [vmem:[%s1 + $0x264] sm:$0xf]
        %v3123 = vld [vmem:[%s1 + $0x268] sm:$0xf]
        %v3124 = vld [vmem:[%s1 + $0x26c] sm:$0xf]
        %v3125 = vld [vmem:[%s1 + $0x270] sm:$0xf]
        %v3126 = vld [vmem:[%s1 + $0x274] sm:$0xf]
        %v3127 = vld [vmem:[%s1 + $0x278] sm:$0xf]
        %v3128 = vld [vmem:[%s1 + $0x27c] sm:$0xf]
        %v3129 = vld [vmem:[%s1 + $0x280] sm:$0xf]
        %v3130 = vld [vmem:[%s1 + $0x284] sm:$0xf]
        %v3131 = vld [vmem:[%s1 + $0x288] sm:$0xf]
        %v3132 = vld [vmem:[%s1 + $0x28c] sm:$0xf]
        %v3133 = vld [vmem:[%s1 + $0x290] sm:$0xf]
        %v3134 = vld [vmem:[%s1 + $0x294] sm:$0xf]
        %v3135 = vld [vmem:[%s1 + $0x298] sm:$0xf]
        %v3136 = vld [vmem:[%s1 + $0x29c] sm:$0xf]
        %v3137 = vld [vmem:[%s1 + $0x2a0] sm:$0xf]
        %v3138 = vld [vmem:[%s1 + $0x2a4] sm:$0xf]
        %v3139 = vld [vmem:[%s1 + $0x2a8] sm:$0xf]
        %v3140 = vld [vmem:[%s1 + $0x2ac] sm:$0xf]
        %v3141 = vld [vmem:[%s1 + $0x2b0] sm:$0xf]
        %v3142 = vld [vmem:[%s1 + $0x2b4] sm:$0xf]
        %v3143 = vld [vmem:[%s1 + $0x2b8] sm:$0xf]
        %v3144 = vld [vmem:[%s1 + $0x2bc] sm:$0xf]
        %v3164 = vunpack.c.l.b16 %v3094
        %v3165 = vunpack.c.l.b16 %v3095
        %v3166 = vunpack.c.l.b16 %v3096
        %v3167 = vunpack.c.l.b16 %v3097
        %v3168 = vunpack.c.l.b16 %v3098
        %v3169 = vunpack.c.l.b16 %v3099
        %v3170 = vunpack.c.l.b16 %v3100
        %v3171 = vunpack.c.l.b16 %v3101
        %v3172 = vunpack.c.l.b16 %v3102
        %v3173 = vunpack.c.l.b16 %v3103
        %v3174 = vunpack.c.l.b16 %v3104
        %v3175 = vunpack.c.l.b16 %v3105
        %v3176 = vunpack.c.l.b16 %v3106
        %v3177 = vunpack.c.l.b16 %v3107
        %v3178 = vunpack.c.l.b16 %v3108
        %v3179 = vunpack.c.l.b16 %v3109
        %v3180 = vunpack.c.l.b16 %v3110
        %v3181 = vunpack.c.l.b16 %v3111
        %v3182 = vunpack.c.l.b16 %v3112
        %v3183 = vpack.c.b16 %v3165, %v3164
        %v3184 = vpack.c.b16 %v3167, %v3166
        %v3185 = vpack.c.b16 %v3169, %v3168
        %v3186 = vpack.c.b16 %v3171, %v3170
        %v3187 = vpack.c.b16 %v3173, %v3172
        %v3188 = vpack.c.b16 %v3175, %v3174
        %v3189 = vpack.c.b16 %v3177, %v3176
        %v3190 = vpack.c.b16 %v3179, %v3178
        %v3191 = vpack.c.b16 %v3181, %v3180
        %v3192 = vpack.c.b16 %v3182, %v3182
        %v3219 = vunpack.c.l.b16 %v3129
        %v3220 = vunpack.c.l.b16 %v3130
        %v3221 = vunpack.c.l.b16 %v3131
        %v3222 = vunpack.c.l.b16 %v3132
        %v3223 = vunpack.c.l.b16 %v3133
        %v3224 = vunpack.c.l.b16 %v3134
        %v3225 = vunpack.c.l.b16 %v3135
        %v3226 = vunpack.c.l.b16 %v3136
        %v3227 = vunpack.c.l.b16 %v3137
        %v3228 = vunpack.c.l.b16 %v3138
        %v3229 = vunpack.c.l.b16 %v3139
        %v3230 = vunpack.c.l.b16 %v3140
        %v3231 = vunpack.c.l.b16 %v3141
        %v3232 = vunpack.c.l.b16 %v3142
        %v3233 = vunpack.c.l.b16 %v3143
        %v3234 = vunpack.c.l.b16 %v3144
        %v3235 = vpack.c.b16 %v3220, %v3219
        %v3236 = vpack.c.b16 %v3222, %v3221
        %v3237 = vpack.c.b16 %v3224, %v3223
        %v3238 = vpack.c.b16 %v3226, %v3225
        %v3239 = vpack.c.b16 %v3228, %v3227
        %v3240 = vpack.c.b16 %v3230, %v3229
        %v3241 = vpack.c.b16 %v3232, %v3231
        %v3242 = vpack.c.b16 %v3234, %v3233
        %3251 = vmatprep.subr.bf16.mxu0 0
        %3252 = vmatpush1.bf16.msra.mxu0 %v3235
        %3253 = vmatprep.subr.bf16.mxu0 0
        %3254 = vmatpush1.bf16.msra.mxu0 %v3236
        %3255 = vmatprep.subr.bf16.mxu0 0
        %3256 = vmatpush1.bf16.msra.mxu0 %v3237
        %3257 = vmatprep.subr.bf16.mxu0 0
        %3258 = vmatpush1.bf16.msra.mxu0 %v3238
        %3259 = vmatprep.subr.bf16.mxu0 0
        %3260 = vmatpush1.bf16.msra.mxu0 %v3239
        %3261 = vmatprep.subr.bf16.mxu0 0
        %3262 = vmatpush1.bf16.msra.mxu0 %v3240
        %3263 = vmatprep.subr.bf16.mxu0 0
        %3264 = vmatpush1.bf16.msra.mxu0 %v3241
        %3265 = vmatprep.subr.bf16.mxu0 0
        %3266 = vmatpush1.bf16.msra.mxu0 %v3242
        %3267 = vmatprep.subr.bf16.mxu0 0
        %3268 = vmatpush1.bf16.msra.mxu0 0
        %3269 = vmatprep.subr.bf16.mxu0 0
        %3270 = vmatpush1.bf16.msra.mxu0 0
        %3271 = vmatprep.subr.bf16.mxu0 0
        %3272 = vmatpush1.bf16.msra.mxu0 0
        %3273 = vmatprep.subr.bf16.mxu0 0
        %3274 = vmatpush1.bf16.msra.mxu0 0
        %3275 = vmatprep.subr.bf16.mxu0 0
        %3276 = vmatpush1.bf16.msra.mxu0 0
        %3277 = vmatprep.subr.bf16.mxu0 0
        %3278 = vmatpush1.bf16.msra.mxu0 0
        %3279 = vmatprep.subr.bf16.mxu0 0
        %3280 = vmatpush1.bf16.msra.mxu0 0
        %3281 = vmatprep.subr.bf16.mxu0 0
        %3282 = vmatpush1.bf16.msra.mxu0 0
        %3283 = vmatprep.mubr.bf16.mxu0 0
        %3284 = vmatmul.mubr.bf16.gmra.mrb[0].mxu0 %v3183
        %v3285 = vpop.f32.mrb[0].mxu0
        %v3286 = vadd.f32 0.0, %v3285
        %v3287 = vpop.f32.mrb[0].mxu0
        %v3288 = vpop.f32.mrb[0].mxu0
        %v3289 = vadd.f32 0.0, %v3288
        %v3290 = vpop.f32.mrb[0].mxu0
        %3291 = vmatprep.mubr.bf16.mxu0 0
        %3292 = vmatmul.mubr.bf16.gmra.mrb[0].mxu0 %v3184
        %v3293 = vpop.f32.mrb[0].mxu0
        %v3294 = vadd.f32 0.0, %v3293
        %v3295 = vpop.f32.mrb[0].mxu0
        %v3296 = vpop.f32.mrb[0].mxu0
        %v3297 = vadd.f32 0.0, %v3296
        %v3298 = vpop.f32.mrb[0].mxu0
        %3299 = vmatprep.mubr.bf16.mxu0 0
        %3300 = vmatmul.mubr.bf16.gmra.mrb[0].mxu0 %v3185
        %v3301 = vpop.f32.mrb[0].mxu0
        %v3302 = vpop.f32.mrb[0].mxu0
        %v3303 = vpop.f32.mrb[0].mxu0
        %v3304 = vadd.f32 0.0, %v3303
        %v3305 = vpop.f32.mrb[0].mxu0
        %3306 = vmatprep.mubr.bf16.mxu0 0
        %3307 = vmatmul.mubr.bf16.gmra.mrb[0].mxu0 %v3186
        %v3308 = vpop.f32.mrb[0].mxu0
        %v3309 = vadd.f32 0.0, %v3308
        %v3310 = vpop.f32.mrb[0].mxu0
        %v3311 = vpop.f32.mrb[0].mxu0
        %v3312 = vadd.f32 0.0, %v3311
        %v3313 = vpop.f32.mrb[0].mxu0
        %3314 = vmatprep.mubr.bf16.mxu0 0
        %3315 = vmatmul.mubr.bf16.gmra.mrb[0].mxu0 %v3187
        %v3316 = vpop.f32.mrb[0].mxu0
        %v3317 = vadd.f32 0.0, %v3316
        %v3318 = vpop.f32.mrb[0].mxu0
        %v3319 = vpop.f32.mrb[0].mxu0
        %v3320 = vpop.f32.mrb[0].mxu0
        %3321 = vmatprep.mubr.bf16.mxu0 0
        %3322 = vmatmul.mubr.bf16.gmra.mrb[0].mxu0 %v3188
        %v3323 = vpop.f32.mrb[0].mxu0
        %v3324 = vadd.f32 0.0, %v3323
        %v3325 = vpop.f32.mrb[0].mxu0
        %v3326 = vpop.f32.mrb[0].mxu0
        %v3327 = vadd.f32 0.0, %v3326
        %v3328 = vpop.f32.mrb[0].mxu0
        %3329 = vmatprep.mubr.bf16.mxu0 0
        %3330 = vmatmul.mubr.bf16.gmra.mrb[0].mxu0 %v3189
        %v3331 = vpop.f32.mrb[0].mxu0
        %v3332 = vadd.f32 0.0, %v3331
        %v3333 = vpop.f32.mrb[0].mxu0
        %v3334 = vpop.f32.mrb[0].mxu0
        %v3335 = vadd.f32 0.0, %v3334
        %v3336 = vpop.f32.mrb[0].mxu0
        %3337 = vmatprep.mubr.bf16.mxu0 0
        %3338 = vmatmul.mubr.bf16.gmra.mrb[0].mxu0 %v3190
        %v3339 = vpop.f32.mrb[0].mxu0
        %v3340 = vpop.f32.mrb[0].mxu0
        %v3341 = vpop.f32.mrb[0].mxu0
        %v3342 = vadd.f32 0.0, %v3341
        %v3343 = vpop.f32.mrb[0].mxu0
        %3344 = vmatprep.mubr.bf16.mxu0 0
        %3345 = vmatmul.mubr.bf16.gmra.mrb[0].mxu0 %v3191
        %v3346 = vpop.f32.mrb[0].mxu0
        %v3347 = vadd.f32 0.0, %v3346
        %v3348 = vpop.f32.mrb[0].mxu0
        %v3349 = vpop.f32.mrb[0].mxu0
        %v3350 = vadd.f32 0.0, %v3349
        %v3351 = vpop.f32.mrb[0].mxu0
        %3352 = vmatprep.mubr.bf16.mxu0 0
        %3353 = vmatmul.mubr.bf16.gmra.mrb[0].mxu0 %v3192
        %v3354 = vpop.f32.mrb[0].mxu0
        %v3355 = vadd.f32 0.0, %v3354
        %v3356 = vpop.f32.mrb[0].mxu0
        %v3357 = vpop.f32.mrb[0].mxu0
        %v3358 = vpop.f32.mrb[0].mxu0
        %3359 = vdwg.mxu0
        %v3361 = vunpack.c.l.b16 %v3093
        %v3362 = vpack.c.b16 %v3164, %v3361
        %v3363 = vpack.c.b16 %v3166, %v3165
        %v3364 = vpack.c.b16 %v3168, %v3167
        %v3365 = vpack.c.b16 %v3170, %v3169
        %v3366 = vpack.c.b16 %v3172, %v3171
        %v3367 = vpack.c.b16 %v3174, %v3173
        %v3368 = vpack.c.b16 %v3176, %v3175
        %v3369 = vpack.c.b16 %v3178, %v3177
        %v3370 = vpack.c.b16 %v3180, %v3179
        %v3371 = vpack.c.b16 %v3182, %v3181
        %v3373 = vshrl.u32 %v3362, 16
        %v3375 = vrot.slane %v3373, 3
        %v3376 = vshll.u32 %v3362, 16
        %v3378 = vrot.slane %v3376, 4
        %v3379 = vor.u32 %v3375, %v3378
        %v3381 = vshrl.u32 %v3363, 16
        %v3383 = vrot.slane %v3381, 3
        %v3384 = vshll.u32 %v3363, 16
        %v3386 = vrot.slane %v3384, 4
        %v3387 = vor.u32 %v3383, %v3386
        %v3388 = vsel %vm1313, %v3379, %v3387
        %v3390 = vshrl.u32 %v3364, 16
        %v3392 = vrot.slane %v3390, 3
        %v3393 = vshll.u32 %v3364, 16
        %v3395 = vrot.slane %v3393, 4
        %v3396 = vor.u32 %v3392, %v3395
        %v3397 = vsel %vm1313, %v3387, %v3396
        %v3399 = vshrl.u32 %v3365, 16
        %v3401 = vrot.slane %v3399, 3
        %v3402 = vshll.u32 %v3365, 16
        %v3404 = vrot.slane %v3402, 4
        %v3405 = vor.u32 %v3401, %v3404
        %v3406 = vsel %vm1313, %v3396, %v3405
        %v3408 = vshrl.u32 %v3366, 16
        %v3410 = vrot.slane %v3408, 3
        %v3411 = vshll.u32 %v3366, 16
        %v3413 = vrot.slane %v3411, 4
        %v3414 = vor.u32 %v3410, %v3413
        %v3415 = vsel %vm1313, %v3405, %v3414
        %v3417 = vshrl.u32 %v3367, 16
        %v3419 = vrot.slane %v3417, 3
        %v3420 = vshll.u32 %v3367, 16
        %v3422 = vrot.slane %v3420, 4
        %v3423 = vor.u32 %v3419, %v3422
        %v3424 = vsel %vm1313, %v3414, %v3423
        %v3426 = vshrl.u32 %v3368, 16
        %v3428 = vrot.slane %v3426, 3
        %v3429 = vshll.u32 %v3368, 16
        %v3431 = vrot.slane %v3429, 4
        %v3432 = vor.u32 %v3428, %v3431
        %v3433 = vsel %vm1313, %v3423, %v3432
        %v3435 = vshrl.u32 %v3369, 16
        %v3437 = vrot.slane %v3435, 3
        %v3438 = vshll.u32 %v3369, 16
        %v3440 = vrot.slane %v3438, 4
        %v3441 = vor.u32 %v3437, %v3440
        %v3442 = vsel %vm1313, %v3432, %v3441
        %v3444 = vshrl.u32 %v3370, 16
        %v3446 = vrot.slane %v3444, 3
        %v3447 = vshll.u32 %v3370, 16
        %v3449 = vrot.slane %v3447, 4
        %v3450 = vor.u32 %v3446, %v3449
        %v3451 = vsel %vm1313, %v3441, %v3450
        %v3453 = vshrl.u32 %v3371, 16
        %v3455 = vrot.slane %v3453, 3
        %v3456 = vshll.u32 %v3371, 16
        %v3458 = vrot.slane %v3456, 4
        %v3459 = vor.u32 %v3455, %v3458
        %v3460 = vsel %vm1313, %v3450, %v3459
        %v3487 = vunpack.c.l.b16 %v3113
        %v3488 = vunpack.c.l.b16 %v3114
        %v3489 = vunpack.c.l.b16 %v3115
        %v3490 = vunpack.c.l.b16 %v3116
        %v3491 = vunpack.c.l.b16 %v3117
        %v3492 = vunpack.c.l.b16 %v3118
        %v3493 = vunpack.c.l.b16 %v3119
        %v3494 = vunpack.c.l.b16 %v3120
        %v3495 = vunpack.c.l.b16 %v3121
        %v3496 = vunpack.c.l.b16 %v3122
        %v3497 = vunpack.c.l.b16 %v3123
        %v3498 = vunpack.c.l.b16 %v3124
        %v3499 = vunpack.c.l.b16 %v3125
        %v3500 = vunpack.c.l.b16 %v3126
        %v3501 = vunpack.c.l.b16 %v3127
        %v3502 = vunpack.c.l.b16 %v3128
        %v3503 = vpack.c.b16 %v3488, %v3487
        %v3504 = vpack.c.b16 %v3490, %v3489
        %v3505 = vpack.c.b16 %v3492, %v3491
        %v3506 = vpack.c.b16 %v3494, %v3493
        %v3507 = vpack.c.b16 %v3496, %v3495
        %v3508 = vpack.c.b16 %v3498, %v3497
        %v3509 = vpack.c.b16 %v3500, %v3499
        %v3510 = vpack.c.b16 %v3502, %v3501
        %3519 = vmatprep.subr.bf16.mxu0 0
        %3520 = vmatpush1.bf16.msra.mxu0 %v3503
        %3521 = vmatprep.subr.bf16.mxu0 0
        %3522 = vmatpush1.bf16.msra.mxu0 %v3504
        %3523 = vmatprep.subr.bf16.mxu0 0
        %3524 = vmatpush1.bf16.msra.mxu0 %v3505
        %3525 = vmatprep.subr.bf16.mxu0 0
        %3526 = vmatpush1.bf16.msra.mxu0 %v3506
        %3527 = vmatprep.subr.bf16.mxu0 0
        %3528 = vmatpush1.bf16.msra.mxu0 %v3507
        %3529 = vmatprep.subr.bf16.mxu0 0
        %3530 = vmatpush1.bf16.msra.mxu0 %v3508
        %3531 = vmatprep.subr.bf16.mxu0 0
        %3532 = vmatpush1.bf16.msra.mxu0 %v3509
        %3533 = vmatprep.subr.bf16.mxu0 0
        %3534 = vmatpush1.bf16.msra.mxu0 %v3510
        %3535 = vmatprep.subr.bf16.mxu0 0
        %3536 = vmatpush1.bf16.msra.mxu0 0
        %3537 = vmatprep.subr.bf16.mxu0 0
        %3538 = vmatpush1.bf16.msra.mxu0 0
        %3539 = vmatprep.subr.bf16.mxu0 0
        %3540 = vmatpush1.bf16.msra.mxu0 0
        %3541 = vmatprep.subr.bf16.mxu0 0
        %3542 = vmatpush1.bf16.msra.mxu0 0
        %3543 = vmatprep.subr.bf16.mxu0 0
        %3544 = vmatpush1.bf16.msra.mxu0 0
        %3545 = vmatprep.subr.bf16.mxu0 0
        %3546 = vmatpush1.bf16.msra.mxu0 0
        %3547 = vmatprep.subr.bf16.mxu0 0
        %3548 = vmatpush1.bf16.msra.mxu0 0
        %3549 = vmatprep.subr.bf16.mxu0 0
        %3550 = vmatpush1.bf16.msra.mxu0 0
        %3551 = vmatprep.mubr.bf16.mxu0 0
        %3552 = vmatmul.mubr.bf16.gmra.mrb[0].mxu0 %v3388
        %v3553 = vpop.f32.mrb[0].mxu0
        %v3554 = vadd.f32 %v3286, %v3553
        %v3555 = vpop.f32.mrb[0].mxu0
        %v3556 = vpop.f32.mrb[0].mxu0
        %v3557 = vadd.f32 %v3289, %v3556
        %v3558 = vpop.f32.mrb[0].mxu0
        %3559 = vmatprep.mubr.bf16.mxu0 0
        %3560 = vmatmul.mubr.bf16.gmra.mrb[0].mxu0 %v3397
        %v3561 = vpop.f32.mrb[0].mxu0
        %v3562 = vadd.f32 %v3294, %v3561
        %v3563 = vpop.f32.mrb[0].mxu0
        %v3564 = vpop.f32.mrb[0].mxu0
        %v3565 = vadd.f32 %v3297, %v3564
        %v3566 = vpop.f32.mrb[0].mxu0
        %3567 = vmatprep.mubr.bf16.mxu0 0
        %3568 = vmatmul.mubr.bf16.gmra.mrb[0].mxu0 %v3406
        %v3569 = vpop.f32.mrb[0].mxu0
        %v3570 = vpop.f32.mrb[0].mxu0
        %v3571 = vpop.f32.mrb[0].mxu0
        %v3572 = vadd.f32 %v3304, %v3571
        %v3573 = vpop.f32.mrb[0].mxu0
        %3574 = vmatprep.mubr.bf16.mxu0 0
        %3575 = vmatmul.mubr.bf16.gmra.mrb[0].mxu0 %v3415
        %v3576 = vpop.f32.mrb[0].mxu0
        %v3577 = vadd.f32 %v3309, %v3576
        %v3578 = vpop.f32.mrb[0].mxu0
        %v3579 = vpop.f32.mrb[0].mxu0
        %v3580 = vadd.f32 %v3312, %v3579
        %v3581 = vpop.f32.mrb[0].mxu0
        %3582 = vmatprep.mubr.bf16.mxu0 0
        %3583 = vmatmul.mubr.bf16.gmra.mrb[0].mxu0 %v3424
        %v3584 = vpop.f32.mrb[0].mxu0
        %v3585 = vadd.f32 %v3317, %v3584
        %v3586 = vpop.f32.mrb[0].mxu0
        %v3587 = vpop.f32.mrb[0].mxu0
        %v3588 = vpop.f32.mrb[0].mxu0
        %3589 = vmatprep.mubr.bf16.mxu0 0
        %3590 = vmatmul.mubr.bf16.gmra.mrb[0].mxu0 %v3433
        %v3591 = vpop.f32.mrb[0].mxu0
        %v3592 = vadd.f32 %v3324, %v3591
        %v3593 = vpop.f32.mrb[0].mxu0
        %v3594 = vpop.f32.mrb[0].mxu0
        %v3595 = vadd.f32 %v3327, %v3594
        %v3596 = vpop.f32.mrb[0].mxu0
        %3597 = vmatprep.mubr.bf16.mxu0 0
        %3598 = vmatmul.mubr.bf16.gmra.mrb[0].mxu0 %v3442
        %v3599 = vpop.f32.mrb[0].mxu0
        %v3600 = vadd.f32 %v3332, %v3599
        %v3601 = vpop.f32.mrb[0].mxu0
        %v3602 = vpop.f32.mrb[0].mxu0
        %v3603 = vadd.f32 %v3335, %v3602
        %v3604 = vpop.f32.mrb[0].mxu0
        %3605 = vmatprep.mubr.bf16.mxu0 0
        %3606 = vmatmul.mubr.bf16.gmra.mrb[0].mxu0 %v3451
        %v3607 = vpop.f32.mrb[0].mxu0
        %v3608 = vpop.f32.mrb[0].mxu0
        %v3609 = vpop.f32.mrb[0].mxu0
        %v3610 = vadd.f32 %v3342, %v3609
        %v3611 = vpop.f32.mrb[0].mxu0
        %3612 = vmatprep.mubr.bf16.mxu0 0
        %3613 = vmatmul.mubr.bf16.gmra.mrb[0].mxu0 %v3460
        %v3614 = vpop.f32.mrb[0].mxu0
        %v3615 = vadd.f32 %v3347, %v3614
        %v3616 = vpop.f32.mrb[0].mxu0
        %v3617 = vpop.f32.mrb[0].mxu0
        %v3618 = vadd.f32 %v3350, %v3617
        %v3619 = vpop.f32.mrb[0].mxu0
        %3620 = vmatprep.mubr.bf16.mxu0 0
        %3621 = vmatmul.mubr.bf16.gmra.mrb[0].mxu0 %v3459
        %v3622 = vpop.f32.mrb[0].mxu0
        %v3623 = vadd.f32 %v3355, %v3622
        %v3624 = vpop.f32.mrb[0].mxu0
        %v3625 = vpop.f32.mrb[0].mxu0
        %v3626 = vpop.f32.mrb[0].mxu0
        %3627 = vdwg.mxu0
        %v3628 = vld [vmem:[#allocation2 + $0x4] sm:$0xf]
        %v3629 = vld [vmem:[#allocation2 + $0x8] sm:$0xf]
        %v3630 = vld [vmem:[#allocation2 + $0xc] sm:$0xf]
        %v3631 = vld [vmem:[#allocation2 + $0x10] sm:$0xf]
        %v3632 = vld [vmem:[#allocation2 + $0x14] sm:$0xf]
        %v3633 = vld [vmem:[#allocation2 + $0x18] sm:$0xf]
        %v3634 = vld [vmem:[#allocation2 + $0x1c] sm:$0xf]
        %v3635 = vld [vmem:[#allocation2 + $0x20] sm:$0xf]
        %v3636 = vld [vmem:[#allocation2 + $0x24] sm:$0xf]
        %v3637 = vld [vmem:[#allocation2 + $0x28] sm:$0xf]
        %v3638 = vld [vmem:[#allocation2 + $0x2c] sm:$0xf]
        %v3639 = vld [vmem:[#allocation2 + $0x30] sm:$0xf]
        %v3640 = vld [vmem:[#allocation2 + $0x34] sm:$0xf]
        %v3641 = vld [vmem:[#allocation2 + $0x38] sm:$0xf]
        %v3642 = vld [vmem:[#allocation2 + $0x3c] sm:$0xf]
        %v3643 = vld [vmem:[#allocation2 + $0x40] sm:$0xf]
        %v3644 = vld [vmem:[#allocation2 + $0x44] sm:$0xf]
        %v3645 = vld [vmem:[#allocation2 + $0x48] sm:$0xf]
        %v3646 = vld [vmem:[#allocation2 + $0x4c] sm:$0xf]
        %v3647 = vld [vmem:[#allocation2 + $0x50] sm:$0x1]
        %v3648 = vld [vmem:[%s1 + $0x2c0] sm:$0xf]
        %v3649 = vld [vmem:[%s1 + $0x2c4] sm:$0xf]
        %v3650 = vld [vmem:[%s1 + $0x2c8] sm:$0xf]
        %v3651 = vld [vmem:[%s1 + $0x2cc] sm:$0xf]
        %v3652 = vld [vmem:[%s1 + $0x2d0] sm:$0xf]
        %v3653 = vld [vmem:[%s1 + $0x2d4] sm:$0xf]
        %v3654 = vld [vmem:[%s1 + $0x2d8] sm:$0xf]
        %v3655 = vld [vmem:[%s1 + $0x2dc] sm:$0xf]
        %v3656 = vld [vmem:[%s1 + $0x2e0] sm:$0xf]
        %v3657 = vld [vmem:[%s1 + $0x2e4] sm:$0xf]
        %v3658 = vld [vmem:[%s1 + $0x2e8] sm:$0xf]
        %v3659 = vld [vmem:[%s1 + $0x2ec] sm:$0xf]
        %v3660 = vld [vmem:[%s1 + $0x2f0] sm:$0xf]
        %v3661 = vld [vmem:[%s1 + $0x2f4] sm:$0xf]
        %v3662 = vld [vmem:[%s1 + $0x2f8] sm:$0xf]
        %v3663 = vld [vmem:[%s1 + $0x2fc] sm:$0xf]
        %v3684 = vunpack.c.l.b16 %v3628
        %v3685 = vunpack.c.l.b16 %v3629
        %v3686 = vunpack.c.l.b16 %v3630
        %v3687 = vunpack.c.l.b16 %v3631
        %v3688 = vunpack.c.l.b16 %v3632
        %v3689 = vunpack.c.l.b16 %v3633
        %v3690 = vunpack.c.l.b16 %v3634
        %v3691 = vunpack.c.l.b16 %v3635
        %v3692 = vunpack.c.l.b16 %v3636
        %v3693 = vunpack.c.l.b16 %v3637
        %v3694 = vunpack.c.l.b16 %v3638
        %v3695 = vunpack.c.l.b16 %v3639
        %v3696 = vunpack.c.l.b16 %v3640
        %v3697 = vunpack.c.l.b16 %v3641
        %v3698 = vunpack.c.l.b16 %v3642
        %v3699 = vunpack.c.l.b16 %v3643
        %v3700 = vunpack.c.l.b16 %v3644
        %v3701 = vunpack.c.l.b16 %v3645
        %v3702 = vunpack.c.l.b16 %v3646
        %v3703 = vunpack.c.l.b16 %v3647
        %v3704 = vpack.c.b16 %v3685, %v3684
        %v3705 = vpack.c.b16 %v3687, %v3686
        %v3706 = vpack.c.b16 %v3689, %v3688
        %v3707 = vpack.c.b16 %v3691, %v3690
        %v3708 = vpack.c.b16 %v3693, %v3692
        %v3709 = vpack.c.b16 %v3695, %v3694
        %v3710 = vpack.c.b16 %v3697, %v3696
        %v3711 = vpack.c.b16 %v3699, %v3698
        %v3712 = vpack.c.b16 %v3701, %v3700
        %v3713 = vpack.c.b16 %v3703, %v3702
        %v3715 = vshrl.u32 %v3704, 16
        %v3717 = vshll.u32 %v3704, 16
        %v3719 = vrot.slane %v3717, 1
        %v3720 = vor.u32 %v3715, %v3719
        %v3722 = vshll.u32 %v3705, 16
        %v3724 = vrot.slane %v3722, 1
        %v3725 = vsel %vm277, %v3720, %v3724
        %v3726 = vshrl.u32 %v3705, 16
        %v3728 = vor.u32 %v3726, %v3724
        %v3730 = vshll.u32 %v3706, 16
        %v3732 = vrot.slane %v3730, 1
        %v3733 = vsel %vm277, %v3728, %v3732
        %v3734 = vshrl.u32 %v3706, 16
        %v3736 = vor.u32 %v3734, %v3732
        %v3738 = vshll.u32 %v3707, 16
        %v3740 = vrot.slane %v3738, 1
        %v3741 = vsel %vm277, %v3736, %v3740
        %v3742 = vshrl.u32 %v3707, 16
        %v3744 = vor.u32 %v3742, %v3740
        %v3746 = vshll.u32 %v3708, 16
        %v3748 = vrot.slane %v3746, 1
        %v3749 = vsel %vm277, %v3744, %v3748
        %v3750 = vshrl.u32 %v3708, 16
        %v3752 = vor.u32 %v3750, %v3748
        %v3754 = vshll.u32 %v3709, 16
        %v3756 = vrot.slane %v3754, 1
        %v3757 = vsel %vm277, %v3752, %v3756
        %v3758 = vshrl.u32 %v3709, 16
        %v3760 = vor.u32 %v3758, %v3756
        %v3762 = vshll.u32 %v3710, 16
        %v3764 = vrot.slane %v3762, 1
        %v3765 = vsel %vm277, %v3760, %v3764
        %v3766 = vshrl.u32 %v3710, 16
        %v3768 = vor.u32 %v3766, %v3764
        %v3770 = vshll.u32 %v3711, 16
        %v3772 = vrot.slane %v3770, 1
        %v3773 = vsel %vm277, %v3768, %v3772
        %v3774 = vshrl.u32 %v3711, 16
        %v3776 = vor.u32 %v3774, %v3772
        %v3778 = vshll.u32 %v3712, 16
        %v3780 = vrot.slane %v3778, 1
        %v3781 = vsel %vm277, %v3776, %v3780
        %v3782 = vshrl.u32 %v3712, 16
        %v3784 = vor.u32 %v3782, %v3780
        %v3786 = vshll.u32 %v3713, 16
        %v3788 = vrot.slane %v3786, 1
        %v3789 = vsel %vm277, %v3784, %v3788
        %v3790 = vshrl.u32 %v3713, 16
        %v3792 = vor.u32 %v3790, %v3788
        %v3819 = vunpack.c.l.b16 %v3648
        %v3820 = vunpack.c.l.b16 %v3649
        %v3821 = vunpack.c.l.b16 %v3650
        %v3822 = vunpack.c.l.b16 %v3651
        %v3823 = vunpack.c.l.b16 %v3652
        %v3824 = vunpack.c.l.b16 %v3653
        %v3825 = vunpack.c.l.b16 %v3654
        %v3826 = vunpack.c.l.b16 %v3655
        %v3827 = vunpack.c.l.b16 %v3656
        %v3828 = vunpack.c.l.b16 %v3657
        %v3829 = vunpack.c.l.b16 %v3658
        %v3830 = vunpack.c.l.b16 %v3659
        %v3831 = vunpack.c.l.b16 %v3660
        %v3832 = vunpack.c.l.b16 %v3661
        %v3833 = vunpack.c.l.b16 %v3662
        %v3834 = vunpack.c.l.b16 %v3663
        %v3835 = vpack.c.b16 %v3820, %v3819
        %v3836 = vpack.c.b16 %v3822, %v3821
        %v3837 = vpack.c.b16 %v3824, %v3823
        %v3838 = vpack.c.b16 %v3826, %v3825
        %v3839 = vpack.c.b16 %v3828, %v3827
        %v3840 = vpack.c.b16 %v3830, %v3829
        %v3841 = vpack.c.b16 %v3832, %v3831
        %v3842 = vpack.c.b16 %v3834, %v3833
        %3851 = vmatprep.subr.bf16.mxu0 0
        %3852 = vmatpush1.bf16.msra.mxu0 %v3835
        %3853 = vmatprep.subr.bf16.mxu0 0
        %3854 = vmatpush1.bf16.msra.mxu0 %v3836
        %3855 = vmatprep.subr.bf16.mxu0 0
        %3856 = vmatpush1.bf16.msra.mxu0 %v3837
        %3857 = vmatprep.subr.bf16.mxu0 0
        %3858 = vmatpush1.bf16.msra.mxu0 %v3838
        %3859 = vmatprep.subr.bf16.mxu0 0
        %3860 = vmatpush1.bf16.msra.mxu0 %v3839
        %3861 = vmatprep.subr.bf16.mxu0 0
        %3862 = vmatpush1.bf16.msra.mxu0 %v3840
        %3863 = vmatprep.subr.bf16.mxu0 0
        %3864 = vmatpush1.bf16.msra.mxu0 %v3841
        %3865 = vmatprep.subr.bf16.mxu0 0
        %3866 = vmatpush1.bf16.msra.mxu0 %v3842
        %3867 = vmatprep.subr.bf16.mxu0 0
        %3868 = vmatpush1.bf16.msra.mxu0 0
        %3869 = vmatprep.subr.bf16.mxu0 0
        %3870 = vmatpush1.bf16.msra.mxu0 0
        %3871 = vmatprep.subr.bf16.mxu0 0
        %3872 = vmatpush1.bf16.msra.mxu0 0
        %3873 = vmatprep.subr.bf16.mxu0 0
        %3874 = vmatpush1.bf16.msra.mxu0 0
        %3875 = vmatprep.subr.bf16.mxu0 0
        %3876 = vmatpush1.bf16.msra.mxu0 0
        %3877 = vmatprep.subr.bf16.mxu0 0
        %3878 = vmatpush1.bf16.msra.mxu0 0
        %3879 = vmatprep.subr.bf16.mxu0 0
        %3880 = vmatpush1.bf16.msra.mxu0 0
        %3881 = vmatprep.subr.bf16.mxu0 0
        %3882 = vmatpush1.bf16.msra.mxu0 0
        %3883 = vmatprep.mubr.bf16.mxu0 0
        %3884 = vmatmul.mubr.bf16.gmra.mrb[0].mxu0 %v3725
        %v3885 = vpop.f32.mrb[0].mxu0
        %v3886 = vadd.f32 0.0, %v3885
        %v3887 = vpop.f32.mrb[0].mxu0
        %v3888 = vpop.f32.mrb[0].mxu0
        %v3889 = vadd.f32 0.0, %v3888
        %v3890 = vpop.f32.mrb[0].mxu0
        %3891 = vmatprep.mubr.bf16.mxu0 0
        %3892 = vmatmul.mubr.bf16.gmra.mrb[0].mxu0 %v3733
        %v3893 = vpop.f32.mrb[0].mxu0
        %v3894 = vadd.f32 0.0, %v3893
        %v3895 = vpop.f32.mrb[0].mxu0
        %v3896 = vpop.f32.mrb[0].mxu0
        %v3897 = vadd.f32 0.0, %v3896
        %v3898 = vpop.f32.mrb[0].mxu0
        %3899 = vmatprep.mubr.bf16.mxu0 0
        %3900 = vmatmul.mubr.bf16.gmra.mrb[0].mxu0 %v3741
        %v3901 = vpop.f32.mrb[0].mxu0
        %v3902 = vpop.f32.mrb[0].mxu0
        %v3903 = vpop.f32.mrb[0].mxu0
        %v3904 = vadd.f32 0.0, %v3903
        %v3905 = vpop.f32.mrb[0].mxu0
        %3906 = vmatprep.mubr.bf16.mxu0 0
        %3907 = vmatmul.mubr.bf16.gmra.mrb[0].mxu0 %v3749
        %v3908 = vpop.f32.mrb[0].mxu0
        %v3909 = vadd.f32 0.0, %v3908
        %v3910 = vpop.f32.mrb[0].mxu0
        %v3911 = vpop.f32.mrb[0].mxu0
        %v3912 = vadd.f32 0.0, %v3911
        %v3913 = vpop.f32.mrb[0].mxu0
        %3914 = vmatprep.mubr.bf16.mxu0 0
        %3915 = vmatmul.mubr.bf16.gmra.mrb[0].mxu0 %v3757
        %v3916 = vpop.f32.mrb[0].mxu0
        %v3917 = vadd.f32 0.0, %v3916
        %v3918 = vpop.f32.mrb[0].mxu0
        %v3919 = vpop.f32.mrb[0].mxu0
        %v3920 = vpop.f32.mrb[0].mxu0
        %3921 = vmatprep.mubr.bf16.mxu0 0
        %3922 = vmatmul.mubr.bf16.gmra.mrb[0].mxu0 %v3765
        %v3923 = vpop.f32.mrb[0].mxu0
        %v3924 = vadd.f32 0.0, %v3923
        %v3925 = vpop.f32.mrb[0].mxu0
        %v3926 = vpop.f32.mrb[0].mxu0
        %v3927 = vadd.f32 0.0, %v3926
        %v3928 = vpop.f32.mrb[0].mxu0
        %3929 = vmatprep.mubr.bf16.mxu0 0
        %3930 = vmatmul.mubr.bf16.gmra.mrb[0].mxu0 %v3773
        %v3931 = vpop.f32.mrb[0].mxu0
        %v3932 = vadd.f32 0.0, %v3931
        %v3933 = vpop.f32.mrb[0].mxu0
        %v3934 = vpop.f32.mrb[0].mxu0
        %v3935 = vadd.f32 0.0, %v3934
        %v3936 = vpop.f32.mrb[0].mxu0
        %3937 = vmatprep.mubr.bf16.mxu0 0
        %3938 = vmatmul.mubr.bf16.gmra.mrb[0].mxu0 %v3781
        %v3939 = vpop.f32.mrb[0].mxu0
        %v3940 = vpop.f32.mrb[0].mxu0
        %v3941 = vpop.f32.mrb[0].mxu0
        %v3942 = vadd.f32 0.0, %v3941
        %v3943 = vpop.f32.mrb[0].mxu0
        %3944 = vmatprep.mubr.bf16.mxu0 0
        %3945 = vmatmul.mubr.bf16.gmra.mrb[0].mxu0 %v3789
        %v3946 = vpop.f32.mrb[0].mxu0
        %v3947 = vadd.f32 0.0, %v3946
        %v3948 = vpop.f32.mrb[0].mxu0
        %v3949 = vpop.f32.mrb[0].mxu0
        %v3950 = vadd.f32 0.0, %v3949
        %v3951 = vpop.f32.mrb[0].mxu0
        %3952 = vmatprep.mubr.bf16.mxu0 0
        %3953 = vmatmul.mubr.bf16.gmra.mrb[0].mxu0 %v3792
        %v3954 = vpop.f32.mrb[0].mxu0
        %v3955 = vadd.f32 0.0, %v3954
        %v3956 = vpop.f32.mrb[0].mxu0
        %v3957 = vpop.f32.mrb[0].mxu0
        %v3958 = vpop.f32.mrb[0].mxu0
        %3959 = vdwg.mxu0
        %v3960 = vadd.f32 %v3554, %v3886
        %v3961 = vadd.f32 %v3557, %v3889
        %v3962 = vadd.f32 %v3562, %v3894
        %v3963 = vadd.f32 %v3565, %v3897
        %v3964 = vadd.f32 %v3572, %v3904
        %v3965 = vadd.f32 %v3577, %v3909
        %v3966 = vadd.f32 %v3580, %v3912
        %v3967 = vadd.f32 %v3585, %v3917
        %v3968 = vadd.f32 %v3592, %v3924
        %v3969 = vadd.f32 %v3595, %v3927
        %v3970 = vadd.f32 %v3600, %v3932
        %v3971 = vadd.f32 %v3603, %v3935
        %v3972 = vadd.f32 %v3610, %v3942
        %v3973 = vadd.f32 %v3615, %v3947
        %v3974 = vadd.f32 %v3618, %v3950
        %v3975 = vadd.f32 %v3623, %v3955
        %v3976 = vld [vmem:[%s2 + $0x8] sm:$0x1]
        %v3977 = vld [vmem:[%s2 + $0x9] sm:$0x1]
        %v3978 = vlaneseq
        %v3979 = vshrl.u32 %v3978, 7
        %v3980 = vsub.s32 0, %v3979
        %v3981 = vrot.slane %v3976, %v3980
        %v3982 = vmul.f32 %v3960, %v3981
        %v3983 = vmul.f32 %v3961, %v3981
        %v3984 = vmul.f32 %v3962, %v3981
        %v3985 = vmul.f32 %v3963, %v3981
        %v3986 = vmul.f32 %v3964, %v3981
        %v3987 = vmul.f32 %v3965, %v3981
        %v3988 = vmul.f32 %v3966, %v3981
        %v3989 = vmul.f32 %v3967, %v3981
        %v3990 = vmul.f32 %v3968, %v3981
        %v3991 = vmul.f32 %v3969, %v3981
        %v3992 = vmul.f32 %v3970, %v3981
        %v3993 = vmul.f32 %v3971, %v3981
        %v3994 = vmul.f32 %v3972, %v3981
        %v3995 = vmul.f32 %v3973, %v3981
        %v3996 = vmul.f32 %v3974, %v3981
        %v3997 = vmul.f32 %v3975, %v3981
        %v3998 = vlaneseq
        %v3999 = vshrl.u32 %v3998, 7
        %v4000 = vsub.s32 0, %v3999
        %v4001 = vrot.slane %v3977, %v4000
        %v4002 = vadd.f32 %v3982, %v4001
        %v4003 = vadd.f32 %v3983, %v4001
        %v4004 = vadd.f32 %v3984, %v4001
        %v4005 = vadd.f32 %v3985, %v4001
        %v4006 = vadd.f32 %v3986, %v4001
        %v4007 = vadd.f32 %v3987, %v4001
        %v4008 = vadd.f32 %v3988, %v4001
        %v4009 = vadd.f32 %v3989, %v4001
        %v4010 = vadd.f32 %v3990, %v4001
        %v4011 = vadd.f32 %v3991, %v4001
        %v4012 = vadd.f32 %v3992, %v4001
        %v4013 = vadd.f32 %v3993, %v4001
        %v4014 = vadd.f32 %v3994, %v4001
        %v4015 = vadd.f32 %v3995, %v4001
        %v4016 = vadd.f32 %v3996, %v4001
        %v4017 = vadd.f32 %v3997, %v4001
        %v4018 = vadd.f32 %v4002, %v1976
        %v4019 = vadd.f32 %v4003, %v1977
        %v4020 = vadd.f32 %v4004, %v1978
        %v4021 = vadd.f32 %v4005, %v1979
        %v4022 = vadd.f32 %v4006, %v1980
        %v4023 = vadd.f32 %v4007, %v1981
        %v4024 = vadd.f32 %v4008, %v1982
        %v4025 = vadd.f32 %v4009, %v1983
        %v4026 = vadd.f32 %v4010, %v1984
        %v4027 = vadd.f32 %v4011, %v1985
        %v4028 = vadd.f32 %v4012, %v1986
        %v4029 = vadd.f32 %v4013, %v1987
        %v4030 = vadd.f32 %v4014, %v1988
        %v4031 = vadd.f32 %v4015, %v1989
        %v4032 = vadd.f32 %v4016, %v1990
        %v4033 = vadd.f32 %v4017, %v1991
        %v4034 = vmax.f32 %v4018, 0.0
        %v4035 = vmax.f32 %v4019, 0.0
        %v4036 = vmax.f32 %v4020, 0.0
        %v4037 = vmax.f32 %v4021, 0.0
        %v4038 = vmax.f32 %v4022, 0.0
        %v4039 = vmax.f32 %v4023, 0.0
        %v4040 = vmax.f32 %v4024, 0.0
        %v4041 = vmax.f32 %v4025, 0.0
        %v4042 = vmax.f32 %v4026, 0.0
        %v4043 = vmax.f32 %v4027, 0.0
        %v4044 = vmax.f32 %v4028, 0.0
        %v4045 = vmax.f32 %v4029, 0.0
        %v4046 = vmax.f32 %v4030, 0.0
        %v4047 = vmax.f32 %v4031, 0.0
        %v4048 = vmax.f32 %v4032, 0.0
        %v4049 = vmax.f32 %v4033, 0.0
        %4050 = vst [vmem:[%s164] sm:$0xff] %v4034
        %4051 = vst [vmem:[%s164 + $0x8] sm:$0xff] %v4035
        %4052 = vst [vmem:[%s164 + $0x10] sm:$0xff] %v4036
        %4053 = vst [vmem:[%s164 + $0x18] sm:$0xff] %v4037
        %s4054 = scalar_lea.vmem %s164, 32 [#allocation4]
        %4055 = vst [vmem:[%s4054] sm:$0xff] %v4038
        %4056 = vst [vmem:[%s4054 + $0x8] sm:$0xff] %v4039
        %4057 = vst [vmem:[%s4054 + $0x10] sm:$0xff] %v4040
        %4058 = vst [vmem:[%s4054 + $0x18] sm:$0xff] %v4041
        %s4059 = scalar_lea.vmem %s164, 64 [#allocation4]
        %4060 = vst [vmem:[%s4059] sm:$0xff] %v4042
        %4061 = vst [vmem:[%s4059 + $0x8] sm:$0xff] %v4043
        %4062 = vst [vmem:[%s4059 + $0x10] sm:$0xff] %v4044
        %4063 = vst [vmem:[%s4059 + $0x18] sm:$0xff] %v4045
        %s4064 = scalar_lea.vmem %s164, 96 [#allocation4]
        %4065 = vst [vmem:[%s4064] sm:$0xff] %v4046
        %4066 = vst [vmem:[%s4064 + $0x8] sm:$0xff] %v4047
        %4067 = vst [vmem:[%s4064 + $0x10] sm:$0xff] %v4048
        %4068 = vst [vmem:[%s4064 + $0x18] sm:$0xff] %v4049
        %s4069 = sand.u32 %s93, 1
        %s4070 = scalar_lea.sflag [#allocation5], %s4069
        %s4071 = sand.u32 %s93, 1
        %s4072 = smul.addr %s4071, 128
        %s4073 = scalar_lea.vmem [#allocation4], %s4072
        // Predicated region
        $region33: #{fused_residual_layer_fwd.1} parent=31 // pred_check
          %p4074 = pneg %p103
        $region34: #{fused_residual_layer_fwd.1} parent=31 // pred_check_branch
          %4076 = sbr.rel (%p4074) target = $region36
        $region35: #{fused_residual_layer_fwd.1} parent=31 // pred_region
          %s4077 = smul.u32 4, %s17
          %s4079 = ssub.s32 2048, 2048
          %4080 = vsyncadd %s4070, %s4079
          %s4081 = smul.addr %s4077, 4
          %s4082 = smul.addr %s4081, 128
          %s4083 = scalar_lea.hbm %s3, %s4082
          %s4084 = sshll.u32 %s4073, 4
          %s4085 = int_to_ptr.vmem [resolvable:$true] %s4084
          %4090 = dma.vmem_to_hbm [thread:$0]  %s4085, 2048, %s4083, %s4070, 128, 128, 8
        $region36: #{fused_residual_layer_fwd.1} parent=31 // pred_fallthru
          _
      $region32: #{fused_residual_layer_fwd.1} parent=5 // pred_fallthru
        _
      %p4091 = scmp.le.s32.totalorder 2, %s12
      // Predicated region
      $region37: #{fused_residual_layer_fwd.1} parent=5 // pred_check
        %p4092 = pneg %p4091
      $region38: #{fused_residual_layer_fwd.1} parent=5 // pred_check_branch
        %4094 = sbr.rel (%p4092) target = $region40
      $region39: #{fused_residual_layer_fwd.1} parent=5 // pred_region
        %s4095 = ssub.s32 %s12, 2
        // Predicated region
        $region41: #{fused_residual_layer_fwd.1} parent=39 // pred_check
          %p4096 = pneg %p109
        $region42: #{fused_residual_layer_fwd.1} parent=39 // pred_check_branch
          %4098 = sbr.rel (%p4096) target = $region44
        $region43: #{fused_residual_layer_fwd.1} parent=39 // pred_region
          %s4099 = sand.u32 %s94, 1
          %s4100 = scalar_lea.sflag [#allocation5], %s4099
          %s4101 = sand.u32 %s94, 1
          %s4102 = smul.addr %s4101, 128
          %s4103 = scalar_lea.vmem [#allocation4], %s4102
          %4104 = dma.done %s4100, 2048
        $region44: #{fused_residual_layer_fwd.1} parent=39 // pred_fallthru
          _
      $region40: #{fused_residual_layer_fwd.1} parent=5 // pred_fallthru
        _
    $region6: #{fused_residual_layer_fwd.1} parent=1 // loop_footer
      %s16 = sadd.s32 1, %s12
    $region7: #{fused_residual_layer_fwd.1} parent=1 // loop_footer_branch
      %11 = sbr.rel target = $region3
    $region8: #{fused_residual_layer_fwd.1} parent=1 // loop_exit
      _
    %4105 = vsyncpa [#allocation5], 1
    %s4106 = scalar_lea.sflag [#allocation5], 1
    %4107 = vsyncpa %s4106, 1

</llo_original>
